<compile_context>
chip_gen: v6e
topology: v6e:2x2x1
jax: 0.10.0
libtpu: 0.0.40
codegen_flags: <defaults>
</compile_context>

<pallas_src>
import jax
import jax.numpy as jnp
import numpy as np
from jax import lax
from jax.experimental import pallas as pl
from jax.experimental.pallas import tpu as pltpu

# ----- problem sizes (small, but GroupNorm(32)-compatible) -----
N = 2
H = W = 16
PLANES = 32
EXPANSION = 4
OUTPLANES = PLANES * EXPANSION          # 128
INPLANES = OUTPLANES                    # identity add requires inplanes == planes*4
GROUPS = 32
EPS = 1e-5
HW = H * W


# ------------------------- Pallas kernel --------------------------
def bottleneck_kernel(x_ref, w1_ref, w2_ref, w3_ref,
                      g1_ref, b1_ref, g2_ref, b2_ref, g3_ref, b3_ref,
                      m3_ref, o_ref):
    x = x_ref[0]                                    # (HW, INPLANES)
    inv_hw = 1.0 / HW

    def gn_channelwise(v, g_r, b_r):
        # GroupNorm(32) over 32 channels => group size 1 => per-channel stats.
        mean = jnp.sum(v, axis=0, keepdims=True) * inv_hw        # (1, 32)
        vc = v - mean
        var = jnp.sum(vc * vc, axis=0, keepdims=True) * inv_hw   # (1, 32)
        return vc * lax.rsqrt(var + EPS) * g_r[...] + b_r[...]

    def gn_grouped(v, g_r, b_r):
        # GroupNorm(32) over 128 channels: M3 averages within each group of 4.
        colsum = jnp.sum(v, axis=0, keepdims=True)               # (1, 128)
        mean = jnp.dot(colsum, m3_ref[...],
                       preferred_element_type=jnp.float32)       # (1, 128)
        vc = v - mean
        sqsum = jnp.sum(vc * vc, axis=0, keepdims=True)          # (1, 128)
        var = jnp.dot(sqsum, m3_ref[...],
                      preferred_element_type=jnp.float32)        # (1, 128)
        return vc * lax.rsqrt(var + EPS) * g_r[...] + b_r[...]

    # ---- conv1 (1x1) + GN + ReLU ----
    out = jnp.dot(x, w1_ref[...], preferred_element_type=jnp.float32)   # (HW, P)
    out = jnp.maximum(gn_channelwise(out, g1_ref, b1_ref), 0.0)

    # ---- conv2 (3x3, stride 1, pad 1): single K=288 matmul on an im2col slab ----
    # Shifted copy for tap (dy, dx) reads flat pixel p + (dy-1)*W + (dx-1);
    # row (y) boundaries are handled by the zero-concat bounds, column (x)
    # boundaries by an explicit mask.
    col = lax.broadcasted_iota(jnp.int32, (HW, PLANES), 0) % W
    keep_l = (col != 0).astype(jnp.float32)        # reading x-1 invalid at x == 0
    keep_r = (col != W - 1).astype(jnp.float32)    # reading x+1 invalid at x == W-1

    pieces = []
    for dy in range(3):
        for dx in range(3):
            off = (dy - 1) * W + (dx - 1)
            if off > 0:
                sh = jnp.concatenate(
                    [out[off:, :], jnp.zeros((off, PLANES), jnp.float32)], axis=0)
            elif off < 0:
                sh = jnp.concatenate(
                    [jnp.zeros((-off, PLANES), jnp.float32), out[:HW + off, :]],
                    axis=0)
            else:
                sh = out
            if dx == 0:
                sh = sh * keep_l
            elif dx == 2:
                sh = sh * keep_r
            pieces.append(sh)
    im2col = jnp.concatenate(pieces, axis=1)                             # (HW, 9P)
    out = jnp.dot(im2col, w2_ref[...],
                  preferred_element_type=jnp.float32)                    # (HW, P)
    out = jnp.maximum(gn_channelwise(out, g2_ref, b2_ref), 0.0)

    # ---- conv3 (1x1) + GN ----
    out = jnp.dot(out, w3_ref[...], preferred_element_type=jnp.float32)  # (HW, 4P)
    out = gn_grouped(out, g3_ref, b3_ref)

    # ---- residual add + ReLU (downsample is None, inplanes == planes*expansion) ----
    o_ref[0] = jnp.maximum(out + x, 0.0)


def bottleneck_pallas(x_nchw, params):
    (w1, w2, w3, g1, b1, g2, b2, g3, b3, m3) = params
    n = x_nchw.shape[0]
    # NCHW -> (N, H*W, C)
    x_flat = jnp.transpose(x_nchw, (0, 2, 3, 1)).reshape(n, HW, INPLANES)

    full = lambda shape: pl.BlockSpec(shape, lambda i: (0,) * len(shape))
    out_flat = pl.pallas_call(
        bottleneck_kernel,
        out_shape=jax.ShapeDtypeStruct((n, HW, OUTPLANES), jnp.float32),
        grid_spec=pltpu.PrefetchScalarGridSpec(
            num_scalar_prefetch=0,
            grid=(n,),
            in_specs=[
                pl.BlockSpec((1, HW, INPLANES), lambda i: (i, 0, 0)),
                full((INPLANES, PLANES)),                    # w1
                full((9 * PLANES, PLANES)),                  # w2 in im2col layout
                full((PLANES, OUTPLANES)),                   # w3
                full((1, PLANES)), full((1, PLANES)),        # g1, b1
                full((1, PLANES)), full((1, PLANES)),        # g2, b2
                full((1, OUTPLANES)), full((1, OUTPLANES)),  # g3, b3
                full((OUTPLANES, OUTPLANES)),                # m3 combined GN matrix
            ],
            out_specs=pl.BlockSpec((1, HW, OUTPLANES), lambda i: (i, 0, 0)),
        ),
        compiler_params=pltpu.CompilerParams(
            dimension_semantics=("parallel",)),
    )(x_flat, w1, w2, w3, g1, b1, g2, b2, g3, b3, m3)

    # (N, H*W, C) -> NCHW
    return jnp.transpose(out_flat.reshape(n, H, W, OUTPLANES), (0, 3, 1, 2))


# --------------------- parameter setup (plain JAX glue) ---------------------
def weight_standardize(w):
    # w: (Cout, Cin, kh, kw)  -- matches L.Conv2d (WS) in resnet_GN_WS.py
    mean = w.mean(axis=(1, 2, 3), keepdims=True)
    w = w - mean
    std = jnp.std(w.reshape(w.shape[0], -1), axis=1, ddof=1).reshape(-1, 1, 1, 1)
    return w / (std + 1e-5)


def make_params(key):
    ks = jax.random.split(key, 9)
    w1_t = jax.random.normal(ks[0], (PLANES, INPLANES, 1, 1), jnp.float32) * 0.1
    w2_t = jax.random.normal(ks[1], (PLANES, PLANES, 3, 3), jnp.float32) * 0.1
    w3_t = jax.random.normal(ks[2], (OUTPLANES, PLANES, 1, 1), jnp.float32) * 0.1
    g1 = 1.0 + 0.1 * jax.random.normal(ks[3], (PLANES,), jnp.float32)
    b1 = 0.1 * jax.random.normal(ks[4], (PLANES,), jnp.float32)
    g2 = 1.0 + 0.1 * jax.random.normal(ks[5], (PLANES,), jnp.float32)
    b2 = 0.1 * jax.random.normal(ks[6], (PLANES,), jnp.float32)
    g3 = 1.0 + 0.1 * jax.random.normal(ks[7], (OUTPLANES,), jnp.float32)
    b3 = 0.1 * jax.random.normal(ks[8], (OUTPLANES,), jnp.float32)

    # weight standardization (part of the forward pass; weights are static here)
    w1 = weight_standardize(w1_t)[:, :, 0, 0].T                     # (Cin, P)
    w2 = jnp.transpose(weight_standardize(w2_t),
                       (2, 3, 1, 0)).reshape(9 * PLANES, PLANES)    # (9*Cin, Cout)
    w3 = weight_standardize(w3_t)[:, :, 0, 0].T                     # (P, 4P)

    # combined GroupNorm(32) averaging matrix for the 128-channel activation:
    # M3[c, c'] = [group(c) == group(c')] / (HW * group_size)
    cg = OUTPLANES // GROUPS
    ch = jnp.arange(OUTPLANES)
    member = (ch[:, None] // cg == jnp.arange(GROUPS)[None, :]).astype(jnp.float32)
    m3 = (member @ member.T) / float(HW * cg)                       # (4P, 4P)

    return (w1, w2, w3,
            g1.reshape(1, -1), b1.reshape(1, -1),
            g2.reshape(1, -1), b2.reshape(1, -1),
            g3.reshape(1, -1), b3.reshape(1, -1),
            m3)


# ------------------------- pure-JAX reference -------------------------
def reference(x_nchw, params):
    (w1, w2, w3, g1, b1, g2, b2, g3, b3, _m3) = params
    w2_hwio = w2.reshape(3, 3, PLANES, PLANES)       # (kh, kw, Cin, Cout)
    x = jnp.transpose(x_nchw, (0, 2, 3, 1))          # NHWC

    def gn(v, gamma, beta):
        n, h, w, c = v.shape
        cg = c // GROUPS
        vg = v.reshape(n, h, w, GROUPS, cg)
        mean = vg.mean(axis=(1, 2, 4), keepdims=True)
        var = ((vg - mean) ** 2).mean(axis=(1, 2, 4), keepdims=True)
        vn = (vg - mean) / jnp.sqrt(var + EPS)
        return vn.reshape(n, h, w, c) * gamma.reshape(1, 1, 1, c) + beta.reshape(1, 1, 1, c)

    out = jnp.einsum('nhwc,cd->nhwd', x, w1)
    out = jax.nn.relu(gn(out, g1, b1))
    out = lax.conv_general_dilated(out, w2_hwio, (1, 1), 'SAME',
                                   dimension_numbers=('NHWC', 'HWIO', 'NHWC'))
    out = jax.nn.relu(gn(out, g2, b2))
    out = jnp.einsum('nhwc,cd->nhwd', out, w3)
    out = gn(out, g3, b3)
    out = jax.nn.relu(out + x)
    return jnp.transpose(out, (0, 3, 1, 2))          # back to NCHW


if __name__ == "__main__":
    key = jax.random.PRNGKey(0)
    kx, kp = jax.random.split(key)
    x = jax.random.normal(kx, (N, INPLANES, H, W), jnp.float32)
    params = make_params(kp)

    out = bottleneck_pallas(x, params)
    out = jax.block_until_ready(out)

    ref = jax.block_until_ready(reference(x, params))
    np.testing.assert_allclose(np.asarray(out), np.asarray(ref),
                               rtol=1e-3, atol=1e-3)
    print("KERNEL_OK")
</pallas_src>

<mosaic_0001>
module attributes {stable_mosaic.version = 11 : i64} {
  func.func @bottleneck_kernel(%arg0: i32, %arg1: memref<1x256x128xf32, #tpu.memory_space<vmem>>, %arg2: memref<128x32xf32, #tpu.memory_space<vmem>>, %arg3: memref<288x32xf32, #tpu.memory_space<vmem>>, %arg4: memref<32x128xf32, #tpu.memory_space<vmem>>, %arg5: memref<1x32xf32, #tpu.memory_space<vmem>>, %arg6: memref<1x32xf32, #tpu.memory_space<vmem>>, %arg7: memref<1x32xf32, #tpu.memory_space<vmem>>, %arg8: memref<1x32xf32, #tpu.memory_space<vmem>>, %arg9: memref<1x128xf32, #tpu.memory_space<vmem>>, %arg10: memref<1x128xf32, #tpu.memory_space<vmem>>, %arg11: memref<128x128xf32, #tpu.memory_space<vmem>>, %arg12: memref<1x256x128xf32, #tpu.memory_space<vmem>>) attributes {dimension_semantics = [#tpu.dimension_semantics<parallel>], iteration_bounds = array<i64: 2>, scalar_prefetch = 0 : i64, scratch_operands = 0 : i64, tpu.core_type = #tpu.core_type<tc>, window_params = [{transform_indices = @transform_0, window_bounds = array<i64: 1, 256, 128>}, {pipeline_mode = #tpu.pipeline_mode<synchronous>, transform_indices = @transform_1, window_bounds = array<i64: 128, 32>}, {pipeline_mode = #tpu.pipeline_mode<synchronous>, transform_indices = @transform_2, window_bounds = array<i64: 288, 32>}, {pipeline_mode = #tpu.pipeline_mode<synchronous>, transform_indices = @transform_3, window_bounds = array<i64: 32, 128>}, {pipeline_mode = #tpu.pipeline_mode<synchronous>, transform_indices = @transform_4, window_bounds = array<i64: 1, 32>}, {pipeline_mode = #tpu.pipeline_mode<synchronous>, transform_indices = @transform_5, window_bounds = array<i64: 1, 32>}, {pipeline_mode = #tpu.pipeline_mode<synchronous>, transform_indices = @transform_6, window_bounds = array<i64: 1, 32>}, {pipeline_mode = #tpu.pipeline_mode<synchronous>, transform_indices = @transform_7, window_bounds = array<i64: 1, 32>}, {pipeline_mode = #tpu.pipeline_mode<synchronous>, transform_indices = @transform_8, window_bounds = array<i64: 1, 128>}, {pipeline_mode = #tpu.pipeline_mode<synchronous>, transform_indices = @transform_9, window_bounds = array<i64: 1, 128>}, {pipeline_mode = #tpu.pipeline_mode<synchronous>, transform_indices = @transform_10, window_bounds = array<i64: 128, 128>}, {transform_indices = @transform_11, window_bounds = array<i64: 1, 256, 128>}]} {
    %c0 = arith.constant 0 : index
    %c0_0 = arith.constant 0 : index
    %c0_1 = arith.constant 0 : index
    %0 = vector.load %arg1[%c0, %c0_0, %c0_1] : memref<1x256x128xf32, #tpu.memory_space<vmem>>, vector<1x256x128xf32>
    %1 = vector.shape_cast %0 : vector<1x256x128xf32> to vector<256x128xf32>
    %c0_2 = arith.constant 0 : index
    %c0_3 = arith.constant 0 : index
    %2 = vector.load %arg2[%c0_2, %c0_3] : memref<128x32xf32, #tpu.memory_space<vmem>>, vector<128x32xf32>
    %cst = arith.constant dense<0.000000e+00> : vector<256x32xf32>
    %3 = tpu.matmul %1, %2, %cst {dimension_numbers = #tpu.dot_dimension_numbers<[1], [0], [0], [1], [0, 0, 1, 1], [], []>} : vector<256x128xf32>, vector<128x32xf32>, vector<256x32xf32> -> vector<256x32xf32>
    %cst_4 = arith.constant dense<0.000000e+00> : vector<32xf32>
    %4 = vector.multi_reduction <add>, %3, %cst_4 [0] : vector<256x32xf32> to vector<32xf32>
    %5 = vector.shape_cast %4 : vector<32xf32> to vector<1x32xf32>
    %cst_5 = arith.constant 3.906250e-03 : f32
    %6 = vector.broadcast %cst_5 : f32 to vector<1x32xf32>
    %7 = arith.mulf %5, %6 : vector<1x32xf32>
    %8 = vector.broadcast %7 : vector<1x32xf32> to vector<256x32xf32>
    %9 = arith.subf %3, %8 : vector<256x32xf32>
    %10 = arith.mulf %9, %9 : vector<256x32xf32>
    %cst_6 = arith.constant dense<0.000000e+00> : vector<32xf32>
    %11 = vector.multi_reduction <add>, %10, %cst_6 [0] : vector<256x32xf32> to vector<32xf32>
    %12 = vector.shape_cast %11 : vector<32xf32> to vector<1x32xf32>
    %cst_7 = arith.constant 3.906250e-03 : f32
    %13 = vector.broadcast %cst_7 : f32 to vector<1x32xf32>
    %14 = arith.mulf %12, %13 : vector<1x32xf32>
    %cst_8 = arith.constant 9.99999974E-6 : f32
    %15 = vector.broadcast %cst_8 : f32 to vector<1x32xf32>
    %16 = arith.addf %14, %15 : vector<1x32xf32>
    %17 = math.rsqrt %16 : vector<1x32xf32>
    %18 = vector.broadcast %17 : vector<1x32xf32> to vector<256x32xf32>
    %19 = arith.mulf %9, %18 : vector<256x32xf32>
    %c0_9 = arith.constant 0 : index
    %c0_10 = arith.constant 0 : index
    %20 = vector.load %arg5[%c0_9, %c0_10] : memref<1x32xf32, #tpu.memory_space<vmem>>, vector<1x32xf32>
    %21 = vector.broadcast %20 : vector<1x32xf32> to vector<256x32xf32>
    %22 = arith.mulf %19, %21 : vector<256x32xf32>
    %c0_11 = arith.constant 0 : index
    %c0_12 = arith.constant 0 : index
    %23 = vector.load %arg6[%c0_11, %c0_12] : memref<1x32xf32, #tpu.memory_space<vmem>>, vector<1x32xf32>
    %24 = vector.broadcast %23 : vector<1x32xf32> to vector<256x32xf32>
    %25 = arith.addf %22, %24 : vector<256x32xf32>
    %cst_13 = arith.constant 0.000000e+00 : f32
    %26 = vector.broadcast %cst_13 : f32 to vector<256x32xf32>
    %27 = arith.maximumf %25, %26 : vector<256x32xf32>
    %28 = tpu.iota {dimensions = array<i32: 0>} : vector<256x32xi32>
    %c16_i32 = arith.constant 16 : i32
    %c0_i32 = arith.constant 0 : i32
    %29 = arith.cmpi eq, %c16_i32, %c0_i32 : i32
    %c1_i32 = arith.constant 1 : i32
    %30 = arith.select %29, %c1_i32, %c16_i32 : i32
    %31 = vector.broadcast %30 : i32 to vector<256x32xi32>
    %32 = arith.remsi %28, %31 : vector<256x32xi32>
    %c0_i32_14 = arith.constant 0 : i32
    %33 = vector.broadcast %c0_i32_14 : i32 to vector<256x32xi32>
    %34 = arith.cmpi ne, %32, %33 : vector<256x32xi32>
    %c0_i32_15 = arith.constant 0 : i32
    %35 = vector.broadcast %c0_i32_15 : i32 to vector<256x32xi32>
    %36 = arith.cmpi slt, %32, %35 : vector<256x32xi32>
    %c0_i32_16 = arith.constant 0 : i32
    %37 = arith.cmpi slt, %30, %c0_i32_16 : i32
    %38 = vector.broadcast %37 : i1 to vector<256x32xi1>
    %39 = vector.broadcast %38 : vector<256x32xi1> to vector<256x32xi1>
    %40 = arith.xori %36, %39 : vector<256x32xi1>
    %41 = arith.andi %40, %34 : vector<256x32xi1>
    %42 = vector.broadcast %30 : i32 to vector<256x32xi32>
    %43 = arith.addi %32, %42 : vector<256x32xi32>
    %44 = arith.select %41, %43, %32 : vector<256x32xi1>, vector<256x32xi32>
    %c0_i32_17 = arith.constant 0 : i32
    %45 = vector.broadcast %c0_i32_17 : i32 to vector<256x32xi32>
    %46 = arith.cmpi ne, %44, %45 : vector<256x32xi32>
    %47 = arith.extui %46 : vector<256x32xi1> to vector<256x32xi32>
    %48 = arith.sitofp %47 : vector<256x32xi32> to vector<256x32xf32>
    %c15_i32 = arith.constant 15 : i32
    %49 = vector.broadcast %c15_i32 : i32 to vector<256x32xi32>
    %50 = arith.cmpi ne, %44, %49 : vector<256x32xi32>
    %51 = arith.extui %50 : vector<256x32xi1> to vector<256x32xi32>
    %52 = arith.sitofp %51 : vector<256x32xi32> to vector<256x32xf32>
    %cst_18 = arith.constant 0.000000e+00 : f32
    %53 = vector.broadcast %cst_18 : f32 to vector<17x32xf32>
    %54 = vector.extract_strided_slice %27 {offsets = [0, 0], sizes = [239, 32], strides = [1, 1]} : vector<256x32xf32> to vector<239x32xf32>
    %55 = tpu.concatenate %53, %54 in 0 : vector<17x32xf32>, vector<239x32xf32> -> vector<256x32xf32>
    %56 = arith.mulf %55, %48 : vector<256x32xf32>
    %cst_19 = arith.constant 0.000000e+00 : f32
    %57 = vector.broadcast %cst_19 : f32 to vector<16x32xf32>
    %58 = vector.extract_strided_slice %27 {offsets = [0, 0], sizes = [240, 32], strides = [1, 1]} : vector<256x32xf32> to vector<240x32xf32>
    %59 = tpu.concatenate %57, %58 in 0 : vector<16x32xf32>, vector<240x32xf32> -> vector<256x32xf32>
    %cst_20 = arith.constant 0.000000e+00 : f32
    %60 = vector.broadcast %cst_20 : f32 to vector<15x32xf32>
    %61 = vector.extract_strided_slice %27 {offsets = [0, 0], sizes = [241, 32], strides = [1, 1]} : vector<256x32xf32> to vector<241x32xf32>
    %62 = tpu.concatenate %60, %61 in 0 : vector<15x32xf32>, vector<241x32xf32> -> vector<256x32xf32>
    %63 = arith.mulf %62, %52 : vector<256x32xf32>
    %cst_21 = arith.constant 0.000000e+00 : f32
    %64 = vector.broadcast %cst_21 : f32 to vector<1x32xf32>
    %65 = vector.extract_strided_slice %27 {offsets = [0, 0], sizes = [255, 32], strides = [1, 1]} : vector<256x32xf32> to vector<255x32xf32>
    %66 = tpu.concatenate %64, %65 in 0 : vector<1x32xf32>, vector<255x32xf32> -> vector<256x32xf32>
    %67 = arith.mulf %66, %48 : vector<256x32xf32>
    %68 = vector.extract_strided_slice %27 {offsets = [1, 0], sizes = [255, 32], strides = [1, 1]} : vector<256x32xf32> to vector<255x32xf32>
    %cst_22 = arith.constant 0.000000e+00 : f32
    %69 = vector.broadcast %cst_22 : f32 to vector<1x32xf32>
    %70 = tpu.concatenate %68, %69 in 0 : vector<255x32xf32>, vector<1x32xf32> -> vector<256x32xf32>
    %71 = arith.mulf %70, %52 : vector<256x32xf32>
    %72 = vector.extract_strided_slice %27 {offsets = [15, 0], sizes = [241, 32], strides = [1, 1]} : vector<256x32xf32> to vector<241x32xf32>
    %cst_23 = arith.constant 0.000000e+00 : f32
    %73 = vector.broadcast %cst_23 : f32 to vector<15x32xf32>
    %74 = tpu.concatenate %72, %73 in 0 : vector<241x32xf32>, vector<15x32xf32> -> vector<256x32xf32>
    %75 = arith.mulf %74, %48 : vector<256x32xf32>
    %76 = vector.extract_strided_slice %27 {offsets = [16, 0], sizes = [240, 32], strides = [1, 1]} : vector<256x32xf32> to vector<240x32xf32>
    %cst_24 = arith.constant 0.000000e+00 : f32
    %77 = vector.broadcast %cst_24 : f32 to vector<16x32xf32>
    %78 = tpu.concatenate %76, %77 in 0 : vector<240x32xf32>, vector<16x32xf32> -> vector<256x32xf32>
    %79 = vector.extract_strided_slice %27 {offsets = [17, 0], sizes = [239, 32], strides = [1, 1]} : vector<256x32xf32> to vector<239x32xf32>
    %cst_25 = arith.constant 0.000000e+00 : f32
    %80 = vector.broadcast %cst_25 : f32 to vector<17x32xf32>
    %81 = tpu.concatenate %79, %80 in 0 : vector<239x32xf32>, vector<17x32xf32> -> vector<256x32xf32>
    %82 = arith.mulf %81, %52 : vector<256x32xf32>
    %83 = tpu.concatenate %56, %59, %63, %67, %27, %71, %75, %78, %82 in 1 : vector<256x32xf32>, vector<256x32xf32>, vector<256x32xf32>, vector<256x32xf32>, vector<256x32xf32>, vector<256x32xf32>, vector<256x32xf32>, vector<256x32xf32>, vector<256x32xf32> -> vector<256x288xf32>
    %c0_26 = arith.constant 0 : index
    %c0_27 = arith.constant 0 : index
    %84 = vector.load %arg3[%c0_26, %c0_27] : memref<288x32xf32, #tpu.memory_space<vmem>>, vector<288x32xf32>
    %cst_28 = arith.constant dense<0.000000e+00> : vector<256x32xf32>
    %85 = tpu.matmul %83, %84, %cst_28 {dimension_numbers = #tpu.dot_dimension_numbers<[1], [0], [0], [1], [0, 0, 1, 1], [], []>} : vector<256x288xf32>, vector<288x32xf32>, vector<256x32xf32> -> vector<256x32xf32>
    %cst_29 = arith.constant dense<0.000000e+00> : vector<32xf32>
    %86 = vector.multi_reduction <add>, %85, %cst_29 [0] : vector<256x32xf32> to vector<32xf32>
    %87 = vector.shape_cast %86 : vector<32xf32> to vector<1x32xf32>
    %cst_30 = arith.constant 3.906250e-03 : f32
    %88 = vector.broadcast %cst_30 : f32 to vector<1x32xf32>
    %89 = arith.mulf %87, %88 : vector<1x32xf32>
    %90 = vector.broadcast %89 : vector<1x32xf32> to vector<256x32xf32>
    %91 = arith.subf %85, %90 : vector<256x32xf32>
    %92 = arith.mulf %91, %91 : vector<256x32xf32>
    %cst_31 = arith.constant dense<0.000000e+00> : vector<32xf32>
    %93 = vector.multi_reduction <add>, %92, %cst_31 [0] : vector<256x32xf32> to vector<32xf32>
    %94 = vector.shape_cast %93 : vector<32xf32> to vector<1x32xf32>
    %cst_32 = arith.constant 3.906250e-03 : f32
    %95 = vector.broadcast %cst_32 : f32 to vector<1x32xf32>
    %96 = arith.mulf %94, %95 : vector<1x32xf32>
    %cst_33 = arith.constant 9.99999974E-6 : f32
    %97 = vector.broadcast %cst_33 : f32 to vector<1x32xf32>
    %98 = arith.addf %96, %97 : vector<1x32xf32>
    %99 = math.rsqrt %98 : vector<1x32xf32>
    %100 = vector.broadcast %99 : vector<1x32xf32> to vector<256x32xf32>
    %101 = arith.mulf %91, %100 : vector<256x32xf32>
    %c0_34 = arith.constant 0 : index
    %c0_35 = arith.constant 0 : index
    %102 = vector.load %arg7[%c0_34, %c0_35] : memref<1x32xf32, #tpu.memory_space<vmem>>, vector<1x32xf32>
    %103 = vector.broadcast %102 : vector<1x32xf32> to vector<256x32xf32>
    %104 = arith.mulf %101, %103 : vector<256x32xf32>
    %c0_36 = arith.constant 0 : index
    %c0_37 = arith.constant 0 : index
    %105 = vector.load %arg8[%c0_36, %c0_37] : memref<1x32xf32, #tpu.memory_space<vmem>>, vector<1x32xf32>
    %106 = vector.broadcast %105 : vector<1x32xf32> to vector<256x32xf32>
    %107 = arith.addf %104, %106 : vector<256x32xf32>
    %cst_38 = arith.constant 0.000000e+00 : f32
    %108 = vector.broadcast %cst_38 : f32 to vector<256x32xf32>
    %109 = arith.maximumf %107, %108 : vector<256x32xf32>
    %c0_39 = arith.constant 0 : index
    %c0_40 = arith.constant 0 : index
    %110 = vector.load %arg4[%c0_39, %c0_40] : memref<32x128xf32, #tpu.memory_space<vmem>>, vector<32x128xf32>
    %cst_41 = arith.constant dense<0.000000e+00> : vector<256x128xf32>
    %111 = tpu.matmul %109, %110, %cst_41 {dimension_numbers = #tpu.dot_dimension_numbers<[1], [0], [0], [1], [0, 0, 1, 1], [], []>} : vector<256x32xf32>, vector<32x128xf32>, vector<256x128xf32> -> vector<256x128xf32>
    %cst_42 = arith.constant dense<0.000000e+00> : vector<128xf32>
    %112 = vector.multi_reduction <add>, %111, %cst_42 [0] : vector<256x128xf32> to vector<128xf32>
    %113 = vector.shape_cast %112 : vector<128xf32> to vector<1x128xf32>
    %c0_43 = arith.constant 0 : index
    %c0_44 = arith.constant 0 : index
    %114 = vector.load %arg11[%c0_43, %c0_44] : memref<128x128xf32, #tpu.memory_space<vmem>>, vector<128x128xf32>
    %cst_45 = arith.constant dense<0.000000e+00> : vector<1x128xf32>
    %115 = tpu.matmul %113, %114, %cst_45 {dimension_numbers = #tpu.dot_dimension_numbers<[1], [0], [0], [1], [0, 0, 1, 1], [], []>} : vector<1x128xf32>, vector<128x128xf32>, vector<1x128xf32> -> vector<1x128xf32>
    %116 = vector.broadcast %115 : vector<1x128xf32> to vector<256x128xf32>
    %117 = arith.subf %111, %116 : vector<256x128xf32>
    %118 = arith.mulf %117, %117 : vector<256x128xf32>
    %cst_46 = arith.constant dense<0.000000e+00> : vector<128xf32>
    %119 = vector.multi_reduction <add>, %118, %cst_46 [0] : vector<256x128xf32> to vector<128xf32>
    %120 = vector.shape_cast %119 : vector<128xf32> to vector<1x128xf32>
    %c0_47 = arith.constant 0 : index
    %c0_48 = arith.constant 0 : index
    %121 = vector.load %arg11[%c0_47, %c0_48] : memref<128x128xf32, #tpu.memory_space<vmem>>, vector<128x128xf32>
    %cst_49 = arith.constant dense<0.000000e+00> : vector<1x128xf32>
    %122 = tpu.matmul %120, %121, %cst_49 {dimension_numbers = #tpu.dot_dimension_numbers<[1], [0], [0], [1], [0, 0, 1, 1], [], []>} : vector<1x128xf32>, vector<128x128xf32>, vector<1x128xf32> -> vector<1x128xf32>
    %cst_50 = arith.constant 9.99999974E-6 : f32
    %123 = vector.broadcast %cst_50 : f32 to vector<1x128xf32>
    %124 = arith.addf %122, %123 : vector<1x128xf32>
    %125 = math.rsqrt %124 : vector<1x128xf32>
    %126 = vector.broadcast %125 : vector<1x128xf32> to vector<256x128xf32>
    %127 = arith.mulf %117, %126 : vector<256x128xf32>
    %c0_51 = arith.constant 0 : index
    %c0_52 = arith.constant 0 : index
    %128 = vector.load %arg9[%c0_51, %c0_52] : memref<1x128xf32, #tpu.memory_space<vmem>>, vector<1x128xf32>
    %129 = vector.broadcast %128 : vector<1x128xf32> to vector<256x128xf32>
    %130 = arith.mulf %127, %129 : vector<256x128xf32>
    %c0_53 = arith.constant 0 : index
    %c0_54 = arith.constant 0 : index
    %131 = vector.load %arg10[%c0_53, %c0_54] : memref<1x128xf32, #tpu.memory_space<vmem>>, vector<1x128xf32>
    %132 = vector.broadcast %131 : vector<1x128xf32> to vector<256x128xf32>
    %133 = arith.addf %130, %132 : vector<256x128xf32>
    %134 = arith.addf %133, %1 : vector<256x128xf32>
    %cst_55 = arith.constant 0.000000e+00 : f32
    %135 = vector.broadcast %cst_55 : f32 to vector<256x128xf32>
    %136 = arith.maximumf %134, %135 : vector<256x128xf32>
    %c0_56 = arith.constant 0 : index
    %c0_57 = arith.constant 0 : index
    %c0_58 = arith.constant 0 : index
    %137 = vector.load %arg12[%c0_56, %c0_57, %c0_58] : memref<1x256x128xf32, #tpu.memory_space<vmem>>, vector<1x256x128xf32>
    %138 = vector.shape_cast %137 : vector<1x256x128xf32> to vector<256x128xf32>
    %139 = vector.shape_cast %136 : vector<256x128xf32> to vector<1x256x128xf32>
    tpu.vector_store %arg12[%c0_56, %c0_57, %c0_58], %139 {strides = array<i32>} : memref<1x256x128xf32, #tpu.memory_space<vmem>>, vector<1x256x128xf32>,
    return
  }
  func.func @transform_0(%arg0: i32) -> (i32, i32, i32) {
    %c0_i32 = arith.constant 0 : i32
    %c0_i32_0 = arith.constant 0 : i32
    %c0_i32_1 = arith.constant 0 : i32
    return %arg0, %c0_i32, %c0_i32_0 : i32, i32, i32
  }
  func.func @transform_1(%arg0: i32) -> (i32, i32) {
    %c0_i32 = arith.constant 0 : i32
    %c0_i32_0 = arith.constant 0 : i32
    %c0_i32_1 = arith.constant 0 : i32
    return %c0_i32, %c0_i32_0 : i32, i32
  }
  func.func @transform_2(%arg0: i32) -> (i32, i32) {
    %c0_i32 = arith.constant 0 : i32
    %c0_i32_0 = arith.constant 0 : i32
    %c0_i32_1 = arith.constant 0 : i32
    return %c0_i32, %c0_i32_0 : i32, i32
  }
  func.func @transform_3(%arg0: i32) -> (i32, i32) {
    %c0_i32 = arith.constant 0 : i32
    %c0_i32_0 = arith.constant 0 : i32
    %c0_i32_1 = arith.constant 0 : i32
    return %c0_i32, %c0_i32_0 : i32, i32
  }
  func.func @transform_4(%arg0: i32) -> (i32, i32) {
    %c0_i32 = arith.constant 0 : i32
    %c0_i32_0 = arith.constant 0 : i32
    %c0_i32_1 = arith.constant 0 : i32
    return %c0_i32, %c0_i32_0 : i32, i32
  }
  func.func @transform_5(%arg0: i32) -> (i32, i32) {
    %c0_i32 = arith.constant 0 : i32
    %c0_i32_0 = arith.constant 0 : i32
    %c0_i32_1 = arith.constant 0 : i32
    return %c0_i32, %c0_i32_0 : i32, i32
  }
  func.func @transform_6(%arg0: i32) -> (i32, i32) {
    %c0_i32 = arith.constant 0 : i32
    %c0_i32_0 = arith.constant 0 : i32
    %c0_i32_1 = arith.constant 0 : i32
    return %c0_i32, %c0_i32_0 : i32, i32
  }
  func.func @transform_7(%arg0: i32) -> (i32, i32) {
    %c0_i32 = arith.constant 0 : i32
    %c0_i32_0 = arith.constant 0 : i32
    %c0_i32_1 = arith.constant 0 : i32
    return %c0_i32, %c0_i32_0 : i32, i32
  }
  func.func @transform_8(%arg0: i32) -> (i32, i32) {
    %c0_i32 = arith.constant 0 : i32
    %c0_i32_0 = arith.constant 0 : i32
    %c0_i32_1 = arith.constant 0 : i32
    return %c0_i32, %c0_i32_0 : i32, i32
  }
  func.func @transform_9(%arg0: i32) -> (i32, i32) {
    %c0_i32 = arith.constant 0 : i32
    %c0_i32_0 = arith.constant 0 : i32
    %c0_i32_1 = arith.constant 0 : i32
    return %c0_i32, %c0_i32_0 : i32, i32
  }
  func.func @transform_10(%arg0: i32) -> (i32, i32) {
    %c0_i32 = arith.constant 0 : i32
    %c0_i32_0 = arith.constant 0 : i32
    %c0_i32_1 = arith.constant 0 : i32
    return %c0_i32, %c0_i32_0 : i32, i32
  }
  func.func @transform_11(%arg0: i32) -> (i32, i32, i32) {
    %c0_i32 = arith.constant 0 : i32
    %c0_i32_0 = arith.constant 0 : i32
    %c0_i32_1 = arith.constant 0 : i32
    return %arg0, %c0_i32, %c0_i32_0 : i32, i32, i32
  }
}

</mosaic_0001>

<llo_original>
// kernel: tpu_custom_call.1
$region0: #{tpu_custom_call.1}
  #allocation0 [shape = 'u32[]', space=smem, size = 0x4, offset = 0x4, fixed_abs, tag = 'smem constant byte address 0x4 - core index']
  #allocation1 [shape = 'u32[144,128]{1,0:T(1,128)}', space=vmem, size = 0x12000, scoped, tag = 'internal scratch']
  %s0 = inlined_call_operand.vmem [shape: f32[2,256,128], index: 0, kind: input, shape index: {}]
  %s1 = inlined_call_operand.vmem [shape: f32[128,32], index: 1, kind: input, shape index: {}]
  %s2 = inlined_call_operand.vmem [shape: f32[288,32], index: 2, kind: input, shape index: {}]
  %s3 = inlined_call_operand.vmem [shape: f32[32,128], index: 3, kind: input, shape index: {}]
  %s4 = inlined_call_operand.vmem [shape: f32[1,32], index: 4, kind: input, shape index: {}]
  %s5 = inlined_call_operand.vmem [shape: f32[1,32], index: 5, kind: input, shape index: {}]
  %s6 = inlined_call_operand.vmem [shape: f32[1,32], index: 6, kind: input, shape index: {}]
  %s7 = inlined_call_operand.vmem [shape: f32[1,32], index: 7, kind: input, shape index: {}]
  %s8 = inlined_call_operand.vmem [shape: f32[1,128], index: 8, kind: input, shape index: {}]
  %s9 = inlined_call_operand.vmem [shape: f32[1,128], index: 9, kind: input, shape index: {}]
  %s10 = inlined_call_operand.hbm [shape: f32[128,128], index: 10, kind: input, shape index: {}]
  %s11 = inlined_call_operand.hbm [shape: f32[2,256,128], index: 11, kind: output, shape index: {}]
  %s12 = sld [smem:[#allocation0]]
  $region81: #{tpu_custom_call.1} parent=0
    _
  %s14 = ssub.s32 1, %s12
  %s15 = scalar_select 0, %s14, %s12
  $region1: #{tpu_custom_call.1} parent=0
    #allocation2 [shape = 'u8[65536]{0}', space=vmem, size = 0x10000, scoped, tag = 'input window, operand 10, single buffered']
    #allocation3 [shape = 's32[2]{0}', space=sflag, size = 0x8, scoped, tag = 'scoped memory for tpu_custom_call.1']
    #allocation4 [shape = 's32[2]{0}', space=sflag, size = 0x8, scoped, tag = 'scoped memory for tpu_custom_call.1']
    #allocation5 [shape = 'u8[262144]{0}', space=vmem, size = 0x40000, scoped, tag = 'output window, operand 0']
    %16 = vsyncpa [#allocation3], 0
    %17 = vsyncpa [#allocation4], 0
    %s18 = scalar_lea.sflag [#allocation4], 1
    %19 = vsyncpa %s18, 0
    loop: start=0, step=1, limit=4
    $region2: #{tpu_custom_call.1} parent=1 // loop_pre_header
      _
    $region3: #{tpu_custom_call.1} parent=1 // loop_header
      %s21 = sphi 0, %s25
      %p22 = scmp.ge.s32.totalorder %s21, 4
      %s31 = sphi 0, %s33
      %s34 = sphi 0, %s31
      %s35 = sphi 0, %s34
      %s51 = sphi 0, %s35
      %s55 = sphi 0, %s55
      %s57 = sphi 0, %s55
      %s58 = sphi 0, %s57
      %s72 = sphi 0, %s58
      %s76 = sphi 0, %s76
      %s78 = sphi 0, %s76
      %s79 = sphi 0, %s78
      %s93 = sphi 0, %s79
      %s97 = sphi 0, %s97
      %s99 = sphi 0, %s97
      %s100 = sphi 0, %s99
      %s114 = sphi 0, %s100
      %s118 = sphi 0, %s118
      %s120 = sphi 0, %s118
      %s121 = sphi 0, %s120
      %s135 = sphi 0, %s121
      %s139 = sphi 0, %s139
      %s141 = sphi 0, %s139
      %s142 = sphi 0, %s141
      %s156 = sphi 0, %s142
      %s160 = sphi 0, %s160
      %s162 = sphi 0, %s160
      %s163 = sphi 0, %s162
      %s177 = sphi 0, %s163
      %s181 = sphi 0, %s181
      %s183 = sphi 0, %s181
      %s184 = sphi 0, %s183
      %s198 = sphi 0, %s184
      %s202 = sphi 0, %s202
      %s204 = sphi 0, %s202
      %s205 = sphi 0, %s204
      %s219 = sphi 0, %s205
      %s223 = sphi 0, %s223
      %s225 = sphi 0, %s223
      %s226 = sphi 0, %s225
      %s240 = sphi 0, %s226
      %s244 = sphi 0, %s244
      %s246 = sphi 0, %s244
      %s247 = sphi 0, %s246
      %s261 = sphi 0, %s247
      %s267 = sphi 0, %s269
      %s270 = sphi 0, %s267
      %s271 = sphi 0, %s270
      %s287 = sphi 0, %s271
    $region4: #{tpu_custom_call.1} parent=1 // loop_header_branch
      %24 = sbr.rel (%p22) target = $region8
    $region5: #{tpu_custom_call.1} parent=1 // loop_body
      %s26 = ssub.s32 %s21, 1
      %s27 = ssub.s32 %s21, 2
      %s28 = sadd.s32 %s21, 1
      %s29 = ssub.s32 %s21, %s28
      %p30 = scmp.eq.s32.totalorder %s29, 0
      %s32 = sadd.s32 %s31, 1
      %s33 = scalar_select %p30, %s31, %s32
      %p36 = pneg %p30
      %p37 = scmp.eq.s32.totalorder %s21, 1
      %p38 = por %p36, %p37
      %p39 = scmp.ne.s32.totalorder %s31, %s34
      %p40 = scmp.eq.s32.totalorder %s21, 0
      %p41 = por %p39, %p40
      %p42 = scmp.ne.s32.totalorder %s31, %s34
      %p43 = scmp.eq.s32.totalorder %s26, 1
      %p44 = por %p42, %p43
      %p45 = scmp.ne.s32.totalorder %s34, %s35
      %p46 = scmp.eq.s32.totalorder %s26, 0
      %p47 = por %p45, %p46
      %p48 = scmp.ne.s32.totalorder %s34, %s35
      %p49 = scmp.eq.s32.totalorder %s27, 1
      %p50 = por %p48, %p49
      %p52 = scmp.ne.s32.totalorder %s35, %s51
      %p53 = scmp.eq.s32.totalorder %s27, 0
      %p54 = por %p52, %p53
      %s56 = sadd.s32 %s55, 1
      %p59 = scmp.eq.s32.totalorder %s21, 1
      %p60 = scmp.ne.s32.totalorder %s55, %s57
      %p61 = scmp.eq.s32.totalorder %s21, 0
      %p62 = por %p60, %p61
      %p63 = scmp.ne.s32.totalorder %s55, %s57
      %p64 = scmp.eq.s32.totalorder %s26, 1
      %p65 = por %p63, %p64
      %p66 = scmp.ne.s32.totalorder %s57, %s58
      %p67 = scmp.eq.s32.totalorder %s26, 0
      %p68 = por %p66, %p67
      %p69 = scmp.ne.s32.totalorder %s57, %s58
      %p70 = scmp.eq.s32.totalorder %s27, 1
      %p71 = por %p69, %p70
      %p73 = scmp.ne.s32.totalorder %s58, %s72
      %p74 = scmp.eq.s32.totalorder %s27, 0
      %p75 = por %p73, %p74
      %s77 = sadd.s32 %s76, 1
      %p80 = scmp.eq.s32.totalorder %s21, 1
      %p81 = scmp.ne.s32.totalorder %s76, %s78
      %p82 = scmp.eq.s32.totalorder %s21, 0
      %p83 = por %p81, %p82
      %p84 = scmp.ne.s32.totalorder %s76, %s78
      %p85 = scmp.eq.s32.totalorder %s26, 1
      %p86 = por %p84, %p85
      %p87 = scmp.ne.s32.totalorder %s78, %s79
      %p88 = scmp.eq.s32.totalorder %s26, 0
      %p89 = por %p87, %p88
      %p90 = scmp.ne.s32.totalorder %s78, %s79
      %p91 = scmp.eq.s32.totalorder %s27, 1
      %p92 = por %p90, %p91
      %p94 = scmp.ne.s32.totalorder %s79, %s93
      %p95 = scmp.eq.s32.totalorder %s27, 0
      %p96 = por %p94, %p95
      %s98 = sadd.s32 %s97, 1
      %p101 = scmp.eq.s32.totalorder %s21, 1
      %p102 = scmp.ne.s32.totalorder %s97, %s99
      %p103 = scmp.eq.s32.totalorder %s21, 0
      %p104 = por %p102, %p103
      %p105 = scmp.ne.s32.totalorder %s97, %s99
      %p106 = scmp.eq.s32.totalorder %s26, 1
      %p107 = por %p105, %p106
      %p108 = scmp.ne.s32.totalorder %s99, %s100
      %p109 = scmp.eq.s32.totalorder %s26, 0
      %p110 = por %p108, %p109
      %p111 = scmp.ne.s32.totalorder %s99, %s100
      %p112 = scmp.eq.s32.totalorder %s27, 1
      %p113 = por %p111, %p112
      %p115 = scmp.ne.s32.totalorder %s100, %s114
      %p116 = scmp.eq.s32.totalorder %s27, 0
      %p117 = por %p115, %p116
      %s119 = sadd.s32 %s118, 1
      %p122 = scmp.eq.s32.totalorder %s21, 1
      %p123 = scmp.ne.s32.totalorder %s118, %s120
      %p124 = scmp.eq.s32.totalorder %s21, 0
      %p125 = por %p123, %p124
      %p126 = scmp.ne.s32.totalorder %s118, %s120
      %p127 = scmp.eq.s32.totalorder %s26, 1
      %p128 = por %p126, %p127
      %p129 = scmp.ne.s32.totalorder %s120, %s121
      %p130 = scmp.eq.s32.totalorder %s26, 0
      %p131 = por %p129, %p130
      %p132 = scmp.ne.s32.totalorder %s120, %s121
      %p133 = scmp.eq.s32.totalorder %s27, 1
      %p134 = por %p132, %p133
      %p136 = scmp.ne.s32.totalorder %s121, %s135
      %p137 = scmp.eq.s32.totalorder %s27, 0
      %p138 = por %p136, %p137
      %s140 = sadd.s32 %s139, 1
      %p143 = scmp.eq.s32.totalorder %s21, 1
      %p144 = scmp.ne.s32.totalorder %s139, %s141
      %p145 = scmp.eq.s32.totalorder %s21, 0
      %p146 = por %p144, %p145
      %p147 = scmp.ne.s32.totalorder %s139, %s141
      %p148 = scmp.eq.s32.totalorder %s26, 1
      %p149 = por %p147, %p148
      %p150 = scmp.ne.s32.totalorder %s141, %s142
      %p151 = scmp.eq.s32.totalorder %s26, 0
      %p152 = por %p150, %p151
      %p153 = scmp.ne.s32.totalorder %s141, %s142
      %p154 = scmp.eq.s32.totalorder %s27, 1
      %p155 = por %p153, %p154
      %p157 = scmp.ne.s32.totalorder %s142, %s156
      %p158 = scmp.eq.s32.totalorder %s27, 0
      %p159 = por %p157, %p158
      %s161 = sadd.s32 %s160, 1
      %p164 = scmp.eq.s32.totalorder %s21, 1
      %p165 = scmp.ne.s32.totalorder %s160, %s162
      %p166 = scmp.eq.s32.totalorder %s21, 0
      %p167 = por %p165, %p166
      %p168 = scmp.ne.s32.totalorder %s160, %s162
      %p169 = scmp.eq.s32.totalorder %s26, 1
      %p170 = por %p168, %p169
      %p171 = scmp.ne.s32.totalorder %s162, %s163
      %p172 = scmp.eq.s32.totalorder %s26, 0
      %p173 = por %p171, %p172
      %p174 = scmp.ne.s32.totalorder %s162, %s163
      %p175 = scmp.eq.s32.totalorder %s27, 1
      %p176 = por %p174, %p175
      %p178 = scmp.ne.s32.totalorder %s163, %s177
      %p179 = scmp.eq.s32.totalorder %s27, 0
      %p180 = por %p178, %p179
      %s182 = sadd.s32 %s181, 1
      %p185 = scmp.eq.s32.totalorder %s21, 1
      %p186 = scmp.ne.s32.totalorder %s181, %s183
      %p187 = scmp.eq.s32.totalorder %s21, 0
      %p188 = por %p186, %p187
      %p189 = scmp.ne.s32.totalorder %s181, %s183
      %p190 = scmp.eq.s32.totalorder %s26, 1
      %p191 = por %p189, %p190
      %p192 = scmp.ne.s32.totalorder %s183, %s184
      %p193 = scmp.eq.s32.totalorder %s26, 0
      %p194 = por %p192, %p193
      %p195 = scmp.ne.s32.totalorder %s183, %s184
      %p196 = scmp.eq.s32.totalorder %s27, 1
      %p197 = por %p195, %p196
      %p199 = scmp.ne.s32.totalorder %s184, %s198
      %p200 = scmp.eq.s32.totalorder %s27, 0
      %p201 = por %p199, %p200
      %s203 = sadd.s32 %s202, 1
      %p206 = scmp.eq.s32.totalorder %s21, 1
      %p207 = scmp.ne.s32.totalorder %s202, %s204
      %p208 = scmp.eq.s32.totalorder %s21, 0
      %p209 = por %p207, %p208
      %p210 = scmp.ne.s32.totalorder %s202, %s204
      %p211 = scmp.eq.s32.totalorder %s26, 1
      %p212 = por %p210, %p211
      %p213 = scmp.ne.s32.totalorder %s204, %s205
      %p214 = scmp.eq.s32.totalorder %s26, 0
      %p215 = por %p213, %p214
      %p216 = scmp.ne.s32.totalorder %s204, %s205
      %p217 = scmp.eq.s32.totalorder %s27, 1
      %p218 = por %p216, %p217
      %p220 = scmp.ne.s32.totalorder %s205, %s219
      %p221 = scmp.eq.s32.totalorder %s27, 0
      %p222 = por %p220, %p221
      %s224 = sadd.s32 %s223, 1
      %p227 = scmp.eq.s32.totalorder %s21, 1
      %p228 = scmp.ne.s32.totalorder %s223, %s225
      %p229 = scmp.eq.s32.totalorder %s21, 0
      %p230 = por %p228, %p229
      %p231 = scmp.ne.s32.totalorder %s223, %s225
      %p232 = scmp.eq.s32.totalorder %s26, 1
      %p233 = por %p231, %p232
      %p234 = scmp.ne.s32.totalorder %s225, %s226
      %p235 = scmp.eq.s32.totalorder %s26, 0
      %p236 = por %p234, %p235
      %p237 = scmp.ne.s32.totalorder %s225, %s226
      %p238 = scmp.eq.s32.totalorder %s27, 1
      %p239 = por %p237, %p238
      %p241 = scmp.ne.s32.totalorder %s226, %s240
      %p242 = scmp.eq.s32.totalorder %s27, 0
      %p243 = por %p241, %p242
      %s245 = sadd.s32 %s244, 1
      %p248 = scmp.eq.s32.totalorder %s21, 1
      %p249 = scmp.ne.s32.totalorder %s244, %s246
      %p250 = scmp.eq.s32.totalorder %s21, 0
      %p251 = por %p249, %p250
      %p252 = scmp.ne.s32.totalorder %s244, %s246
      %p253 = scmp.eq.s32.totalorder %s26, 1
      %p254 = por %p252, %p253
      %p255 = scmp.ne.s32.totalorder %s246, %s247
      %p256 = scmp.eq.s32.totalorder %s26, 0
      %p257 = por %p255, %p256
      %p258 = scmp.ne.s32.totalorder %s246, %s247
      %p259 = scmp.eq.s32.totalorder %s27, 1
      %p260 = por %p258, %p259
      %p262 = scmp.ne.s32.totalorder %s247, %s261
      %p263 = scmp.eq.s32.totalorder %s27, 0
      %p264 = por %p262, %p263
      %s265 = ssub.s32 %s21, %s28
      %p266 = scmp.eq.s32.totalorder %s265, 0
      %s268 = sadd.s32 %s267, 1
      %s269 = scalar_select %p266, %s267, %s268
      %p272 = pneg %p266
      %p273 = scmp.eq.s32.totalorder %s21, 1
      %p274 = por %p272, %p273
      %p275 = scmp.ne.s32.totalorder %s267, %s270
      %p276 = scmp.eq.s32.totalorder %s21, 0
      %p277 = por %p275, %p276
      %p278 = scmp.ne.s32.totalorder %s267, %s270
      %p279 = scmp.eq.s32.totalorder %s26, 1
      %p280 = por %p278, %p279
      %p281 = scmp.ne.s32.totalorder %s270, %s271
      %p282 = scmp.eq.s32.totalorder %s26, 0
      %p283 = por %p281, %p282
      %p284 = scmp.ne.s32.totalorder %s270, %s271
      %p285 = scmp.eq.s32.totalorder %s27, 1
      %p286 = por %p284, %p285
      %p288 = scmp.ne.s32.totalorder %s271, %s287
      %p289 = scmp.eq.s32.totalorder %s27, 0
      %p290 = por %p288, %p289
      %p291 = scmp.le.s32.totalorder 1, %s21
      %p292 = scmp.lt.s32.totalorder %s21, 3
      %p293 = pnand %p291, %p292
      %p294 = pneg %p293
      // Predicated region
      $region9: #{tpu_custom_call.1} parent=5 // pred_check
        _
      $region10: #{tpu_custom_call.1} parent=5 // pred_check_branch
        %296 = sbr.rel (%p293) target = $region12
      $region11: #{tpu_custom_call.1} parent=5 // pred_region
        %s297 = ssub.s32 %s21, 1
        // Predicated region
        $region13: #{tpu_custom_call.1} parent=11 // pred_check
          %p298 = pneg %p68
        $region14: #{tpu_custom_call.1} parent=11 // pred_check_branch
          %300 = sbr.rel (%p298) target = $region16
        $region15: #{tpu_custom_call.1} parent=11 // pred_region
          _
        $region16: #{tpu_custom_call.1} parent=11 // pred_fallthru
          _
        // Predicated region
        $region17: #{tpu_custom_call.1} parent=11 // pred_check
          %p301 = pneg %p89
        $region18: #{tpu_custom_call.1} parent=11 // pred_check_branch
          %303 = sbr.rel (%p301) target = $region20
        $region19: #{tpu_custom_call.1} parent=11 // pred_region
          _
        $region20: #{tpu_custom_call.1} parent=11 // pred_fallthru
          _
        // Predicated region
        $region21: #{tpu_custom_call.1} parent=11 // pred_check
          %p304 = pneg %p110
        $region22: #{tpu_custom_call.1} parent=11 // pred_check_branch
          %306 = sbr.rel (%p304) target = $region24
        $region23: #{tpu_custom_call.1} parent=11 // pred_region
          _
        $region24: #{tpu_custom_call.1} parent=11 // pred_fallthru
          _
        // Predicated region
        $region25: #{tpu_custom_call.1} parent=11 // pred_check
          %p307 = pneg %p131
        $region26: #{tpu_custom_call.1} parent=11 // pred_check_branch
          %309 = sbr.rel (%p307) target = $region28
        $region27: #{tpu_custom_call.1} parent=11 // pred_region
          _
        $region28: #{tpu_custom_call.1} parent=11 // pred_fallthru
          _
        // Predicated region
        $region29: #{tpu_custom_call.1} parent=11 // pred_check
          %p310 = pneg %p152
        $region30: #{tpu_custom_call.1} parent=11 // pred_check_branch
          %312 = sbr.rel (%p310) target = $region32
        $region31: #{tpu_custom_call.1} parent=11 // pred_region
          _
        $region32: #{tpu_custom_call.1} parent=11 // pred_fallthru
          _
        // Predicated region
        $region33: #{tpu_custom_call.1} parent=11 // pred_check
          %p313 = pneg %p173
        $region34: #{tpu_custom_call.1} parent=11 // pred_check_branch
          %315 = sbr.rel (%p313) target = $region36
        $region35: #{tpu_custom_call.1} parent=11 // pred_region
          _
        $region36: #{tpu_custom_call.1} parent=11 // pred_fallthru
          _
        // Predicated region
        $region37: #{tpu_custom_call.1} parent=11 // pred_check
          %p316 = pneg %p194
        $region38: #{tpu_custom_call.1} parent=11 // pred_check_branch
          %318 = sbr.rel (%p316) target = $region40
        $region39: #{tpu_custom_call.1} parent=11 // pred_region
          _
        $region40: #{tpu_custom_call.1} parent=11 // pred_fallthru
          _
        // Predicated region
        $region41: #{tpu_custom_call.1} parent=11 // pred_check
          %p319 = pneg %p215
        $region42: #{tpu_custom_call.1} parent=11 // pred_check_branch
          %321 = sbr.rel (%p319) target = $region44
        $region43: #{tpu_custom_call.1} parent=11 // pred_region
          _
        $region44: #{tpu_custom_call.1} parent=11 // pred_fallthru
          _
        // Predicated region
        $region45: #{tpu_custom_call.1} parent=11 // pred_check
          %p322 = pneg %p236
        $region46: #{tpu_custom_call.1} parent=11 // pred_check_branch
          %324 = sbr.rel (%p322) target = $region48
        $region47: #{tpu_custom_call.1} parent=11 // pred_region
          _
        $region48: #{tpu_custom_call.1} parent=11 // pred_fallthru
          _
        // Predicated region
        $region49: #{tpu_custom_call.1} parent=11 // pred_check
          %p325 = pneg %p257
        $region50: #{tpu_custom_call.1} parent=11 // pred_check_branch
          %327 = sbr.rel (%p325) target = $region52
        $region51: #{tpu_custom_call.1} parent=11 // pred_region
          %s329 = ssub.s32 2048, 2048
          %330 = vsyncadd [#allocation3], %s329
          %s331 = sshll.u32 [#allocation2], 4
          %s332 = int_to_ptr.vmem [resolvable:$true] %s331
          %337 = dma.hbm_to_vmem [thread:$0]  %s10, 2048, %s332, [#allocation3], 128, 128, 8
        $region52: #{tpu_custom_call.1} parent=11 // pred_fallthru
          _
      $region12: #{tpu_custom_call.1} parent=5 // pred_fallthru
        _
      %p338 = scmp.lt.s32.totalorder %s21, 2
      // Predicated region
      $region53: #{tpu_custom_call.1} parent=5 // pred_check
        %p339 = pneg %p338
      $region54: #{tpu_custom_call.1} parent=5 // pred_check_branch
        %341 = sbr.rel (%p339) target = $region56
      $region55: #{tpu_custom_call.1} parent=5 // pred_region
        // Predicated region
        $region57: #{tpu_custom_call.1} parent=55 // pred_check
          %p342 = pneg %p41
        $region58: #{tpu_custom_call.1} parent=55 // pred_check_branch
          %344 = sbr.rel (%p342) target = $region60
        $region59: #{tpu_custom_call.1} parent=55 // pred_region
          %p345 = scmp.lt.s32.totalorder %s21, 1
          %s346 = scalar_select %p345, %s21, 1
          %s347 = smul.addr %s346, 32
          %s348 = smul.addr %s347, 8
          %s349 = scalar_lea.vmem %s0, %s348
        $region60: #{tpu_custom_call.1} parent=55 // pred_fallthru
          _
      $region56: #{tpu_custom_call.1} parent=5 // pred_fallthru
        _
      %p350 = scmp.le.s32.totalorder 1, %s21
      %p351 = scmp.lt.s32.totalorder %s21, 3
      %p352 = pnand %p350, %p351
      %p353 = pneg %p352
      // Predicated region
      $region61: #{tpu_custom_call.1} parent=5 // pred_check
        _
      $region62: #{tpu_custom_call.1} parent=5 // pred_check_branch
        %355 = sbr.rel (%p352) target = $region64
      $region63: #{tpu_custom_call.1} parent=5 // pred_region
        %s356 = ssub.s32 %s21, 1
        // Predicated region
        $region65: #{tpu_custom_call.1} parent=63 // pred_check
          %p357 = pneg %p257
        $region66: #{tpu_custom_call.1} parent=63 // pred_check_branch
          %359 = sbr.rel (%p357) target = $region68
        $region67: #{tpu_custom_call.1} parent=63 // pred_region
          %360 = dma.done [#allocation3], 2048
        $region68: #{tpu_custom_call.1} parent=63 // pred_fallthru
          _
        %p361 = scmp.lt.s32.totalorder %s26, 1
        %s362 = scalar_select %p361, %s26, 1
        %s363 = smul.addr %s362, 32
        %s364 = smul.addr %s363, 8
        %s365 = scalar_lea.vmem %s0, %s364
        %p366 = pneg %p47
        %p367 = pneg %p44
        %p368 = pneg %p68
        %p369 = pneg %p65
        %p370 = pneg %p89
        %p371 = pneg %p86
        %p372 = pneg %p110
        %p373 = pneg %p107
        %p374 = pneg %p131
        %p375 = pneg %p128
        %p376 = pneg %p152
        %p377 = pneg %p149
        %p378 = pneg %p173
        %p379 = pneg %p170
        %p380 = pneg %p194
        %p381 = pneg %p191
        %p382 = pneg %p215
        %p383 = pneg %p212
        %p384 = pneg %p236
        %p385 = pneg %p233
        %p386 = pneg %p257
        %p387 = pneg %p254
        %p388 = pneg %p283
        %p389 = pneg %p280
        %s390 = sand.u32 %s270, 1
        %s391 = scalar_lea.sflag [#allocation4], %s390
        %s392 = sand.u32 %s270, 1
        %s393 = smul.addr %s392, 256
        %s394 = scalar_lea.vmem [#allocation5], %s393
        %p395 = scmp.lt.s32.totalorder %s26, 1
        %s396 = scalar_select %p395, %s26, 1
        %s397 = smul.addr %s396, 32
        %s398 = smul.addr %s397, 8
        %s399 = scalar_lea.vmem %s0, %s398
        %v400 = vld [vmem:[%s399] sm:$0xff]
        %v401 = vld [vmem:[%s399 + $0x8] sm:$0xff]
        %v402 = vld [vmem:[%s399 + $0x10] sm:$0xff]
        %v403 = vld [vmem:[%s399 + $0x18] sm:$0xff]
        %v404 = vld [vmem:[%s399 + $0x20] sm:$0xff]
        %v405 = vld [vmem:[%s399 + $0x28] sm:$0xff]
        %v406 = vld [vmem:[%s399 + $0x30] sm:$0xff]
        %v407 = vld [vmem:[%s399 + $0x38] sm:$0xff]
        %v408 = vld [vmem:[%s399 + $0x40] sm:$0xff]
        %v409 = vld [vmem:[%s399 + $0x48] sm:$0xff]
        %v410 = vld [vmem:[%s399 + $0x50] sm:$0xff]
        %v411 = vld [vmem:[%s399 + $0x58] sm:$0xff]
        %v412 = vld [vmem:[%s399 + $0x60] sm:$0xff]
        %v413 = vld [vmem:[%s399 + $0x68] sm:$0xff]
        %v414 = vld [vmem:[%s399 + $0x70] sm:$0xff]
        %v415 = vld [vmem:[%s399 + $0x78] sm:$0xff]
        %v416 = vld [vmem:[%s399 + $0x80] sm:$0xff]
        %v417 = vld [vmem:[%s399 + $0x88] sm:$0xff]
        %v418 = vld [vmem:[%s399 + $0x90] sm:$0xff]
        %v419 = vld [vmem:[%s399 + $0x98] sm:$0xff]
        %v420 = vld [vmem:[%s399 + $0xa0] sm:$0xff]
        %v421 = vld [vmem:[%s399 + $0xa8] sm:$0xff]
        %v422 = vld [vmem:[%s399 + $0xb0] sm:$0xff]
        %v423 = vld [vmem:[%s399 + $0xb8] sm:$0xff]
        %v424 = vld [vmem:[%s399 + $0xc0] sm:$0xff]
        %v425 = vld [vmem:[%s399 + $0xc8] sm:$0xff]
        %v426 = vld [vmem:[%s399 + $0xd0] sm:$0xff]
        %v427 = vld [vmem:[%s399 + $0xd8] sm:$0xff]
        %v428 = vld [vmem:[%s399 + $0xe0] sm:$0xff]
        %v429 = vld [vmem:[%s399 + $0xe8] sm:$0xff]
        %v430 = vld [vmem:[%s399 + $0xf0] sm:$0xff]
        %v431 = vld [vmem:[%s399 + $0xf8] sm:$0xff]
        %v432 = vld [vmem:[%s1] sm:$0xff]
        %v433 = vld [vmem:[%s1 + $0x8] sm:$0xff]
        %v434 = vld [vmem:[%s1 + $0x10] sm:$0xff]
        %v435 = vld [vmem:[%s1 + $0x18] sm:$0xff]
        %v436 = vld [vmem:[%s1 + $0x20] sm:$0xff]
        %v437 = vld [vmem:[%s1 + $0x28] sm:$0xff]
        %v438 = vld [vmem:[%s1 + $0x30] sm:$0xff]
        %v439 = vld [vmem:[%s1 + $0x38] sm:$0xff]
        %v440 = vld [vmem:[%s1 + $0x40] sm:$0xff]
        %v441 = vld [vmem:[%s1 + $0x48] sm:$0xff]
        %v442 = vld [vmem:[%s1 + $0x50] sm:$0xff]
        %v443 = vld [vmem:[%s1 + $0x58] sm:$0xff]
        %v444 = vld [vmem:[%s1 + $0x60] sm:$0xff]
        %v445 = vld [vmem:[%s1 + $0x68] sm:$0xff]
        %v446 = vld [vmem:[%s1 + $0x70] sm:$0xff]
        %v447 = vld [vmem:[%s1 + $0x78] sm:$0xff]
        %448 = vmatprep.subr.mxu0 0.0
        %449 = vmatpush1.msra.mxu0 %v447
        %450 = vmatprep.subr.mxu0 0.0
        %451 = vmatpush1.msra.mxu0 %v446
        %452 = vmatprep.subr.mxu0 0.0
        %453 = vmatpush1.msra.mxu0 %v445
        %454 = vmatprep.subr.mxu0 0.0
        %455 = vmatpush1.msra.mxu0 %v444
        %456 = vmatprep.subr.mxu0 0.0
        %457 = vmatpush1.msra.mxu0 %v443
        %458 = vmatprep.subr.mxu0 0.0
        %459 = vmatpush1.msra.mxu0 %v442
        %460 = vmatprep.subr.mxu0 0.0
        %461 = vmatpush1.msra.mxu0 %v441
        %462 = vmatprep.subr.mxu0 0.0
        %463 = vmatpush1.msra.mxu0 %v440
        %464 = vmatprep.subr.mxu0 0.0
        %465 = vmatpush1.msra.mxu0 %v439
        %466 = vmatprep.subr.mxu0 0.0
        %467 = vmatpush1.msra.mxu0 %v438
        %468 = vmatprep.subr.mxu0 0.0
        %469 = vmatpush1.msra.mxu0 %v437
        %470 = vmatprep.subr.mxu0 0.0
        %471 = vmatpush1.msra.mxu0 %v436
        %472 = vmatprep.subr.mxu0 0.0
        %473 = vmatpush1.msra.mxu0 %v435
        %474 = vmatprep.subr.mxu0 0.0
        %475 = vmatpush1.msra.mxu0 %v434
        %476 = vmatprep.subr.mxu0 0.0
        %477 = vmatpush1.msra.mxu0 %v433
        %478 = vmatprep.subr.mxu0 0.0
        %479 = vmatpush1.msra.mxu0 %v432
        %480 = vmatprep.subr.mxu0 0.0
        %481 = vmatpush2.msra.mxu0 0.0
        %482 = vmatprep.subr.mxu0 0.0
        %483 = vmatpush2.msra.mxu0 0.0
        %484 = vmatprep.subr.mxu0 0.0
        %485 = vmatpush2.msra.mxu0 0.0
        %486 = vmatprep.subr.mxu0 0.0
        %487 = vmatpush2.msra.mxu0 0.0
        %488 = vmatprep.subr.mxu0 0.0
        %489 = vmatpush2.msra.mxu0 0.0
        %490 = vmatprep.subr.mxu0 0.0
        %491 = vmatpush2.msra.mxu0 0.0
        %492 = vmatprep.subr.mxu0 0.0
        %493 = vmatpush2.msra.mxu0 0.0
        %494 = vmatprep.subr.mxu0 0.0
        %495 = vmatpush2.msra.mxu0 0.0
        %496 = vmatprep.subr.mxu0 0.0
        %497 = vmatpush2.msra.mxu0 0.0
        %498 = vmatprep.subr.mxu0 0.0
        %499 = vmatpush2.msra.mxu0 0.0
        %500 = vmatprep.subr.mxu0 0.0
        %501 = vmatpush2.msra.mxu0 0.0
        %502 = vmatprep.subr.mxu0 0.0
        %503 = vmatpush2.msra.mxu0 0.0
        %504 = vmatprep.subr.mxu0 0.0
        %505 = vmatpush2.msra.mxu0 0.0
        %506 = vmatprep.subr.mxu0 0.0
        %507 = vmatpush2.msra.mxu0 0.0
        %508 = vmatprep.subr.mxu0 0.0
        %509 = vmatpush2.msra.mxu0 0.0
        %510 = vmatprep.subr.mxu0 0.0
        %511 = vmatpush2.msra.mxu0 0.0
        %512 = vmatprep.mubr.f32.mxu0 0.0
        %513 = vmatmul.mubr.f32.gmra.mxu0 %v400
        %v514 = vpop.f32.mrf.mxu0
        %v515 = vadd.f32 0.0, %v514
        %v516 = vpop.f32.mrf.mxu0
        %517 = vmatprep.mubr.f32.mxu0 0.0
        %518 = vmatmul.mubr.f32.gmra.mxu0 %v401
        %v519 = vpop.f32.mrf.mxu0
        %v520 = vadd.f32 0.0, %v519
        %v521 = vpop.f32.mrf.mxu0
        %522 = vmatprep.mubr.f32.mxu0 0.0
        %523 = vmatmul.mubr.f32.gmra.mxu0 %v402
        %v524 = vpop.f32.mrf.mxu0
        %v525 = vadd.f32 0.0, %v524
        %v526 = vpop.f32.mrf.mxu0
        %527 = vmatprep.mubr.f32.mxu0 0.0
        %528 = vmatmul.mubr.f32.gmra.mxu0 %v403
        %v529 = vpop.f32.mrf.mxu0
        %v530 = vadd.f32 0.0, %v529
        %v531 = vpop.f32.mrf.mxu0
        %532 = vmatprep.mubr.f32.mxu0 0.0
        %533 = vmatmul.mubr.f32.gmra.mxu0 %v404
        %v534 = vpop.f32.mrf.mxu0
        %v535 = vadd.f32 0.0, %v534
        %v536 = vpop.f32.mrf.mxu0
        %537 = vmatprep.mubr.f32.mxu0 0.0
        %538 = vmatmul.mubr.f32.gmra.mxu0 %v405
        %v539 = vpop.f32.mrf.mxu0
        %v540 = vadd.f32 0.0, %v539
        %v541 = vpop.f32.mrf.mxu0
        %542 = vmatprep.mubr.f32.mxu0 0.0
        %543 = vmatmul.mubr.f32.gmra.mxu0 %v406
        %v544 = vpop.f32.mrf.mxu0
        %v545 = vadd.f32 0.0, %v544
        %v546 = vpop.f32.mrf.mxu0
        %547 = vmatprep.mubr.f32.mxu0 0.0
        %548 = vmatmul.mubr.f32.gmra.mxu0 %v407
        %v549 = vpop.f32.mrf.mxu0
        %v550 = vadd.f32 0.0, %v549
        %v551 = vpop.f32.mrf.mxu0
        %552 = vmatprep.mubr.f32.mxu0 0.0
        %553 = vmatmul.mubr.f32.gmra.mxu0 %v408
        %v554 = vpop.f32.mrf.mxu0
        %v555 = vadd.f32 0.0, %v554
        %v556 = vpop.f32.mrf.mxu0
        %557 = vmatprep.mubr.f32.mxu0 0.0
        %558 = vmatmul.mubr.f32.gmra.mxu0 %v409
        %v559 = vpop.f32.mrf.mxu0
        %v560 = vadd.f32 0.0, %v559
        %v561 = vpop.f32.mrf.mxu0
        %562 = vmatprep.mubr.f32.mxu0 0.0
        %563 = vmatmul.mubr.f32.gmra.mxu0 %v410
        %v564 = vpop.f32.mrf.mxu0
        %v565 = vadd.f32 0.0, %v564
        %v566 = vpop.f32.mrf.mxu0
        %567 = vmatprep.mubr.f32.mxu0 0.0
        %568 = vmatmul.mubr.f32.gmra.mxu0 %v411
        %v569 = vpop.f32.mrf.mxu0
        %v570 = vadd.f32 0.0, %v569
        %v571 = vpop.f32.mrf.mxu0
        %572 = vmatprep.mubr.f32.mxu0 0.0
        %573 = vmatmul.mubr.f32.gmra.mxu0 %v412
        %v574 = vpop.f32.mrf.mxu0
        %v575 = vadd.f32 0.0, %v574
        %v576 = vpop.f32.mrf.mxu0
        %577 = vmatprep.mubr.f32.mxu0 0.0
        %578 = vmatmul.mubr.f32.gmra.mxu0 %v413
        %v579 = vpop.f32.mrf.mxu0
        %v580 = vadd.f32 0.0, %v579
        %v581 = vpop.f32.mrf.mxu0
        %582 = vmatprep.mubr.f32.mxu0 0.0
        %583 = vmatmul.mubr.f32.gmra.mxu0 %v414
        %v584 = vpop.f32.mrf.mxu0
        %v585 = vadd.f32 0.0, %v584
        %v586 = vpop.f32.mrf.mxu0
        %587 = vmatprep.mubr.f32.mxu0 0.0
        %588 = vmatmul.mubr.f32.gmra.mxu0 %v415
        %v589 = vpop.f32.mrf.mxu0
        %v590 = vadd.f32 0.0, %v589
        %v591 = vpop.f32.mrf.mxu0
        %592 = vmatprep.mubr.f32.mxu0 0.0
        %593 = vmatmul.mubr.f32.gmra.mxu0 %v416
        %v594 = vpop.f32.mrf.mxu0
        %v595 = vadd.f32 0.0, %v594
        %v596 = vpop.f32.mrf.mxu0
        %597 = vmatprep.mubr.f32.mxu0 0.0
        %598 = vmatmul.mubr.f32.gmra.mxu0 %v417
        %v599 = vpop.f32.mrf.mxu0
        %v600 = vadd.f32 0.0, %v599
        %v601 = vpop.f32.mrf.mxu0
        %602 = vmatprep.mubr.f32.mxu0 0.0
        %603 = vmatmul.mubr.f32.gmra.mxu0 %v418
        %v604 = vpop.f32.mrf.mxu0
        %v605 = vadd.f32 0.0, %v604
        %v606 = vpop.f32.mrf.mxu0
        %607 = vmatprep.mubr.f32.mxu0 0.0
        %608 = vmatmul.mubr.f32.gmra.mxu0 %v419
        %v609 = vpop.f32.mrf.mxu0
        %v610 = vadd.f32 0.0, %v609
        %v611 = vpop.f32.mrf.mxu0
        %612 = vmatprep.mubr.f32.mxu0 0.0
        %613 = vmatmul.mubr.f32.gmra.mxu0 %v420
        %v614 = vpop.f32.mrf.mxu0
        %v615 = vadd.f32 0.0, %v614
        %v616 = vpop.f32.mrf.mxu0
        %617 = vmatprep.mubr.f32.mxu0 0.0
        %618 = vmatmul.mubr.f32.gmra.mxu0 %v421
        %v619 = vpop.f32.mrf.mxu0
        %v620 = vadd.f32 0.0, %v619
        %v621 = vpop.f32.mrf.mxu0
        %622 = vmatprep.mubr.f32.mxu0 0.0
        %623 = vmatmul.mubr.f32.gmra.mxu0 %v422
        %v624 = vpop.f32.mrf.mxu0
        %v625 = vadd.f32 0.0, %v624
        %v626 = vpop.f32.mrf.mxu0
        %627 = vmatprep.mubr.f32.mxu0 0.0
        %628 = vmatmul.mubr.f32.gmra.mxu0 %v423
        %v629 = vpop.f32.mrf.mxu0
        %v630 = vadd.f32 0.0, %v629
        %v631 = vpop.f32.mrf.mxu0
        %632 = vmatprep.mubr.f32.mxu0 0.0
        %633 = vmatmul.mubr.f32.gmra.mxu0 %v424
        %v634 = vpop.f32.mrf.mxu0
        %v635 = vadd.f32 0.0, %v634
        %v636 = vpop.f32.mrf.mxu0
        %637 = vmatprep.mubr.f32.mxu0 0.0
        %638 = vmatmul.mubr.f32.gmra.mxu0 %v425
        %v639 = vpop.f32.mrf.mxu0
        %v640 = vadd.f32 0.0, %v639
        %v641 = vpop.f32.mrf.mxu0
        %642 = vmatprep.mubr.f32.mxu0 0.0
        %643 = vmatmul.mubr.f32.gmra.mxu0 %v426
        %v644 = vpop.f32.mrf.mxu0
        %v645 = vadd.f32 0.0, %v644
        %v646 = vpop.f32.mrf.mxu0
        %647 = vmatprep.mubr.f32.mxu0 0.0
        %648 = vmatmul.mubr.f32.gmra.mxu0 %v427
        %v649 = vpop.f32.mrf.mxu0
        %v650 = vadd.f32 0.0, %v649
        %v651 = vpop.f32.mrf.mxu0
        %652 = vmatprep.mubr.f32.mxu0 0.0
        %653 = vmatmul.mubr.f32.gmra.mxu0 %v428
        %v654 = vpop.f32.mrf.mxu0
        %v655 = vadd.f32 0.0, %v654
        %v656 = vpop.f32.mrf.mxu0
        %657 = vmatprep.mubr.f32.mxu0 0.0
        %658 = vmatmul.mubr.f32.gmra.mxu0 %v429
        %v659 = vpop.f32.mrf.mxu0
        %v660 = vadd.f32 0.0, %v659
        %v661 = vpop.f32.mrf.mxu0
        %662 = vmatprep.mubr.f32.mxu0 0.0
        %663 = vmatmul.mubr.f32.gmra.mxu0 %v430
        %v664 = vpop.f32.mrf.mxu0
        %v665 = vadd.f32 0.0, %v664
        %v666 = vpop.f32.mrf.mxu0
        %667 = vmatprep.mubr.f32.mxu0 0.0
        %668 = vmatmul.mubr.f32.gmra.mxu0 %v431
        %v669 = vpop.f32.mrf.mxu0
        %v670 = vadd.f32 0.0, %v669
        %v671 = vpop.f32.mrf.mxu0
        %672 = vdwg.mxu0
        %vm673 = vcmask 261120
        %v674 = vsel %vm673, %v515, 0.0
        %v675 = vsel %vm673, %v520, 0.0
        %v676 = vadd.f32 %v674, %v675
        %v677 = vsel %vm673, %v525, 0.0
        %v678 = vadd.f32 %v676, %v677
        %v679 = vsel %vm673, %v530, 0.0
        %v680 = vadd.f32 %v678, %v679
        %v681 = vsel %vm673, %v535, 0.0
        %v682 = vadd.f32 %v680, %v681
        %v683 = vsel %vm673, %v540, 0.0
        %v684 = vadd.f32 %v682, %v683
        %v685 = vsel %vm673, %v545, 0.0
        %v686 = vadd.f32 %v684, %v685
        %v687 = vsel %vm673, %v550, 0.0
        %v688 = vadd.f32 %v686, %v687
        %v689 = vsel %vm673, %v555, 0.0
        %v690 = vadd.f32 %v688, %v689
        %v691 = vsel %vm673, %v560, 0.0
        %v692 = vadd.f32 %v690, %v691
        %v693 = vsel %vm673, %v565, 0.0
        %v694 = vadd.f32 %v692, %v693
        %v695 = vsel %vm673, %v570, 0.0
        %v696 = vadd.f32 %v694, %v695
        %v697 = vsel %vm673, %v575, 0.0
        %v698 = vadd.f32 %v696, %v697
        %v699 = vsel %vm673, %v580, 0.0
        %v700 = vadd.f32 %v698, %v699
        %v701 = vsel %vm673, %v585, 0.0
        %v702 = vadd.f32 %v700, %v701
        %v703 = vsel %vm673, %v590, 0.0
        %v704 = vadd.f32 %v702, %v703
        %v705 = vsel %vm673, %v595, 0.0
        %v706 = vadd.f32 %v704, %v705
        %v707 = vsel %vm673, %v600, 0.0
        %v708 = vadd.f32 %v706, %v707
        %v709 = vsel %vm673, %v605, 0.0
        %v710 = vadd.f32 %v708, %v709
        %v711 = vsel %vm673, %v610, 0.0
        %v712 = vadd.f32 %v710, %v711
        %v713 = vsel %vm673, %v615, 0.0
        %v714 = vadd.f32 %v712, %v713
        %v715 = vsel %vm673, %v620, 0.0
        %v716 = vadd.f32 %v714, %v715
        %v717 = vsel %vm673, %v625, 0.0
        %v718 = vadd.f32 %v716, %v717
        %v719 = vsel %vm673, %v630, 0.0
        %v720 = vadd.f32 %v718, %v719
        %v721 = vsel %vm673, %v635, 0.0
        %v722 = vadd.f32 %v720, %v721
        %v723 = vsel %vm673, %v640, 0.0
        %v724 = vadd.f32 %v722, %v723
        %v725 = vsel %vm673, %v645, 0.0
        %v726 = vadd.f32 %v724, %v725
        %v727 = vsel %vm673, %v650, 0.0
        %v728 = vadd.f32 %v726, %v727
        %v729 = vsel %vm673, %v655, 0.0
        %v730 = vadd.f32 %v728, %v729
        %v731 = vsel %vm673, %v660, 0.0
        %v732 = vadd.f32 %v730, %v731
        %v733 = vsel %vm673, %v665, 0.0
        %v734 = vadd.f32 %v732, %v733
        %v735 = vsel %vm673, %v670, 0.0
        %v736 = vadd.f32 %v734, %v735
        %v737 = vrot.slane %v736, 4
        %v738 = vadd.f32 %v736, %v737
        %v739 = vrot.slane %v738, 2
        %v740 = vadd.f32 %v738, %v739
        %v741 = vrot.slane %v740, 1
        %v742 = vadd.f32 %v740, %v741
        %v743 = vmul.f32 %v742, 0.00390625
        %v744 = vsub.f32 %v515, %v743
        %v745 = vsub.f32 %v520, %v743
        %v746 = vsub.f32 %v525, %v743
        %v747 = vsub.f32 %v530, %v743
        %v748 = vsub.f32 %v535, %v743
        %v749 = vsub.f32 %v540, %v743
        %v750 = vsub.f32 %v545, %v743
        %v751 = vsub.f32 %v550, %v743
        %v752 = vsub.f32 %v555, %v743
        %v753 = vsub.f32 %v560, %v743
        %v754 = vsub.f32 %v565, %v743
        %v755 = vsub.f32 %v570, %v743
        %v756 = vsub.f32 %v575, %v743
        %v757 = vsub.f32 %v580, %v743
        %v758 = vsub.f32 %v585, %v743
        %v759 = vsub.f32 %v590, %v743
        %v760 = vsub.f32 %v595, %v743
        %v761 = vsub.f32 %v600, %v743
        %v762 = vsub.f32 %v605, %v743
        %v763 = vsub.f32 %v610, %v743
        %v764 = vsub.f32 %v615, %v743
        %v765 = vsub.f32 %v620, %v743
        %v766 = vsub.f32 %v625, %v743
        %v767 = vsub.f32 %v630, %v743
        %v768 = vsub.f32 %v635, %v743
        %v769 = vsub.f32 %v640, %v743
        %v770 = vsub.f32 %v645, %v743
        %v771 = vsub.f32 %v650, %v743
        %v772 = vsub.f32 %v655, %v743
        %v773 = vsub.f32 %v660, %v743
        %v774 = vsub.f32 %v665, %v743
        %v775 = vsub.f32 %v670, %v743
        %v776 = vmul.f32 %v744, %v744
        %v777 = vmul.f32 %v745, %v745
        %v778 = vmul.f32 %v746, %v746
        %v779 = vmul.f32 %v747, %v747
        %v780 = vmul.f32 %v748, %v748
        %v781 = vmul.f32 %v749, %v749
        %v782 = vmul.f32 %v750, %v750
        %v783 = vmul.f32 %v751, %v751
        %v784 = vmul.f32 %v752, %v752
        %v785 = vmul.f32 %v753, %v753
        %v786 = vmul.f32 %v754, %v754
        %v787 = vmul.f32 %v755, %v755
        %v788 = vmul.f32 %v756, %v756
        %v789 = vmul.f32 %v757, %v757
        %v790 = vmul.f32 %v758, %v758
        %v791 = vmul.f32 %v759, %v759
        %v792 = vmul.f32 %v760, %v760
        %v793 = vmul.f32 %v761, %v761
        %v794 = vmul.f32 %v762, %v762
        %v795 = vmul.f32 %v763, %v763
        %v796 = vmul.f32 %v764, %v764
        %v797 = vmul.f32 %v765, %v765
        %v798 = vmul.f32 %v766, %v766
        %v799 = vmul.f32 %v767, %v767
        %v800 = vmul.f32 %v768, %v768
        %v801 = vmul.f32 %v769, %v769
        %v802 = vmul.f32 %v770, %v770
        %v803 = vmul.f32 %v771, %v771
        %v804 = vmul.f32 %v772, %v772
        %v805 = vmul.f32 %v773, %v773
        %v806 = vmul.f32 %v774, %v774
        %v807 = vmul.f32 %v775, %v775
        %v808 = vsel %vm673, %v776, 0.0
        %v809 = vsel %vm673, %v777, 0.0
        %v810 = vadd.f32 %v808, %v809
        %v811 = vsel %vm673, %v778, 0.0
        %v812 = vadd.f32 %v810, %v811
        %v813 = vsel %vm673, %v779, 0.0
        %v814 = vadd.f32 %v812, %v813
        %v815 = vsel %vm673, %v780, 0.0
        %v816 = vadd.f32 %v814, %v815
        %v817 = vsel %vm673, %v781, 0.0
        %v818 = vadd.f32 %v816, %v817
        %v819 = vsel %vm673, %v782, 0.0
        %v820 = vadd.f32 %v818, %v819
        %v821 = vsel %vm673, %v783, 0.0
        %v822 = vadd.f32 %v820, %v821
        %v823 = vsel %vm673, %v784, 0.0
        %v824 = vadd.f32 %v822, %v823
        %v825 = vsel %vm673, %v785, 0.0
        %v826 = vadd.f32 %v824, %v825
        %v827 = vsel %vm673, %v786, 0.0
        %v828 = vadd.f32 %v826, %v827
        %v829 = vsel %vm673, %v787, 0.0
        %v830 = vadd.f32 %v828, %v829
        %v831 = vsel %vm673, %v788, 0.0
        %v832 = vadd.f32 %v830, %v831
        %v833 = vsel %vm673, %v789, 0.0
        %v834 = vadd.f32 %v832, %v833
        %v835 = vsel %vm673, %v790, 0.0
        %v836 = vadd.f32 %v834, %v835
        %v837 = vsel %vm673, %v791, 0.0
        %v838 = vadd.f32 %v836, %v837
        %v839 = vsel %vm673, %v792, 0.0
        %v840 = vadd.f32 %v838, %v839
        %v841 = vsel %vm673, %v793, 0.0
        %v842 = vadd.f32 %v840, %v841
        %v843 = vsel %vm673, %v794, 0.0
        %v844 = vadd.f32 %v842, %v843
        %v845 = vsel %vm673, %v795, 0.0
        %v846 = vadd.f32 %v844, %v845
        %v847 = vsel %vm673, %v796, 0.0
        %v848 = vadd.f32 %v846, %v847
        %v849 = vsel %vm673, %v797, 0.0
        %v850 = vadd.f32 %v848, %v849
        %v851 = vsel %vm673, %v798, 0.0
        %v852 = vadd.f32 %v850, %v851
        %v853 = vsel %vm673, %v799, 0.0
        %v854 = vadd.f32 %v852, %v853
        %v855 = vsel %vm673, %v800, 0.0
        %v856 = vadd.f32 %v854, %v855
        %v857 = vsel %vm673, %v801, 0.0
        %v858 = vadd.f32 %v856, %v857
        %v859 = vsel %vm673, %v802, 0.0
        %v860 = vadd.f32 %v858, %v859
        %v861 = vsel %vm673, %v803, 0.0
        %v862 = vadd.f32 %v860, %v861
        %v863 = vsel %vm673, %v804, 0.0
        %v864 = vadd.f32 %v862, %v863
        %v865 = vsel %vm673, %v805, 0.0
        %v866 = vadd.f32 %v864, %v865
        %v867 = vsel %vm673, %v806, 0.0
        %v868 = vadd.f32 %v866, %v867
        %v869 = vsel %vm673, %v807, 0.0
        %v870 = vadd.f32 %v868, %v869
        %v871 = vrot.slane %v870, 4
        %v872 = vadd.f32 %v870, %v871
        %v873 = vrot.slane %v872, 2
        %v874 = vadd.f32 %v872, %v873
        %v875 = vrot.slane %v874, 1
        %v876 = vadd.f32 %v874, %v875
        %v877 = vmul.f32 %v876, 0.00390625
        %v878 = vadd.f32 %v877, 1e-05
        %v879 = vrsqrt.pop %v878
        %v880 = vmul.f32 %v744, %v879
        %v881 = vmul.f32 %v745, %v879
        %v882 = vmul.f32 %v746, %v879
        %v883 = vmul.f32 %v747, %v879
        %v884 = vmul.f32 %v748, %v879
        %v885 = vmul.f32 %v749, %v879
        %v886 = vmul.f32 %v750, %v879
        %v887 = vmul.f32 %v751, %v879
        %v888 = vmul.f32 %v752, %v879
        %v889 = vmul.f32 %v753, %v879
        %v890 = vmul.f32 %v754, %v879
        %v891 = vmul.f32 %v755, %v879
        %v892 = vmul.f32 %v756, %v879
        %v893 = vmul.f32 %v757, %v879
        %v894 = vmul.f32 %v758, %v879
        %v895 = vmul.f32 %v759, %v879
        %v896 = vmul.f32 %v760, %v879
        %v897 = vmul.f32 %v761, %v879
        %v898 = vmul.f32 %v762, %v879
        %v899 = vmul.f32 %v763, %v879
        %v900 = vmul.f32 %v764, %v879
        %v901 = vmul.f32 %v765, %v879
        %v902 = vmul.f32 %v766, %v879
        %v903 = vmul.f32 %v767, %v879
        %v904 = vmul.f32 %v768, %v879
        %v905 = vmul.f32 %v769, %v879
        %v906 = vmul.f32 %v770, %v879
        %v907 = vmul.f32 %v771, %v879
        %v908 = vmul.f32 %v772, %v879
        %v909 = vmul.f32 %v773, %v879
        %v910 = vmul.f32 %v774, %v879
        %v911 = vmul.f32 %v775, %v879
        %v912 = vld [vmem:[%s4] sm:$0x1]
        %v914 = vlaneseq
        %v915 = vshrl.u32 %v914, 7
        %v916 = vsub.s32 0, %v915
        %v917 = vrot.slane %v912, %v916
        %v919 = vmul.f32 %v880, %v917
        %v920 = vmul.f32 %v881, %v917
        %v921 = vmul.f32 %v882, %v917
        %v922 = vmul.f32 %v883, %v917
        %v923 = vmul.f32 %v884, %v917
        %v924 = vmul.f32 %v885, %v917
        %v925 = vmul.f32 %v886, %v917
        %v926 = vmul.f32 %v887, %v917
        %v927 = vmul.f32 %v888, %v917
        %v928 = vmul.f32 %v889, %v917
        %v929 = vmul.f32 %v890, %v917
        %v930 = vmul.f32 %v891, %v917
        %v931 = vmul.f32 %v892, %v917
        %v932 = vmul.f32 %v893, %v917
        %v933 = vmul.f32 %v894, %v917
        %v934 = vmul.f32 %v895, %v917
        %v935 = vmul.f32 %v896, %v917
        %v936 = vmul.f32 %v897, %v917
        %v937 = vmul.f32 %v898, %v917
        %v938 = vmul.f32 %v899, %v917
        %v939 = vmul.f32 %v900, %v917
        %v940 = vmul.f32 %v901, %v917
        %v941 = vmul.f32 %v902, %v917
        %v942 = vmul.f32 %v903, %v917
        %v943 = vmul.f32 %v904, %v917
        %v944 = vmul.f32 %v905, %v917
        %v945 = vmul.f32 %v906, %v917
        %v946 = vmul.f32 %v907, %v917
        %v947 = vmul.f32 %v908, %v917
        %v948 = vmul.f32 %v909, %v917
        %v949 = vmul.f32 %v910, %v917
        %v950 = vmul.f32 %v911, %v917
        %v951 = vld [vmem:[%s5] sm:$0x1]
        %v953 = vlaneseq
        %v954 = vshrl.u32 %v953, 7
        %v955 = vsub.s32 0, %v954
        %v956 = vrot.slane %v951, %v955
        %v958 = vadd.f32 %v919, %v956
        %v959 = vadd.f32 %v920, %v956
        %v960 = vadd.f32 %v921, %v956
        %v961 = vadd.f32 %v922, %v956
        %v962 = vadd.f32 %v923, %v956
        %v963 = vadd.f32 %v924, %v956
        %v964 = vadd.f32 %v925, %v956
        %v965 = vadd.f32 %v926, %v956
        %v966 = vadd.f32 %v927, %v956
        %v967 = vadd.f32 %v928, %v956
        %v968 = vadd.f32 %v929, %v956
        %v969 = vadd.f32 %v930, %v956
        %v970 = vadd.f32 %v931, %v956
        %v971 = vadd.f32 %v932, %v956
        %v972 = vadd.f32 %v933, %v956
        %v973 = vadd.f32 %v934, %v956
        %v974 = vadd.f32 %v935, %v956
        %v975 = vadd.f32 %v936, %v956
        %v976 = vadd.f32 %v937, %v956
        %v977 = vadd.f32 %v938, %v956
        %v978 = vadd.f32 %v939, %v956
        %v979 = vadd.f32 %v940, %v956
        %v980 = vadd.f32 %v941, %v956
        %v981 = vadd.f32 %v942, %v956
        %v982 = vadd.f32 %v943, %v956
        %v983 = vadd.f32 %v944, %v956
        %v984 = vadd.f32 %v945, %v956
        %v985 = vadd.f32 %v946, %v956
        %v986 = vadd.f32 %v947, %v956
        %v987 = vadd.f32 %v948, %v956
        %v988 = vadd.f32 %v949, %v956
        %v989 = vadd.f32 %v950, %v956
        %v990 = vmax.f32 %v958, 0.0
        %v991 = vmax.f32 %v959, 0.0
        %v992 = vmax.f32 %v960, 0.0
        %v993 = vmax.f32 %v961, 0.0
        %v994 = vmax.f32 %v962, 0.0
        %v995 = vmax.f32 %v963, 0.0
        %v996 = vmax.f32 %v964, 0.0
        %v997 = vmax.f32 %v965, 0.0
        %v998 = vmax.f32 %v966, 0.0
        %v999 = vmax.f32 %v967, 0.0
        %v1000 = vmax.f32 %v968, 0.0
        %v1001 = vmax.f32 %v969, 0.0
        %v1002 = vmax.f32 %v970, 0.0
        %v1003 = vmax.f32 %v971, 0.0
        %v1004 = vmax.f32 %v972, 0.0
        %v1005 = vmax.f32 %v973, 0.0
        %v1006 = vmax.f32 %v974, 0.0
        %v1007 = vmax.f32 %v975, 0.0
        %v1008 = vmax.f32 %v976, 0.0
        %v1009 = vmax.f32 %v977, 0.0
        %v1010 = vmax.f32 %v978, 0.0
        %v1011 = vmax.f32 %v979, 0.0
        %v1012 = vmax.f32 %v980, 0.0
        %v1013 = vmax.f32 %v981, 0.0
        %v1014 = vmax.f32 %v982, 0.0
        %v1015 = vmax.f32 %v983, 0.0
        %v1016 = vmax.f32 %v984, 0.0
        %v1017 = vmax.f32 %v985, 0.0
        %v1018 = vmax.f32 %v986, 0.0
        %v1019 = vmax.f32 %v987, 0.0
        %v1020 = vmax.f32 %v988, 0.0
        %v1021 = vmax.f32 %v989, 0.0
        %v1022 = vlaneseq
        %v1023 = vshrl.u32 %v1022, 7
        %v1024 = vadd.s32 %v1023, 8
        %v1025 = vadd.s32 %v1023, 16
        %v1026 = vadd.s32 %v1023, 24
        %v1027 = vadd.s32 %v1023, 32
        %v1028 = vadd.s32 %v1023, 40
        %v1029 = vadd.s32 %v1023, 48
        %v1030 = vadd.s32 %v1023, 56
        %v1031 = vadd.s32 %v1023, 64
        %v1032 = vadd.s32 %v1023, 72
        %v1033 = vadd.s32 %v1023, 80
        %v1034 = vadd.s32 %v1023, 88
        %v1035 = vadd.s32 %v1023, 96
        %v1036 = vadd.s32 %v1023, 104
        %v1037 = vadd.s32 %v1023, 112
        %v1038 = vadd.s32 %v1023, 120
        %v1039 = vadd.s32 %v1023, 128
        %v1040 = vadd.s32 %v1023, 136
        %v1041 = vadd.s32 %v1023, 144
        %v1042 = vadd.s32 %v1023, 152
        %v1043 = vadd.s32 %v1023, 160
        %v1044 = vadd.s32 %v1023, 168
        %v1045 = vadd.s32 %v1023, 176
        %v1046 = vadd.s32 %v1023, 184
        %v1047 = vadd.s32 %v1023, 192
        %v1048 = vadd.s32 %v1023, 200
        %v1049 = vadd.s32 %v1023, 208
        %v1050 = vadd.s32 %v1023, 216
        %v1051 = vadd.s32 %v1023, 224
        %v1052 = vadd.s32 %v1023, 232
        %v1053 = vadd.s32 %v1023, 240
        %v1054 = vadd.s32 %v1023, 248
        %vm1055 = vcmp.lt.s32.totalorder %v1023, 0
        %v1056 = vsub.s32 0, %v1023
        %v1057 = vsel %vm1055, %v1056, %v1023
        %v1058 = vshrl.u32 %v1057, 4
        %v1059 = vand.u32 %v1057, 15
        %v1060 = vsub.s32 0, %v1059
        %v1061 = vsel %vm1055, %v1060, %v1059
        %vm1062 = vcmp.lt.s32.totalorder %v1024, 0
        %v1063 = vsub.s32 0, %v1024
        %v1064 = vsel %vm1062, %v1063, %v1024
        %v1065 = vshrl.u32 %v1064, 4
        %v1066 = vand.u32 %v1064, 15
        %v1067 = vsub.s32 0, %v1066
        %v1068 = vsel %vm1062, %v1067, %v1066
        %vm1069 = vcmp.lt.s32.totalorder %v1025, 0
        %v1070 = vsub.s32 0, %v1025
        %v1071 = vsel %vm1069, %v1070, %v1025
        %v1072 = vshrl.u32 %v1071, 4
        %v1073 = vand.u32 %v1071, 15
        %v1074 = vsub.s32 0, %v1073
        %v1075 = vsel %vm1069, %v1074, %v1073
        %vm1076 = vcmp.lt.s32.totalorder %v1026, 0
        %v1077 = vsub.s32 0, %v1026
        %v1078 = vsel %vm1076, %v1077, %v1026
        %v1079 = vshrl.u32 %v1078, 4
        %v1080 = vand.u32 %v1078, 15
        %v1081 = vsub.s32 0, %v1080
        %v1082 = vsel %vm1076, %v1081, %v1080
        %vm1083 = vcmp.lt.s32.totalorder %v1027, 0
        %v1084 = vsub.s32 0, %v1027
        %v1085 = vsel %vm1083, %v1084, %v1027
        %v1086 = vshrl.u32 %v1085, 4
        %v1087 = vand.u32 %v1085, 15
        %v1088 = vsub.s32 0, %v1087
        %v1089 = vsel %vm1083, %v1088, %v1087
        %vm1090 = vcmp.lt.s32.totalorder %v1028, 0
        %v1091 = vsub.s32 0, %v1028
        %v1092 = vsel %vm1090, %v1091, %v1028
        %v1093 = vshrl.u32 %v1092, 4
        %v1094 = vand.u32 %v1092, 15
        %v1095 = vsub.s32 0, %v1094
        %v1096 = vsel %vm1090, %v1095, %v1094
        %vm1097 = vcmp.lt.s32.totalorder %v1029, 0
        %v1098 = vsub.s32 0, %v1029
        %v1099 = vsel %vm1097, %v1098, %v1029
        %v1100 = vshrl.u32 %v1099, 4
        %v1101 = vand.u32 %v1099, 15
        %v1102 = vsub.s32 0, %v1101
        %v1103 = vsel %vm1097, %v1102, %v1101
        %vm1104 = vcmp.lt.s32.totalorder %v1030, 0
        %v1105 = vsub.s32 0, %v1030
        %v1106 = vsel %vm1104, %v1105, %v1030
        %v1107 = vshrl.u32 %v1106, 4
        %v1108 = vand.u32 %v1106, 15
        %v1109 = vsub.s32 0, %v1108
        %v1110 = vsel %vm1104, %v1109, %v1108
        %vm1111 = vcmp.lt.s32.totalorder %v1031, 0
        %v1112 = vsub.s32 0, %v1031
        %v1113 = vsel %vm1111, %v1112, %v1031
        %v1114 = vshrl.u32 %v1113, 4
        %v1115 = vand.u32 %v1113, 15
        %v1116 = vsub.s32 0, %v1115
        %v1117 = vsel %vm1111, %v1116, %v1115
        %vm1118 = vcmp.lt.s32.totalorder %v1032, 0
        %v1119 = vsub.s32 0, %v1032
        %v1120 = vsel %vm1118, %v1119, %v1032
        %v1121 = vshrl.u32 %v1120, 4
        %v1122 = vand.u32 %v1120, 15
        %v1123 = vsub.s32 0, %v1122
        %v1124 = vsel %vm1118, %v1123, %v1122
        %vm1125 = vcmp.lt.s32.totalorder %v1033, 0
        %v1126 = vsub.s32 0, %v1033
        %v1127 = vsel %vm1125, %v1126, %v1033
        %v1128 = vshrl.u32 %v1127, 4
        %v1129 = vand.u32 %v1127, 15
        %v1130 = vsub.s32 0, %v1129
        %v1131 = vsel %vm1125, %v1130, %v1129
        %vm1132 = vcmp.lt.s32.totalorder %v1034, 0
        %v1133 = vsub.s32 0, %v1034
        %v1134 = vsel %vm1132, %v1133, %v1034
        %v1135 = vshrl.u32 %v1134, 4
        %v1136 = vand.u32 %v1134, 15
        %v1137 = vsub.s32 0, %v1136
        %v1138 = vsel %vm1132, %v1137, %v1136
        %vm1139 = vcmp.lt.s32.totalorder %v1035, 0
        %v1140 = vsub.s32 0, %v1035
        %v1141 = vsel %vm1139, %v1140, %v1035
        %v1142 = vshrl.u32 %v1141, 4
        %v1143 = vand.u32 %v1141, 15
        %v1144 = vsub.s32 0, %v1143
        %v1145 = vsel %vm1139, %v1144, %v1143
        %vm1146 = vcmp.lt.s32.totalorder %v1036, 0
        %v1147 = vsub.s32 0, %v1036
        %v1148 = vsel %vm1146, %v1147, %v1036
        %v1149 = vshrl.u32 %v1148, 4
        %v1150 = vand.u32 %v1148, 15
        %v1151 = vsub.s32 0, %v1150
        %v1152 = vsel %vm1146, %v1151, %v1150
        %vm1153 = vcmp.lt.s32.totalorder %v1037, 0
        %v1154 = vsub.s32 0, %v1037
        %v1155 = vsel %vm1153, %v1154, %v1037
        %v1156 = vshrl.u32 %v1155, 4
        %v1157 = vand.u32 %v1155, 15
        %v1158 = vsub.s32 0, %v1157
        %v1159 = vsel %vm1153, %v1158, %v1157
        %vm1160 = vcmp.lt.s32.totalorder %v1038, 0
        %v1161 = vsub.s32 0, %v1038
        %v1162 = vsel %vm1160, %v1161, %v1038
        %v1163 = vshrl.u32 %v1162, 4
        %v1164 = vand.u32 %v1162, 15
        %v1165 = vsub.s32 0, %v1164
        %v1166 = vsel %vm1160, %v1165, %v1164
        %vm1167 = vcmp.lt.s32.totalorder %v1039, 0
        %v1168 = vsub.s32 0, %v1039
        %v1169 = vsel %vm1167, %v1168, %v1039
        %v1170 = vshrl.u32 %v1169, 4
        %v1171 = vand.u32 %v1169, 15
        %v1172 = vsub.s32 0, %v1171
        %v1173 = vsel %vm1167, %v1172, %v1171
        %vm1174 = vcmp.lt.s32.totalorder %v1040, 0
        %v1175 = vsub.s32 0, %v1040
        %v1176 = vsel %vm1174, %v1175, %v1040
        %v1177 = vshrl.u32 %v1176, 4
        %v1178 = vand.u32 %v1176, 15
        %v1179 = vsub.s32 0, %v1178
        %v1180 = vsel %vm1174, %v1179, %v1178
        %vm1181 = vcmp.lt.s32.totalorder %v1041, 0
        %v1182 = vsub.s32 0, %v1041
        %v1183 = vsel %vm1181, %v1182, %v1041
        %v1184 = vshrl.u32 %v1183, 4
        %v1185 = vand.u32 %v1183, 15
        %v1186 = vsub.s32 0, %v1185
        %v1187 = vsel %vm1181, %v1186, %v1185
        %vm1188 = vcmp.lt.s32.totalorder %v1042, 0
        %v1189 = vsub.s32 0, %v1042
        %v1190 = vsel %vm1188, %v1189, %v1042
        %v1191 = vshrl.u32 %v1190, 4
        %v1192 = vand.u32 %v1190, 15
        %v1193 = vsub.s32 0, %v1192
        %v1194 = vsel %vm1188, %v1193, %v1192
        %vm1195 = vcmp.lt.s32.totalorder %v1043, 0
        %v1196 = vsub.s32 0, %v1043
        %v1197 = vsel %vm1195, %v1196, %v1043
        %v1198 = vshrl.u32 %v1197, 4
        %v1199 = vand.u32 %v1197, 15
        %v1200 = vsub.s32 0, %v1199
        %v1201 = vsel %vm1195, %v1200, %v1199
        %vm1202 = vcmp.lt.s32.totalorder %v1044, 0
        %v1203 = vsub.s32 0, %v1044
        %v1204 = vsel %vm1202, %v1203, %v1044
        %v1205 = vshrl.u32 %v1204, 4
        %v1206 = vand.u32 %v1204, 15
        %v1207 = vsub.s32 0, %v1206
        %v1208 = vsel %vm1202, %v1207, %v1206
        %vm1209 = vcmp.lt.s32.totalorder %v1045, 0
        %v1210 = vsub.s32 0, %v1045
        %v1211 = vsel %vm1209, %v1210, %v1045
        %v1212 = vshrl.u32 %v1211, 4
        %v1213 = vand.u32 %v1211, 15
        %v1214 = vsub.s32 0, %v1213
        %v1215 = vsel %vm1209, %v1214, %v1213
        %vm1216 = vcmp.lt.s32.totalorder %v1046, 0
        %v1217 = vsub.s32 0, %v1046
        %v1218 = vsel %vm1216, %v1217, %v1046
        %v1219 = vshrl.u32 %v1218, 4
        %v1220 = vand.u32 %v1218, 15
        %v1221 = vsub.s32 0, %v1220
        %v1222 = vsel %vm1216, %v1221, %v1220
        %vm1223 = vcmp.lt.s32.totalorder %v1047, 0
        %v1224 = vsub.s32 0, %v1047
        %v1225 = vsel %vm1223, %v1224, %v1047
        %v1226 = vshrl.u32 %v1225, 4
        %v1227 = vand.u32 %v1225, 15
        %v1228 = vsub.s32 0, %v1227
        %v1229 = vsel %vm1223, %v1228, %v1227
        %vm1230 = vcmp.lt.s32.totalorder %v1048, 0
        %v1231 = vsub.s32 0, %v1048
        %v1232 = vsel %vm1230, %v1231, %v1048
        %v1233 = vshrl.u32 %v1232, 4
        %v1234 = vand.u32 %v1232, 15
        %v1235 = vsub.s32 0, %v1234
        %v1236 = vsel %vm1230, %v1235, %v1234
        %vm1237 = vcmp.lt.s32.totalorder %v1049, 0
        %v1238 = vsub.s32 0, %v1049
        %v1239 = vsel %vm1237, %v1238, %v1049
        %v1240 = vshrl.u32 %v1239, 4
        %v1241 = vand.u32 %v1239, 15
        %v1242 = vsub.s32 0, %v1241
        %v1243 = vsel %vm1237, %v1242, %v1241
        %vm1244 = vcmp.lt.s32.totalorder %v1050, 0
        %v1245 = vsub.s32 0, %v1050
        %v1246 = vsel %vm1244, %v1245, %v1050
        %v1247 = vshrl.u32 %v1246, 4
        %v1248 = vand.u32 %v1246, 15
        %v1249 = vsub.s32 0, %v1248
        %v1250 = vsel %vm1244, %v1249, %v1248
        %vm1251 = vcmp.lt.s32.totalorder %v1051, 0
        %v1252 = vsub.s32 0, %v1051
        %v1253 = vsel %vm1251, %v1252, %v1051
        %v1254 = vshrl.u32 %v1253, 4
        %v1255 = vand.u32 %v1253, 15
        %v1256 = vsub.s32 0, %v1255
        %v1257 = vsel %vm1251, %v1256, %v1255
        %vm1258 = vcmp.lt.s32.totalorder %v1052, 0
        %v1259 = vsub.s32 0, %v1052
        %v1260 = vsel %vm1258, %v1259, %v1052
        %v1261 = vshrl.u32 %v1260, 4
        %v1262 = vand.u32 %v1260, 15
        %v1263 = vsub.s32 0, %v1262
        %v1264 = vsel %vm1258, %v1263, %v1262
        %vm1265 = vcmp.lt.s32.totalorder %v1053, 0
        %v1266 = vsub.s32 0, %v1053
        %v1267 = vsel %vm1265, %v1266, %v1053
        %v1268 = vshrl.u32 %v1267, 4
        %v1269 = vand.u32 %v1267, 15
        %v1270 = vsub.s32 0, %v1269
        %v1271 = vsel %vm1265, %v1270, %v1269
        %vm1272 = vcmp.lt.s32.totalorder %v1054, 0
        %v1273 = vsub.s32 0, %v1054
        %v1274 = vsel %vm1272, %v1273, %v1054
        %v1275 = vshrl.u32 %v1274, 4
        %v1276 = vand.u32 %v1274, 15
        %v1277 = vsub.s32 0, %v1276
        %v1278 = vsel %vm1272, %v1277, %v1276
        %vm1279 = vcmp.ne.s32.totalorder %v1061, 0
        %vm1280 = vcmp.ne.s32.totalorder %v1068, 0
        %vm1281 = vcmp.ne.s32.totalorder %v1075, 0
        %vm1282 = vcmp.ne.s32.totalorder %v1082, 0
        %vm1283 = vcmp.ne.s32.totalorder %v1089, 0
        %vm1284 = vcmp.ne.s32.totalorder %v1096, 0
        %vm1285 = vcmp.ne.s32.totalorder %v1103, 0
        %vm1286 = vcmp.ne.s32.totalorder %v1110, 0
        %vm1287 = vcmp.ne.s32.totalorder %v1117, 0
        %vm1288 = vcmp.ne.s32.totalorder %v1124, 0
        %vm1289 = vcmp.ne.s32.totalorder %v1131, 0
        %vm1290 = vcmp.ne.s32.totalorder %v1138, 0
        %vm1291 = vcmp.ne.s32.totalorder %v1145, 0
        %vm1292 = vcmp.ne.s32.totalorder %v1152, 0
        %vm1293 = vcmp.ne.s32.totalorder %v1159, 0
        %vm1294 = vcmp.ne.s32.totalorder %v1166, 0
        %vm1295 = vcmp.ne.s32.totalorder %v1173, 0
        %vm1296 = vcmp.ne.s32.totalorder %v1180, 0
        %vm1297 = vcmp.ne.s32.totalorder %v1187, 0
        %vm1298 = vcmp.ne.s32.totalorder %v1194, 0
        %vm1299 = vcmp.ne.s32.totalorder %v1201, 0
        %vm1300 = vcmp.ne.s32.totalorder %v1208, 0
        %vm1301 = vcmp.ne.s32.totalorder %v1215, 0
        %vm1302 = vcmp.ne.s32.totalorder %v1222, 0
        %vm1303 = vcmp.ne.s32.totalorder %v1229, 0
        %vm1304 = vcmp.ne.s32.totalorder %v1236, 0
        %vm1305 = vcmp.ne.s32.totalorder %v1243, 0
        %vm1306 = vcmp.ne.s32.totalorder %v1250, 0
        %vm1307 = vcmp.ne.s32.totalorder %v1257, 0
        %vm1308 = vcmp.ne.s32.totalorder %v1264, 0
        %vm1309 = vcmp.ne.s32.totalorder %v1271, 0
        %vm1310 = vcmp.ne.s32.totalorder %v1278, 0
        %vm1311 = vcmp.lt.s32.totalorder %v1061, 0
        %vm1312 = vcmp.lt.s32.totalorder %v1068, 0
        %vm1313 = vcmp.lt.s32.totalorder %v1075, 0
        %vm1314 = vcmp.lt.s32.totalorder %v1082, 0
        %vm1315 = vcmp.lt.s32.totalorder %v1089, 0
        %vm1316 = vcmp.lt.s32.totalorder %v1096, 0
        %vm1317 = vcmp.lt.s32.totalorder %v1103, 0
        %vm1318 = vcmp.lt.s32.totalorder %v1110, 0
        %vm1319 = vcmp.lt.s32.totalorder %v1117, 0
        %vm1320 = vcmp.lt.s32.totalorder %v1124, 0
        %vm1321 = vcmp.lt.s32.totalorder %v1131, 0
        %vm1322 = vcmp.lt.s32.totalorder %v1138, 0
        %vm1323 = vcmp.lt.s32.totalorder %v1145, 0
        %vm1324 = vcmp.lt.s32.totalorder %v1152, 0
        %vm1325 = vcmp.lt.s32.totalorder %v1159, 0
        %vm1326 = vcmp.lt.s32.totalorder %v1166, 0
        %vm1327 = vcmp.lt.s32.totalorder %v1173, 0
        %vm1328 = vcmp.lt.s32.totalorder %v1180, 0
        %vm1329 = vcmp.lt.s32.totalorder %v1187, 0
        %vm1330 = vcmp.lt.s32.totalorder %v1194, 0
        %vm1331 = vcmp.lt.s32.totalorder %v1201, 0
        %vm1332 = vcmp.lt.s32.totalorder %v1208, 0
        %vm1333 = vcmp.lt.s32.totalorder %v1215, 0
        %vm1334 = vcmp.lt.s32.totalorder %v1222, 0
        %vm1335 = vcmp.lt.s32.totalorder %v1229, 0
        %vm1336 = vcmp.lt.s32.totalorder %v1236, 0
        %vm1337 = vcmp.lt.s32.totalorder %v1243, 0
        %vm1338 = vcmp.lt.s32.totalorder %v1250, 0
        %vm1339 = vcmp.lt.s32.totalorder %v1257, 0
        %vm1340 = vcmp.lt.s32.totalorder %v1264, 0
        %vm1341 = vcmp.lt.s32.totalorder %v1271, 0
        %vm1342 = vcmp.lt.s32.totalorder %v1278, 0
        %vm1343 = vmand %vm1311, %vm1279
        %vm1344 = vmand %vm1312, %vm1280
        %vm1345 = vmand %vm1313, %vm1281
        %vm1346 = vmand %vm1314, %vm1282
        %vm1347 = vmand %vm1315, %vm1283
        %vm1348 = vmand %vm1316, %vm1284
        %vm1349 = vmand %vm1317, %vm1285
        %vm1350 = vmand %vm1318, %vm1286
        %vm1351 = vmand %vm1319, %vm1287
        %vm1352 = vmand %vm1320, %vm1288
        %vm1353 = vmand %vm1321, %vm1289
        %vm1354 = vmand %vm1322, %vm1290
        %vm1355 = vmand %vm1323, %vm1291
        %vm1356 = vmand %vm1324, %vm1292
        %vm1357 = vmand %vm1325, %vm1293
        %vm1358 = vmand %vm1326, %vm1294
        %vm1359 = vmand %vm1327, %vm1295
        %vm1360 = vmand %vm1328, %vm1296
        %vm1361 = vmand %vm1329, %vm1297
        %vm1362 = vmand %vm1330, %vm1298
        %vm1363 = vmand %vm1331, %vm1299
        %vm1364 = vmand %vm1332, %vm1300
        %vm1365 = vmand %vm1333, %vm1301
        %vm1366 = vmand %vm1334, %vm1302
        %vm1367 = vmand %vm1335, %vm1303
        %vm1368 = vmand %vm1336, %vm1304
        %vm1369 = vmand %vm1337, %vm1305
        %vm1370 = vmand %vm1338, %vm1306
        %vm1371 = vmand %vm1339, %vm1307
        %vm1372 = vmand %vm1340, %vm1308
        %vm1373 = vmand %vm1341, %vm1309
        %vm1374 = vmand %vm1342, %vm1310
        %v1375 = vadd.s32 %v1061, 16
        %v1376 = vadd.s32 %v1068, 16
        %v1377 = vadd.s32 %v1075, 16
        %v1378 = vadd.s32 %v1082, 16
        %v1379 = vadd.s32 %v1089, 16
        %v1380 = vadd.s32 %v1096, 16
        %v1381 = vadd.s32 %v1103, 16
        %v1382 = vadd.s32 %v1110, 16
        %v1383 = vadd.s32 %v1117, 16
        %v1384 = vadd.s32 %v1124, 16
        %v1385 = vadd.s32 %v1131, 16
        %v1386 = vadd.s32 %v1138, 16
        %v1387 = vadd.s32 %v1145, 16
        %v1388 = vadd.s32 %v1152, 16
        %v1389 = vadd.s32 %v1159, 16
        %v1390 = vadd.s32 %v1166, 16
        %v1391 = vadd.s32 %v1173, 16
        %v1392 = vadd.s32 %v1180, 16
        %v1393 = vadd.s32 %v1187, 16
        %v1394 = vadd.s32 %v1194, 16
        %v1395 = vadd.s32 %v1201, 16
        %v1396 = vadd.s32 %v1208, 16
        %v1397 = vadd.s32 %v1215, 16
        %v1398 = vadd.s32 %v1222, 16
        %v1399 = vadd.s32 %v1229, 16
        %v1400 = vadd.s32 %v1236, 16
        %v1401 = vadd.s32 %v1243, 16
        %v1402 = vadd.s32 %v1250, 16
        %v1403 = vadd.s32 %v1257, 16
        %v1404 = vadd.s32 %v1264, 16
        %v1405 = vadd.s32 %v1271, 16
        %v1406 = vadd.s32 %v1278, 16
        %v1407 = vsel %vm1343, %v1375, %v1061
        %v1408 = vsel %vm1344, %v1376, %v1068
        %v1409 = vsel %vm1345, %v1377, %v1075
        %v1410 = vsel %vm1346, %v1378, %v1082
        %v1411 = vsel %vm1347, %v1379, %v1089
        %v1412 = vsel %vm1348, %v1380, %v1096
        %v1413 = vsel %vm1349, %v1381, %v1103
        %v1414 = vsel %vm1350, %v1382, %v1110
        %v1415 = vsel %vm1351, %v1383, %v1117
        %v1416 = vsel %vm1352, %v1384, %v1124
        %v1417 = vsel %vm1353, %v1385, %v1131
        %v1418 = vsel %vm1354, %v1386, %v1138
        %v1419 = vsel %vm1355, %v1387, %v1145
        %v1420 = vsel %vm1356, %v1388, %v1152
        %v1421 = vsel %vm1357, %v1389, %v1159
        %v1422 = vsel %vm1358, %v1390, %v1166
        %v1423 = vsel %vm1359, %v1391, %v1173
        %v1424 = vsel %vm1360, %v1392, %v1180
        %v1425 = vsel %vm1361, %v1393, %v1187
        %v1426 = vsel %vm1362, %v1394, %v1194
        %v1427 = vsel %vm1363, %v1395, %v1201
        %v1428 = vsel %vm1364, %v1396, %v1208
        %v1429 = vsel %vm1365, %v1397, %v1215
        %v1430 = vsel %vm1366, %v1398, %v1222
        %v1431 = vsel %vm1367, %v1399, %v1229
        %v1432 = vsel %vm1368, %v1400, %v1236
        %v1433 = vsel %vm1369, %v1401, %v1243
        %v1434 = vsel %vm1370, %v1402, %v1250
        %v1435 = vsel %vm1371, %v1403, %v1257
        %v1436 = vsel %vm1372, %v1404, %v1264
        %v1437 = vsel %vm1373, %v1405, %v1271
        %v1438 = vsel %vm1374, %v1406, %v1278
        %vm1439 = vcmp.ne.s32.totalorder %v1407, 0
        %vm1440 = vcmp.ne.s32.totalorder %v1408, 0
        %vm1441 = vcmp.ne.s32.totalorder %v1409, 0
        %vm1442 = vcmp.ne.s32.totalorder %v1410, 0
        %vm1443 = vcmp.ne.s32.totalorder %v1411, 0
        %vm1444 = vcmp.ne.s32.totalorder %v1412, 0
        %vm1445 = vcmp.ne.s32.totalorder %v1413, 0
        %vm1446 = vcmp.ne.s32.totalorder %v1414, 0
        %vm1447 = vcmp.ne.s32.totalorder %v1415, 0
        %vm1448 = vcmp.ne.s32.totalorder %v1416, 0
        %vm1449 = vcmp.ne.s32.totalorder %v1417, 0
        %vm1450 = vcmp.ne.s32.totalorder %v1418, 0
        %vm1451 = vcmp.ne.s32.totalorder %v1419, 0
        %vm1452 = vcmp.ne.s32.totalorder %v1420, 0
        %vm1453 = vcmp.ne.s32.totalorder %v1421, 0
        %vm1454 = vcmp.ne.s32.totalorder %v1422, 0
        %vm1455 = vcmp.ne.s32.totalorder %v1423, 0
        %vm1456 = vcmp.ne.s32.totalorder %v1424, 0
        %vm1457 = vcmp.ne.s32.totalorder %v1425, 0
        %vm1458 = vcmp.ne.s32.totalorder %v1426, 0
        %vm1459 = vcmp.ne.s32.totalorder %v1427, 0
        %vm1460 = vcmp.ne.s32.totalorder %v1428, 0
        %vm1461 = vcmp.ne.s32.totalorder %v1429, 0
        %vm1462 = vcmp.ne.s32.totalorder %v1430, 0
        %vm1463 = vcmp.ne.s32.totalorder %v1431, 0
        %vm1464 = vcmp.ne.s32.totalorder %v1432, 0
        %vm1465 = vcmp.ne.s32.totalorder %v1433, 0
        %vm1466 = vcmp.ne.s32.totalorder %v1434, 0
        %vm1467 = vcmp.ne.s32.totalorder %v1435, 0
        %vm1468 = vcmp.ne.s32.totalorder %v1436, 0
        %vm1469 = vcmp.ne.s32.totalorder %v1437, 0
        %vm1470 = vcmp.ne.s32.totalorder %v1438, 0
        %v1471 = vsel %vm1439, 1, 0
        %v1472 = vsel %vm1440, 1, 0
        %v1473 = vsel %vm1441, 1, 0
        %v1474 = vsel %vm1442, 1, 0
        %v1475 = vsel %vm1443, 1, 0
        %v1476 = vsel %vm1444, 1, 0
        %v1477 = vsel %vm1445, 1, 0
        %v1478 = vsel %vm1446, 1, 0
        %v1479 = vsel %vm1447, 1, 0
        %v1480 = vsel %vm1448, 1, 0
        %v1481 = vsel %vm1449, 1, 0
        %v1482 = vsel %vm1450, 1, 0
        %v1483 = vsel %vm1451, 1, 0
        %v1484 = vsel %vm1452, 1, 0
        %v1485 = vsel %vm1453, 1, 0
        %v1486 = vsel %vm1454, 1, 0
        %v1487 = vsel %vm1455, 1, 0
        %v1488 = vsel %vm1456, 1, 0
        %v1489 = vsel %vm1457, 1, 0
        %v1490 = vsel %vm1458, 1, 0
        %v1491 = vsel %vm1459, 1, 0
        %v1492 = vsel %vm1460, 1, 0
        %v1493 = vsel %vm1461, 1, 0
        %v1494 = vsel %vm1462, 1, 0
        %v1495 = vsel %vm1463, 1, 0
        %v1496 = vsel %vm1464, 1, 0
        %v1497 = vsel %vm1465, 1, 0
        %v1498 = vsel %vm1466, 1, 0
        %v1499 = vsel %vm1467, 1, 0
        %v1500 = vsel %vm1468, 1, 0
        %v1501 = vsel %vm1469, 1, 0
        %v1502 = vsel %vm1470, 1, 0
        %v1503 = vcvt.s32.f32 %v1471
        %v1504 = vcvt.s32.f32 %v1472
        %v1505 = vcvt.s32.f32 %v1473
        %v1506 = vcvt.s32.f32 %v1474
        %v1507 = vcvt.s32.f32 %v1475
        %v1508 = vcvt.s32.f32 %v1476
        %v1509 = vcvt.s32.f32 %v1477
        %v1510 = vcvt.s32.f32 %v1478
        %v1511 = vcvt.s32.f32 %v1479
        %v1512 = vcvt.s32.f32 %v1480
        %v1513 = vcvt.s32.f32 %v1481
        %v1514 = vcvt.s32.f32 %v1482
        %v1515 = vcvt.s32.f32 %v1483
        %v1516 = vcvt.s32.f32 %v1484
        %v1517 = vcvt.s32.f32 %v1485
        %v1518 = vcvt.s32.f32 %v1486
        %v1519 = vcvt.s32.f32 %v1487
        %v1520 = vcvt.s32.f32 %v1488
        %v1521 = vcvt.s32.f32 %v1489
        %v1522 = vcvt.s32.f32 %v1490
        %v1523 = vcvt.s32.f32 %v1491
        %v1524 = vcvt.s32.f32 %v1492
        %v1525 = vcvt.s32.f32 %v1493
        %v1526 = vcvt.s32.f32 %v1494
        %v1527 = vcvt.s32.f32 %v1495
        %v1528 = vcvt.s32.f32 %v1496
        %v1529 = vcvt.s32.f32 %v1497
        %v1530 = vcvt.s32.f32 %v1498
        %v1531 = vcvt.s32.f32 %v1499
        %v1532 = vcvt.s32.f32 %v1500
        %v1533 = vcvt.s32.f32 %v1501
        %v1534 = vcvt.s32.f32 %v1502
        %vm1535 = vcmp.ne.s32.totalorder %v1407, 15
        %vm1536 = vcmp.ne.s32.totalorder %v1408, 15
        %vm1537 = vcmp.ne.s32.totalorder %v1409, 15
        %vm1538 = vcmp.ne.s32.totalorder %v1410, 15
        %vm1539 = vcmp.ne.s32.totalorder %v1411, 15
        %vm1540 = vcmp.ne.s32.totalorder %v1412, 15
        %vm1541 = vcmp.ne.s32.totalorder %v1413, 15
        %vm1542 = vcmp.ne.s32.totalorder %v1414, 15
        %vm1543 = vcmp.ne.s32.totalorder %v1415, 15
        %vm1544 = vcmp.ne.s32.totalorder %v1416, 15
        %vm1545 = vcmp.ne.s32.totalorder %v1417, 15
        %vm1546 = vcmp.ne.s32.totalorder %v1418, 15
        %vm1547 = vcmp.ne.s32.totalorder %v1419, 15
        %vm1548 = vcmp.ne.s32.totalorder %v1420, 15
        %vm1549 = vcmp.ne.s32.totalorder %v1421, 15
        %vm1550 = vcmp.ne.s32.totalorder %v1422, 15
        %vm1551 = vcmp.ne.s32.totalorder %v1423, 15
        %vm1552 = vcmp.ne.s32.totalorder %v1424, 15
        %vm1553 = vcmp.ne.s32.totalorder %v1425, 15
        %vm1554 = vcmp.ne.s32.totalorder %v1426, 15
        %vm1555 = vcmp.ne.s32.totalorder %v1427, 15
        %vm1556 = vcmp.ne.s32.totalorder %v1428, 15
        %vm1557 = vcmp.ne.s32.totalorder %v1429, 15
        %vm1558 = vcmp.ne.s32.totalorder %v1430, 15
        %vm1559 = vcmp.ne.s32.totalorder %v1431, 15
        %vm1560 = vcmp.ne.s32.totalorder %v1432, 15
        %vm1561 = vcmp.ne.s32.totalorder %v1433, 15
        %vm1562 = vcmp.ne.s32.totalorder %v1434, 15
        %vm1563 = vcmp.ne.s32.totalorder %v1435, 15
        %vm1564 = vcmp.ne.s32.totalorder %v1436, 15
        %vm1565 = vcmp.ne.s32.totalorder %v1437, 15
        %vm1566 = vcmp.ne.s32.totalorder %v1438, 15
        %v1567 = vsel %vm1535, 1, 0
        %v1568 = vsel %vm1536, 1, 0
        %v1569 = vsel %vm1537, 1, 0
        %v1570 = vsel %vm1538, 1, 0
        %v1571 = vsel %vm1539, 1, 0
        %v1572 = vsel %vm1540, 1, 0
        %v1573 = vsel %vm1541, 1, 0
        %v1574 = vsel %vm1542, 1, 0
        %v1575 = vsel %vm1543, 1, 0
        %v1576 = vsel %vm1544, 1, 0
        %v1577 = vsel %vm1545, 1, 0
        %v1578 = vsel %vm1546, 1, 0
        %v1579 = vsel %vm1547, 1, 0
        %v1580 = vsel %vm1548, 1, 0
        %v1581 = vsel %vm1549, 1, 0
        %v1582 = vsel %vm1550, 1, 0
        %v1583 = vsel %vm1551, 1, 0
        %v1584 = vsel %vm1552, 1, 0
        %v1585 = vsel %vm1553, 1, 0
        %v1586 = vsel %vm1554, 1, 0
        %v1587 = vsel %vm1555, 1, 0
        %v1588 = vsel %vm1556, 1, 0
        %v1589 = vsel %vm1557, 1, 0
        %v1590 = vsel %vm1558, 1, 0
        %v1591 = vsel %vm1559, 1, 0
        %v1592 = vsel %vm1560, 1, 0
        %v1593 = vsel %vm1561, 1, 0
        %v1594 = vsel %vm1562, 1, 0
        %v1595 = vsel %vm1563, 1, 0
        %v1596 = vsel %vm1564, 1, 0
        %v1597 = vsel %vm1565, 1, 0
        %v1598 = vsel %vm1566, 1, 0
        %v1599 = vcvt.s32.f32 %v1567
        %v1600 = vcvt.s32.f32 %v1568
        %v1601 = vcvt.s32.f32 %v1569
        %v1602 = vcvt.s32.f32 %v1570
        %v1603 = vcvt.s32.f32 %v1571
        %v1604 = vcvt.s32.f32 %v1572
        %v1605 = vcvt.s32.f32 %v1573
        %v1606 = vcvt.s32.f32 %v1574
        %v1607 = vcvt.s32.f32 %v1575
        %v1608 = vcvt.s32.f32 %v1576
        %v1609 = vcvt.s32.f32 %v1577
        %v1610 = vcvt.s32.f32 %v1578
        %v1611 = vcvt.s32.f32 %v1579
        %v1612 = vcvt.s32.f32 %v1580
        %v1613 = vcvt.s32.f32 %v1581
        %v1614 = vcvt.s32.f32 %v1582
        %v1615 = vcvt.s32.f32 %v1583
        %v1616 = vcvt.s32.f32 %v1584
        %v1617 = vcvt.s32.f32 %v1585
        %v1618 = vcvt.s32.f32 %v1586
        %v1619 = vcvt.s32.f32 %v1587
        %v1620 = vcvt.s32.f32 %v1588
        %v1621 = vcvt.s32.f32 %v1589
        %v1622 = vcvt.s32.f32 %v1590
        %v1623 = vcvt.s32.f32 %v1591
        %v1624 = vcvt.s32.f32 %v1592
        %v1625 = vcvt.s32.f32 %v1593
        %v1626 = vcvt.s32.f32 %v1594
        %v1627 = vcvt.s32.f32 %v1595
        %v1628 = vcvt.s32.f32 %v1596
        %v1629 = vcvt.s32.f32 %v1597
        %v1630 = vcvt.s32.f32 %v1598
        %vm1661 = vcmask 1040384
        %v1662 = vrot.slane %v990, 7
        %v1663 = vrot.slane %v991, 7
        %v1664 = vsel %vm1661, %v1662, %v1663
        %v1665 = vrot.slane %v992, 7
        %v1666 = vsel %vm1661, %v1663, %v1665
        %v1667 = vrot.slane %v993, 7
        %v1668 = vsel %vm1661, %v1665, %v1667
        %v1669 = vrot.slane %v994, 7
        %v1670 = vsel %vm1661, %v1667, %v1669
        %v1671 = vrot.slane %v995, 7
        %v1672 = vsel %vm1661, %v1669, %v1671
        %v1673 = vrot.slane %v996, 7
        %v1674 = vsel %vm1661, %v1671, %v1673
        %v1675 = vrot.slane %v997, 7
        %v1676 = vsel %vm1661, %v1673, %v1675
        %v1677 = vrot.slane %v998, 7
        %v1678 = vsel %vm1661, %v1675, %v1677
        %v1679 = vrot.slane %v999, 7
        %v1680 = vsel %vm1661, %v1677, %v1679
        %v1681 = vrot.slane %v1000, 7
        %v1682 = vsel %vm1661, %v1679, %v1681
        %v1683 = vrot.slane %v1001, 7
        %v1684 = vsel %vm1661, %v1681, %v1683
        %v1685 = vrot.slane %v1002, 7
        %v1686 = vsel %vm1661, %v1683, %v1685
        %v1687 = vrot.slane %v1003, 7
        %v1688 = vsel %vm1661, %v1685, %v1687
        %v1689 = vrot.slane %v1004, 7
        %v1690 = vsel %vm1661, %v1687, %v1689
        %v1691 = vrot.slane %v1005, 7
        %v1692 = vsel %vm1661, %v1689, %v1691
        %v1693 = vrot.slane %v1006, 7
        %v1694 = vsel %vm1661, %v1691, %v1693
        %v1695 = vrot.slane %v1007, 7
        %v1696 = vsel %vm1661, %v1693, %v1695
        %v1697 = vrot.slane %v1008, 7
        %v1698 = vsel %vm1661, %v1695, %v1697
        %v1699 = vrot.slane %v1009, 7
        %v1700 = vsel %vm1661, %v1697, %v1699
        %v1701 = vrot.slane %v1010, 7
        %v1702 = vsel %vm1661, %v1699, %v1701
        %v1703 = vrot.slane %v1011, 7
        %v1704 = vsel %vm1661, %v1701, %v1703
        %v1705 = vrot.slane %v1012, 7
        %v1706 = vsel %vm1661, %v1703, %v1705
        %v1707 = vrot.slane %v1013, 7
        %v1708 = vsel %vm1661, %v1705, %v1707
        %v1709 = vrot.slane %v1014, 7
        %v1710 = vsel %vm1661, %v1707, %v1709
        %v1711 = vrot.slane %v1015, 7
        %v1712 = vsel %vm1661, %v1709, %v1711
        %v1713 = vrot.slane %v1016, 7
        %v1714 = vsel %vm1661, %v1711, %v1713
        %v1715 = vrot.slane %v1017, 7
        %v1716 = vsel %vm1661, %v1713, %v1715
        %v1717 = vrot.slane %v1018, 7
        %v1718 = vsel %vm1661, %v1715, %v1717
        %v1719 = vrot.slane %v1019, 7
        %v1720 = vsel %vm1661, %v1717, %v1719
        %v1751 = vsel %vm1661, 0.0, %v1662
        %v1752 = vmul.f32 %v1503, 0.0
        %v1753 = vmul.f32 %v1504, 0.0
        %v1754 = vmul.f32 %v1751, %v1505
        %v1755 = vmul.f32 %v1664, %v1506
        %v1756 = vmul.f32 %v1666, %v1507
        %v1757 = vmul.f32 %v1668, %v1508
        %v1758 = vmul.f32 %v1670, %v1509
        %v1759 = vmul.f32 %v1672, %v1510
        %v1760 = vmul.f32 %v1674, %v1511
        %v1761 = vmul.f32 %v1676, %v1512
        %v1762 = vmul.f32 %v1678, %v1513
        %v1763 = vmul.f32 %v1680, %v1514
        %v1764 = vmul.f32 %v1682, %v1515
        %v1765 = vmul.f32 %v1684, %v1516
        %v1766 = vmul.f32 %v1686, %v1517
        %v1767 = vmul.f32 %v1688, %v1518
        %v1768 = vmul.f32 %v1690, %v1519
        %v1769 = vmul.f32 %v1692, %v1520
        %v1770 = vmul.f32 %v1694, %v1521
        %v1771 = vmul.f32 %v1696, %v1522
        %v1772 = vmul.f32 %v1698, %v1523
        %v1773 = vmul.f32 %v1700, %v1524
        %v1774 = vmul.f32 %v1702, %v1525
        %v1775 = vmul.f32 %v1704, %v1526
        %v1776 = vmul.f32 %v1706, %v1527
        %v1777 = vmul.f32 %v1708, %v1528
        %v1778 = vmul.f32 %v1710, %v1529
        %v1779 = vmul.f32 %v1712, %v1530
        %v1780 = vmul.f32 %v1714, %v1531
        %v1781 = vmul.f32 %v1716, %v1532
        %v1782 = vmul.f32 %v1718, %v1533
        %v1783 = vmul.f32 %v1720, %v1534
        %vm1785 = vcmask 1046528
        %v1786 = vrot.slane %v990, 1
        %v1787 = vrot.slane %v991, 1
        %v1788 = vsel %vm1785, %v1786, %v1787
        %v1789 = vrot.slane %v992, 1
        %v1790 = vsel %vm1785, %v1787, %v1789
        %v1791 = vrot.slane %v993, 1
        %v1792 = vsel %vm1785, %v1789, %v1791
        %v1793 = vrot.slane %v994, 1
        %v1794 = vsel %vm1785, %v1791, %v1793
        %v1795 = vrot.slane %v995, 1
        %v1796 = vsel %vm1785, %v1793, %v1795
        %v1797 = vrot.slane %v996, 1
        %v1798 = vsel %vm1785, %v1795, %v1797
        %v1799 = vrot.slane %v997, 1
        %v1800 = vsel %vm1785, %v1797, %v1799
        %v1801 = vrot.slane %v998, 1
        %v1802 = vsel %vm1785, %v1799, %v1801
        %v1803 = vrot.slane %v999, 1
        %v1804 = vsel %vm1785, %v1801, %v1803
        %v1805 = vrot.slane %v1000, 1
        %v1806 = vsel %vm1785, %v1803, %v1805
        %v1807 = vrot.slane %v1001, 1
        %v1808 = vsel %vm1785, %v1805, %v1807
        %v1809 = vrot.slane %v1002, 1
        %v1810 = vsel %vm1785, %v1807, %v1809
        %v1811 = vrot.slane %v1003, 1
        %v1812 = vsel %vm1785, %v1809, %v1811
        %v1813 = vrot.slane %v1004, 1
        %v1814 = vsel %vm1785, %v1811, %v1813
        %v1815 = vrot.slane %v1005, 1
        %v1816 = vsel %vm1785, %v1813, %v1815
        %v1817 = vrot.slane %v1006, 1
        %v1818 = vsel %vm1785, %v1815, %v1817
        %v1819 = vrot.slane %v1007, 1
        %v1820 = vsel %vm1785, %v1817, %v1819
        %v1821 = vrot.slane %v1008, 1
        %v1822 = vsel %vm1785, %v1819, %v1821
        %v1823 = vrot.slane %v1009, 1
        %v1824 = vsel %vm1785, %v1821, %v1823
        %v1825 = vrot.slane %v1010, 1
        %v1826 = vsel %vm1785, %v1823, %v1825
        %v1827 = vrot.slane %v1011, 1
        %v1828 = vsel %vm1785, %v1825, %v1827
        %v1829 = vrot.slane %v1012, 1
        %v1830 = vsel %vm1785, %v1827, %v1829
        %v1831 = vrot.slane %v1013, 1
        %v1832 = vsel %vm1785, %v1829, %v1831
        %v1833 = vrot.slane %v1014, 1
        %v1834 = vsel %vm1785, %v1831, %v1833
        %v1835 = vrot.slane %v1015, 1
        %v1836 = vsel %vm1785, %v1833, %v1835
        %v1837 = vrot.slane %v1016, 1
        %v1838 = vsel %vm1785, %v1835, %v1837
        %v1839 = vrot.slane %v1017, 1
        %v1840 = vsel %vm1785, %v1837, %v1839
        %v1841 = vrot.slane %v1018, 1
        %v1842 = vsel %vm1785, %v1839, %v1841
        %v1843 = vrot.slane %v1019, 1
        %v1844 = vsel %vm1785, %v1841, %v1843
        %v1845 = vrot.slane %v1020, 1
        %v1846 = vsel %vm1785, %v1843, %v1845
        %v1878 = vsel %vm1785, 0.0, %v1786
        %v1879 = vmul.f32 %v1599, 0.0
        %v1880 = vmul.f32 %v1878, %v1600
        %v1881 = vmul.f32 %v1788, %v1601
        %v1882 = vmul.f32 %v1790, %v1602
        %v1883 = vmul.f32 %v1792, %v1603
        %v1884 = vmul.f32 %v1794, %v1604
        %v1885 = vmul.f32 %v1796, %v1605
        %v1886 = vmul.f32 %v1798, %v1606
        %v1887 = vmul.f32 %v1800, %v1607
        %v1888 = vmul.f32 %v1802, %v1608
        %v1889 = vmul.f32 %v1804, %v1609
        %v1890 = vmul.f32 %v1806, %v1610
        %v1891 = vmul.f32 %v1808, %v1611
        %v1892 = vmul.f32 %v1810, %v1612
        %v1893 = vmul.f32 %v1812, %v1613
        %v1894 = vmul.f32 %v1814, %v1614
        %v1895 = vmul.f32 %v1816, %v1615
        %v1896 = vmul.f32 %v1818, %v1616
        %v1897 = vmul.f32 %v1820, %v1617
        %v1898 = vmul.f32 %v1822, %v1618
        %v1899 = vmul.f32 %v1824, %v1619
        %v1900 = vmul.f32 %v1826, %v1620
        %v1901 = vmul.f32 %v1828, %v1621
        %v1902 = vmul.f32 %v1830, %v1622
        %v1903 = vmul.f32 %v1832, %v1623
        %v1904 = vmul.f32 %v1834, %v1624
        %v1905 = vmul.f32 %v1836, %v1625
        %v1906 = vmul.f32 %v1838, %v1626
        %v1907 = vmul.f32 %v1840, %v1627
        %v1908 = vmul.f32 %v1842, %v1628
        %v1909 = vmul.f32 %v1844, %v1629
        %v1910 = vmul.f32 %v1846, %v1630
        %v1912 = vrot.slane %v1020, 7
        %v1913 = vsel %vm1661, %v1719, %v1912
        %v1914 = vrot.slane %v1021, 7
        %v1915 = vsel %vm1661, %v1912, %v1914
        %v1918 = vmul.f32 %v1751, %v1503
        %v1919 = vmul.f32 %v1664, %v1504
        %v1920 = vmul.f32 %v1666, %v1505
        %v1921 = vmul.f32 %v1668, %v1506
        %v1922 = vmul.f32 %v1670, %v1507
        %v1923 = vmul.f32 %v1672, %v1508
        %v1924 = vmul.f32 %v1674, %v1509
        %v1925 = vmul.f32 %v1676, %v1510
        %v1926 = vmul.f32 %v1678, %v1511
        %v1927 = vmul.f32 %v1680, %v1512
        %v1928 = vmul.f32 %v1682, %v1513
        %v1929 = vmul.f32 %v1684, %v1514
        %v1930 = vmul.f32 %v1686, %v1515
        %v1931 = vmul.f32 %v1688, %v1516
        %v1932 = vmul.f32 %v1690, %v1517
        %v1933 = vmul.f32 %v1692, %v1518
        %v1934 = vmul.f32 %v1694, %v1519
        %v1935 = vmul.f32 %v1696, %v1520
        %v1936 = vmul.f32 %v1698, %v1521
        %v1937 = vmul.f32 %v1700, %v1522
        %v1938 = vmul.f32 %v1702, %v1523
        %v1939 = vmul.f32 %v1704, %v1524
        %v1940 = vmul.f32 %v1706, %v1525
        %v1941 = vmul.f32 %v1708, %v1526
        %v1942 = vmul.f32 %v1710, %v1527
        %v1943 = vmul.f32 %v1712, %v1528
        %v1944 = vmul.f32 %v1714, %v1529
        %v1945 = vmul.f32 %v1716, %v1530
        %v1946 = vmul.f32 %v1718, %v1531
        %v1947 = vmul.f32 %v1720, %v1532
        %v1948 = vmul.f32 %v1913, %v1533
        %v1949 = vmul.f32 %v1915, %v1534
        %v1950 = vrot.slane %v1021, 1
        %v1951 = vsel %vm1785, %v1845, %v1950
        %v1954 = vsel %vm1785, %v1950, 0.0
        %v1955 = vmul.f32 %v1788, %v1599
        %v1956 = vmul.f32 %v1790, %v1600
        %v1957 = vmul.f32 %v1792, %v1601
        %v1958 = vmul.f32 %v1794, %v1602
        %v1959 = vmul.f32 %v1796, %v1603
        %v1960 = vmul.f32 %v1798, %v1604
        %v1961 = vmul.f32 %v1800, %v1605
        %v1962 = vmul.f32 %v1802, %v1606
        %v1963 = vmul.f32 %v1804, %v1607
        %v1964 = vmul.f32 %v1806, %v1608
        %v1965 = vmul.f32 %v1808, %v1609
        %v1966 = vmul.f32 %v1810, %v1610
        %v1967 = vmul.f32 %v1812, %v1611
        %v1968 = vmul.f32 %v1814, %v1612
        %v1969 = vmul.f32 %v1816, %v1613
        %v1970 = vmul.f32 %v1818, %v1614
        %v1971 = vmul.f32 %v1820, %v1615
        %v1972 = vmul.f32 %v1822, %v1616
        %v1973 = vmul.f32 %v1824, %v1617
        %v1974 = vmul.f32 %v1826, %v1618
        %v1975 = vmul.f32 %v1828, %v1619
        %v1976 = vmul.f32 %v1830, %v1620
        %v1977 = vmul.f32 %v1832, %v1621
        %v1978 = vmul.f32 %v1834, %v1622
        %v1979 = vmul.f32 %v1836, %v1623
        %v1980 = vmul.f32 %v1838, %v1624
        %v1981 = vmul.f32 %v1840, %v1625
        %v1982 = vmul.f32 %v1842, %v1626
        %v1983 = vmul.f32 %v1844, %v1627
        %v1984 = vmul.f32 %v1846, %v1628
        %v1985 = vmul.f32 %v1951, %v1629
        %v1986 = vmul.f32 %v1954, %v1630
        %v1988 = vsel %vm1661, %v1914, 0.0
        %v1989 = vmul.f32 %v1666, %v1503
        %v1990 = vmul.f32 %v1668, %v1504
        %v1991 = vmul.f32 %v1670, %v1505
        %v1992 = vmul.f32 %v1672, %v1506
        %v1993 = vmul.f32 %v1674, %v1507
        %v1994 = vmul.f32 %v1676, %v1508
        %v1995 = vmul.f32 %v1678, %v1509
        %v1996 = vmul.f32 %v1680, %v1510
        %v1997 = vmul.f32 %v1682, %v1511
        %v1998 = vmul.f32 %v1684, %v1512
        %v1999 = vmul.f32 %v1686, %v1513
        %v2000 = vmul.f32 %v1688, %v1514
        %v2001 = vmul.f32 %v1690, %v1515
        %v2002 = vmul.f32 %v1692, %v1516
        %v2003 = vmul.f32 %v1694, %v1517
        %v2004 = vmul.f32 %v1696, %v1518
        %v2005 = vmul.f32 %v1698, %v1519
        %v2006 = vmul.f32 %v1700, %v1520
        %v2007 = vmul.f32 %v1702, %v1521
        %v2008 = vmul.f32 %v1704, %v1522
        %v2009 = vmul.f32 %v1706, %v1523
        %v2010 = vmul.f32 %v1708, %v1524
        %v2011 = vmul.f32 %v1710, %v1525
        %v2012 = vmul.f32 %v1712, %v1526
        %v2013 = vmul.f32 %v1714, %v1527
        %v2014 = vmul.f32 %v1716, %v1528
        %v2015 = vmul.f32 %v1718, %v1529
        %v2016 = vmul.f32 %v1720, %v1530
        %v2017 = vmul.f32 %v1913, %v1531
        %v2018 = vmul.f32 %v1915, %v1532
        %v2019 = vmul.f32 %v1988, %v1533
        %v2020 = vmul.f32 %v1534, 0.0
        %v2021 = vmul.f32 %v1792, %v1599
        %v2022 = vmul.f32 %v1794, %v1600
        %v2023 = vmul.f32 %v1796, %v1601
        %v2024 = vmul.f32 %v1798, %v1602
        %v2025 = vmul.f32 %v1800, %v1603
        %v2026 = vmul.f32 %v1802, %v1604
        %v2027 = vmul.f32 %v1804, %v1605
        %v2028 = vmul.f32 %v1806, %v1606
        %v2029 = vmul.f32 %v1808, %v1607
        %v2030 = vmul.f32 %v1810, %v1608
        %v2031 = vmul.f32 %v1812, %v1609
        %v2032 = vmul.f32 %v1814, %v1610
        %v2033 = vmul.f32 %v1816, %v1611
        %v2034 = vmul.f32 %v1818, %v1612
        %v2035 = vmul.f32 %v1820, %v1613
        %v2036 = vmul.f32 %v1822, %v1614
        %v2037 = vmul.f32 %v1824, %v1615
        %v2038 = vmul.f32 %v1826, %v1616
        %v2039 = vmul.f32 %v1828, %v1617
        %v2040 = vmul.f32 %v1830, %v1618
        %v2041 = vmul.f32 %v1832, %v1619
        %v2042 = vmul.f32 %v1834, %v1620
        %v2043 = vmul.f32 %v1836, %v1621
        %v2044 = vmul.f32 %v1838, %v1622
        %v2045 = vmul.f32 %v1840, %v1623
        %v2046 = vmul.f32 %v1842, %v1624
        %v2047 = vmul.f32 %v1844, %v1625
        %v2048 = vmul.f32 %v1846, %v1626
        %v2049 = vmul.f32 %v1951, %v1627
        %v2050 = vmul.f32 %v1954, %v1628
        %v2051 = vmul.f32 %v1629, 0.0
        %v2052 = vmul.f32 %v1630, 0.0
        %2054 = vrot.lane.b32.xlu0 0.0, 32
        %v2055 = vpop.permute.xlu0 %2054
        %2056 = vrot.lane.b32.xlu0 %v990, 32
        %v2057 = vpop.permute.xlu0 %2056
        %2058 = vrot.lane.b32.xlu0 %v991, 32
        %v2059 = vpop.permute.xlu0 %2058
        %2060 = vrot.lane.b32.xlu0 %v992, 32
        %v2061 = vpop.permute.xlu0 %2060
        %2062 = vrot.lane.b32.xlu0 %v993, 32
        %v2063 = vpop.permute.xlu0 %2062
        %2064 = vrot.lane.b32.xlu0 %v994, 32
        %v2065 = vpop.permute.xlu0 %2064
        %2066 = vrot.lane.b32.xlu0 %v995, 32
        %v2067 = vpop.permute.xlu0 %2066
        %2068 = vrot.lane.b32.xlu0 %v996, 32
        %v2069 = vpop.permute.xlu0 %2068
        %2070 = vrot.lane.b32.xlu0 %v997, 32
        %v2071 = vpop.permute.xlu0 %2070
        %2072 = vrot.lane.b32.xlu0 %v998, 32
        %v2073 = vpop.permute.xlu0 %2072
        %2074 = vrot.lane.b32.xlu0 %v999, 32
        %v2075 = vpop.permute.xlu0 %2074
        %2076 = vrot.lane.b32.xlu0 %v1000, 32
        %v2077 = vpop.permute.xlu0 %2076
        %2078 = vrot.lane.b32.xlu0 %v1001, 32
        %v2079 = vpop.permute.xlu0 %2078
        %2080 = vrot.lane.b32.xlu0 %v1002, 32
        %v2081 = vpop.permute.xlu0 %2080
        %2082 = vrot.lane.b32.xlu0 %v1003, 32
        %v2083 = vpop.permute.xlu0 %2082
        %2084 = vrot.lane.b32.xlu0 %v1004, 32
        %v2085 = vpop.permute.xlu0 %2084
        %2086 = vrot.lane.b32.xlu0 %v1005, 32
        %v2087 = vpop.permute.xlu0 %2086
        %2088 = vrot.lane.b32.xlu0 %v1006, 32
        %v2089 = vpop.permute.xlu0 %2088
        %2090 = vrot.lane.b32.xlu0 %v1007, 32
        %v2091 = vpop.permute.xlu0 %2090
        %2092 = vrot.lane.b32.xlu0 %v1008, 32
        %v2093 = vpop.permute.xlu0 %2092
        %2094 = vrot.lane.b32.xlu0 %v1009, 32
        %v2095 = vpop.permute.xlu0 %2094
        %2096 = vrot.lane.b32.xlu0 %v1010, 32
        %v2097 = vpop.permute.xlu0 %2096
        %2098 = vrot.lane.b32.xlu0 %v1011, 32
        %v2099 = vpop.permute.xlu0 %2098
        %2100 = vrot.lane.b32.xlu0 %v1012, 32
        %v2101 = vpop.permute.xlu0 %2100
        %2102 = vrot.lane.b32.xlu0 %v1013, 32
        %v2103 = vpop.permute.xlu0 %2102
        %2104 = vrot.lane.b32.xlu0 %v1014, 32
        %v2105 = vpop.permute.xlu0 %2104
        %2106 = vrot.lane.b32.xlu0 %v1015, 32
        %v2107 = vpop.permute.xlu0 %2106
        %2108 = vrot.lane.b32.xlu0 %v1016, 32
        %v2109 = vpop.permute.xlu0 %2108
        %2110 = vrot.lane.b32.xlu0 %v1017, 32
        %v2111 = vpop.permute.xlu0 %2110
        %2112 = vrot.lane.b32.xlu0 %v1018, 32
        %v2113 = vpop.permute.xlu0 %2112
        %2114 = vrot.lane.b32.xlu0 %v1019, 32
        %v2115 = vpop.permute.xlu0 %2114
        %2179 = vrot.lane.b32.xlu0 %v1879, 64
        %v2180 = vpop.permute.xlu0 %2179
        %2181 = vrot.lane.b32.xlu0 %v1880, 64
        %v2182 = vpop.permute.xlu0 %2181
        %2183 = vrot.lane.b32.xlu0 %v1881, 64
        %v2184 = vpop.permute.xlu0 %2183
        %2185 = vrot.lane.b32.xlu0 %v1882, 64
        %v2186 = vpop.permute.xlu0 %2185
        %2187 = vrot.lane.b32.xlu0 %v1883, 64
        %v2188 = vpop.permute.xlu0 %2187
        %2189 = vrot.lane.b32.xlu0 %v1884, 64
        %v2190 = vpop.permute.xlu0 %2189
        %2191 = vrot.lane.b32.xlu0 %v1885, 64
        %v2192 = vpop.permute.xlu0 %2191
        %2193 = vrot.lane.b32.xlu0 %v1886, 64
        %v2194 = vpop.permute.xlu0 %2193
        %2195 = vrot.lane.b32.xlu0 %v1887, 64
        %v2196 = vpop.permute.xlu0 %2195
        %2197 = vrot.lane.b32.xlu0 %v1888, 64
        %v2198 = vpop.permute.xlu0 %2197
        %2199 = vrot.lane.b32.xlu0 %v1889, 64
        %v2200 = vpop.permute.xlu0 %2199
        %2201 = vrot.lane.b32.xlu0 %v1890, 64
        %v2202 = vpop.permute.xlu0 %2201
        %2203 = vrot.lane.b32.xlu0 %v1891, 64
        %v2204 = vpop.permute.xlu0 %2203
        %2205 = vrot.lane.b32.xlu0 %v1892, 64
        %v2206 = vpop.permute.xlu0 %2205
        %2207 = vrot.lane.b32.xlu0 %v1893, 64
        %v2208 = vpop.permute.xlu0 %2207
        %2209 = vrot.lane.b32.xlu0 %v1894, 64
        %v2210 = vpop.permute.xlu0 %2209
        %2211 = vrot.lane.b32.xlu0 %v1895, 64
        %v2212 = vpop.permute.xlu0 %2211
        %2213 = vrot.lane.b32.xlu0 %v1896, 64
        %v2214 = vpop.permute.xlu0 %2213
        %2215 = vrot.lane.b32.xlu0 %v1897, 64
        %v2216 = vpop.permute.xlu0 %2215
        %2217 = vrot.lane.b32.xlu0 %v1898, 64
        %v2218 = vpop.permute.xlu0 %2217
        %2219 = vrot.lane.b32.xlu0 %v1899, 64
        %v2220 = vpop.permute.xlu0 %2219
        %2221 = vrot.lane.b32.xlu0 %v1900, 64
        %v2222 = vpop.permute.xlu0 %2221
        %2223 = vrot.lane.b32.xlu0 %v1901, 64
        %v2224 = vpop.permute.xlu0 %2223
        %2225 = vrot.lane.b32.xlu0 %v1902, 64
        %v2226 = vpop.permute.xlu0 %2225
        %2227 = vrot.lane.b32.xlu0 %v1903, 64
        %v2228 = vpop.permute.xlu0 %2227
        %2229 = vrot.lane.b32.xlu0 %v1904, 64
        %v2230 = vpop.permute.xlu0 %2229
        %2231 = vrot.lane.b32.xlu0 %v1905, 64
        %v2232 = vpop.permute.xlu0 %2231
        %2233 = vrot.lane.b32.xlu0 %v1906, 64
        %v2234 = vpop.permute.xlu0 %2233
        %2235 = vrot.lane.b32.xlu0 %v1907, 64
        %v2236 = vpop.permute.xlu0 %2235
        %2237 = vrot.lane.b32.xlu0 %v1908, 64
        %v2238 = vpop.permute.xlu0 %2237
        %2239 = vrot.lane.b32.xlu0 %v1909, 64
        %v2240 = vpop.permute.xlu0 %2239
        %2241 = vrot.lane.b32.xlu0 %v1910, 64
        %v2242 = vpop.permute.xlu0 %2241
        %2307 = vrot.lane.b32.xlu0 %v1918, 96
        %v2308 = vpop.permute.xlu0 %2307
        %2309 = vrot.lane.b32.xlu0 %v1919, 96
        %v2310 = vpop.permute.xlu0 %2309
        %2311 = vrot.lane.b32.xlu0 %v1920, 96
        %v2312 = vpop.permute.xlu0 %2311
        %2313 = vrot.lane.b32.xlu0 %v1921, 96
        %v2314 = vpop.permute.xlu0 %2313
        %2315 = vrot.lane.b32.xlu0 %v1922, 96
        %v2316 = vpop.permute.xlu0 %2315
        %2317 = vrot.lane.b32.xlu0 %v1923, 96
        %v2318 = vpop.permute.xlu0 %2317
        %2319 = vrot.lane.b32.xlu0 %v1924, 96
        %v2320 = vpop.permute.xlu0 %2319
        %2321 = vrot.lane.b32.xlu0 %v1925, 96
        %v2322 = vpop.permute.xlu0 %2321
        %2323 = vrot.lane.b32.xlu0 %v1926, 96
        %v2324 = vpop.permute.xlu0 %2323
        %2325 = vrot.lane.b32.xlu0 %v1927, 96
        %v2326 = vpop.permute.xlu0 %2325
        %2327 = vrot.lane.b32.xlu0 %v1928, 96
        %v2328 = vpop.permute.xlu0 %2327
        %2329 = vrot.lane.b32.xlu0 %v1929, 96
        %v2330 = vpop.permute.xlu0 %2329
        %2331 = vrot.lane.b32.xlu0 %v1930, 96
        %v2332 = vpop.permute.xlu0 %2331
        %2333 = vrot.lane.b32.xlu0 %v1931, 96
        %v2334 = vpop.permute.xlu0 %2333
        %2335 = vrot.lane.b32.xlu0 %v1932, 96
        %v2336 = vpop.permute.xlu0 %2335
        %2337 = vrot.lane.b32.xlu0 %v1933, 96
        %v2338 = vpop.permute.xlu0 %2337
        %2339 = vrot.lane.b32.xlu0 %v1934, 96
        %v2340 = vpop.permute.xlu0 %2339
        %2341 = vrot.lane.b32.xlu0 %v1935, 96
        %v2342 = vpop.permute.xlu0 %2341
        %2343 = vrot.lane.b32.xlu0 %v1936, 96
        %v2344 = vpop.permute.xlu0 %2343
        %2345 = vrot.lane.b32.xlu0 %v1937, 96
        %v2346 = vpop.permute.xlu0 %2345
        %2347 = vrot.lane.b32.xlu0 %v1938, 96
        %v2348 = vpop.permute.xlu0 %2347
        %2349 = vrot.lane.b32.xlu0 %v1939, 96
        %v2350 = vpop.permute.xlu0 %2349
        %2351 = vrot.lane.b32.xlu0 %v1940, 96
        %v2352 = vpop.permute.xlu0 %2351
        %2353 = vrot.lane.b32.xlu0 %v1941, 96
        %v2354 = vpop.permute.xlu0 %2353
        %2355 = vrot.lane.b32.xlu0 %v1942, 96
        %v2356 = vpop.permute.xlu0 %2355
        %2357 = vrot.lane.b32.xlu0 %v1943, 96
        %v2358 = vpop.permute.xlu0 %2357
        %2359 = vrot.lane.b32.xlu0 %v1944, 96
        %v2360 = vpop.permute.xlu0 %2359
        %2361 = vrot.lane.b32.xlu0 %v1945, 96
        %v2362 = vpop.permute.xlu0 %2361
        %2363 = vrot.lane.b32.xlu0 %v1946, 96
        %v2364 = vpop.permute.xlu0 %2363
        %2365 = vrot.lane.b32.xlu0 %v1947, 96
        %v2366 = vpop.permute.xlu0 %2365
        %2367 = vrot.lane.b32.xlu0 %v1948, 96
        %v2368 = vpop.permute.xlu0 %2367
        %2369 = vrot.lane.b32.xlu0 %v1949, 96
        %v2370 = vpop.permute.xlu0 %2369
        %2435 = vrot.lane.b32.xlu0 %v1955, 32
        %v2436 = vpop.permute.xlu0 %2435
        %2437 = vrot.lane.b32.xlu0 %v1956, 32
        %v2438 = vpop.permute.xlu0 %2437
        %2439 = vrot.lane.b32.xlu0 %v1957, 32
        %v2440 = vpop.permute.xlu0 %2439
        %2441 = vrot.lane.b32.xlu0 %v1958, 32
        %v2442 = vpop.permute.xlu0 %2441
        %2443 = vrot.lane.b32.xlu0 %v1959, 32
        %v2444 = vpop.permute.xlu0 %2443
        %2445 = vrot.lane.b32.xlu0 %v1960, 32
        %v2446 = vpop.permute.xlu0 %2445
        %2447 = vrot.lane.b32.xlu0 %v1961, 32
        %v2448 = vpop.permute.xlu0 %2447
        %2449 = vrot.lane.b32.xlu0 %v1962, 32
        %v2450 = vpop.permute.xlu0 %2449
        %2451 = vrot.lane.b32.xlu0 %v1963, 32
        %v2452 = vpop.permute.xlu0 %2451
        %2453 = vrot.lane.b32.xlu0 %v1964, 32
        %v2454 = vpop.permute.xlu0 %2453
        %2455 = vrot.lane.b32.xlu0 %v1965, 32
        %v2456 = vpop.permute.xlu0 %2455
        %2457 = vrot.lane.b32.xlu0 %v1966, 32
        %v2458 = vpop.permute.xlu0 %2457
        %2459 = vrot.lane.b32.xlu0 %v1967, 32
        %v2460 = vpop.permute.xlu0 %2459
        %2461 = vrot.lane.b32.xlu0 %v1968, 32
        %v2462 = vpop.permute.xlu0 %2461
        %2463 = vrot.lane.b32.xlu0 %v1969, 32
        %v2464 = vpop.permute.xlu0 %2463
        %2465 = vrot.lane.b32.xlu0 %v1970, 32
        %v2466 = vpop.permute.xlu0 %2465
        %2467 = vrot.lane.b32.xlu0 %v1971, 32
        %v2468 = vpop.permute.xlu0 %2467
        %2469 = vrot.lane.b32.xlu0 %v1972, 32
        %v2470 = vpop.permute.xlu0 %2469
        %2471 = vrot.lane.b32.xlu0 %v1973, 32
        %v2472 = vpop.permute.xlu0 %2471
        %2473 = vrot.lane.b32.xlu0 %v1974, 32
        %v2474 = vpop.permute.xlu0 %2473
        %2475 = vrot.lane.b32.xlu0 %v1975, 32
        %v2476 = vpop.permute.xlu0 %2475
        %2477 = vrot.lane.b32.xlu0 %v1976, 32
        %v2478 = vpop.permute.xlu0 %2477
        %2479 = vrot.lane.b32.xlu0 %v1977, 32
        %v2480 = vpop.permute.xlu0 %2479
        %2481 = vrot.lane.b32.xlu0 %v1978, 32
        %v2482 = vpop.permute.xlu0 %2481
        %2483 = vrot.lane.b32.xlu0 %v1979, 32
        %v2484 = vpop.permute.xlu0 %2483
        %2485 = vrot.lane.b32.xlu0 %v1980, 32
        %v2486 = vpop.permute.xlu0 %2485
        %2487 = vrot.lane.b32.xlu0 %v1981, 32
        %v2488 = vpop.permute.xlu0 %2487
        %2489 = vrot.lane.b32.xlu0 %v1982, 32
        %v2490 = vpop.permute.xlu0 %2489
        %2491 = vrot.lane.b32.xlu0 %v1983, 32
        %v2492 = vpop.permute.xlu0 %2491
        %2493 = vrot.lane.b32.xlu0 %v1984, 32
        %v2494 = vpop.permute.xlu0 %2493
        %2495 = vrot.lane.b32.xlu0 %v1985, 32
        %v2496 = vpop.permute.xlu0 %2495
        %2497 = vrot.lane.b32.xlu0 %v1986, 32
        %v2498 = vpop.permute.xlu0 %2497
        %2563 = vrot.lane.b32.xlu0 %v1989, 64
        %v2564 = vpop.permute.xlu0 %2563
        %2565 = vrot.lane.b32.xlu0 %v1990, 64
        %v2566 = vpop.permute.xlu0 %2565
        %2567 = vrot.lane.b32.xlu0 %v1991, 64
        %v2568 = vpop.permute.xlu0 %2567
        %2569 = vrot.lane.b32.xlu0 %v1992, 64
        %v2570 = vpop.permute.xlu0 %2569
        %2571 = vrot.lane.b32.xlu0 %v1993, 64
        %v2572 = vpop.permute.xlu0 %2571
        %2573 = vrot.lane.b32.xlu0 %v1994, 64
        %v2574 = vpop.permute.xlu0 %2573
        %2575 = vrot.lane.b32.xlu0 %v1995, 64
        %v2576 = vpop.permute.xlu0 %2575
        %2577 = vrot.lane.b32.xlu0 %v1996, 64
        %v2578 = vpop.permute.xlu0 %2577
        %2579 = vrot.lane.b32.xlu0 %v1997, 64
        %v2580 = vpop.permute.xlu0 %2579
        %2581 = vrot.lane.b32.xlu0 %v1998, 64
        %v2582 = vpop.permute.xlu0 %2581
        %2583 = vrot.lane.b32.xlu0 %v1999, 64
        %v2584 = vpop.permute.xlu0 %2583
        %2585 = vrot.lane.b32.xlu0 %v2000, 64
        %v2586 = vpop.permute.xlu0 %2585
        %2587 = vrot.lane.b32.xlu0 %v2001, 64
        %v2588 = vpop.permute.xlu0 %2587
        %2589 = vrot.lane.b32.xlu0 %v2002, 64
        %v2590 = vpop.permute.xlu0 %2589
        %2591 = vrot.lane.b32.xlu0 %v2003, 64
        %v2592 = vpop.permute.xlu0 %2591
        %2593 = vrot.lane.b32.xlu0 %v2004, 64
        %v2594 = vpop.permute.xlu0 %2593
        %2595 = vrot.lane.b32.xlu0 %v2005, 64
        %v2596 = vpop.permute.xlu0 %2595
        %2597 = vrot.lane.b32.xlu0 %v2006, 64
        %v2598 = vpop.permute.xlu0 %2597
        %2599 = vrot.lane.b32.xlu0 %v2007, 64
        %v2600 = vpop.permute.xlu0 %2599
        %2601 = vrot.lane.b32.xlu0 %v2008, 64
        %v2602 = vpop.permute.xlu0 %2601
        %2603 = vrot.lane.b32.xlu0 %v2009, 64
        %v2604 = vpop.permute.xlu0 %2603
        %2605 = vrot.lane.b32.xlu0 %v2010, 64
        %v2606 = vpop.permute.xlu0 %2605
        %2607 = vrot.lane.b32.xlu0 %v2011, 64
        %v2608 = vpop.permute.xlu0 %2607
        %2609 = vrot.lane.b32.xlu0 %v2012, 64
        %v2610 = vpop.permute.xlu0 %2609
        %2611 = vrot.lane.b32.xlu0 %v2013, 64
        %v2612 = vpop.permute.xlu0 %2611
        %2613 = vrot.lane.b32.xlu0 %v2014, 64
        %v2614 = vpop.permute.xlu0 %2613
        %2615 = vrot.lane.b32.xlu0 %v2015, 64
        %v2616 = vpop.permute.xlu0 %2615
        %2617 = vrot.lane.b32.xlu0 %v2016, 64
        %v2618 = vpop.permute.xlu0 %2617
        %2619 = vrot.lane.b32.xlu0 %v2017, 64
        %v2620 = vpop.permute.xlu0 %2619
        %2621 = vrot.lane.b32.xlu0 %v2018, 64
        %v2622 = vpop.permute.xlu0 %2621
        %2623 = vrot.lane.b32.xlu0 %v2019, 64
        %v2624 = vpop.permute.xlu0 %2623
        %2625 = vrot.lane.b32.xlu0 %v2020, 64
        %v2626 = vpop.permute.xlu0 %2625
        %2659 = vrot.lane.b32.xlu0 %v992, 96
        %v2660 = vpop.permute.xlu0 %2659
        %2661 = vrot.lane.b32.xlu0 %v993, 96
        %v2662 = vpop.permute.xlu0 %2661
        %2663 = vrot.lane.b32.xlu0 %v994, 96
        %v2664 = vpop.permute.xlu0 %2663
        %2665 = vrot.lane.b32.xlu0 %v995, 96
        %v2666 = vpop.permute.xlu0 %2665
        %2667 = vrot.lane.b32.xlu0 %v996, 96
        %v2668 = vpop.permute.xlu0 %2667
        %2669 = vrot.lane.b32.xlu0 %v997, 96
        %v2670 = vpop.permute.xlu0 %2669
        %2671 = vrot.lane.b32.xlu0 %v998, 96
        %v2672 = vpop.permute.xlu0 %2671
        %2673 = vrot.lane.b32.xlu0 %v999, 96
        %v2674 = vpop.permute.xlu0 %2673
        %2675 = vrot.lane.b32.xlu0 %v1000, 96
        %v2676 = vpop.permute.xlu0 %2675
        %2677 = vrot.lane.b32.xlu0 %v1001, 96
        %v2678 = vpop.permute.xlu0 %2677
        %2679 = vrot.lane.b32.xlu0 %v1002, 96
        %v2680 = vpop.permute.xlu0 %2679
        %2681 = vrot.lane.b32.xlu0 %v1003, 96
        %v2682 = vpop.permute.xlu0 %2681
        %2683 = vrot.lane.b32.xlu0 %v1004, 96
        %v2684 = vpop.permute.xlu0 %2683
        %2685 = vrot.lane.b32.xlu0 %v1005, 96
        %v2686 = vpop.permute.xlu0 %2685
        %2687 = vrot.lane.b32.xlu0 %v1006, 96
        %v2688 = vpop.permute.xlu0 %2687
        %2689 = vrot.lane.b32.xlu0 %v1007, 96
        %v2690 = vpop.permute.xlu0 %2689
        %2691 = vrot.lane.b32.xlu0 %v1008, 96
        %v2692 = vpop.permute.xlu0 %2691
        %2693 = vrot.lane.b32.xlu0 %v1009, 96
        %v2694 = vpop.permute.xlu0 %2693
        %2695 = vrot.lane.b32.xlu0 %v1010, 96
        %v2696 = vpop.permute.xlu0 %2695
        %2697 = vrot.lane.b32.xlu0 %v1011, 96
        %v2698 = vpop.permute.xlu0 %2697
        %2699 = vrot.lane.b32.xlu0 %v1012, 96
        %v2700 = vpop.permute.xlu0 %2699
        %2701 = vrot.lane.b32.xlu0 %v1013, 96
        %v2702 = vpop.permute.xlu0 %2701
        %2703 = vrot.lane.b32.xlu0 %v1014, 96
        %v2704 = vpop.permute.xlu0 %2703
        %2705 = vrot.lane.b32.xlu0 %v1015, 96
        %v2706 = vpop.permute.xlu0 %2705
        %2707 = vrot.lane.b32.xlu0 %v1016, 96
        %v2708 = vpop.permute.xlu0 %2707
        %2709 = vrot.lane.b32.xlu0 %v1017, 96
        %v2710 = vpop.permute.xlu0 %2709
        %2711 = vrot.lane.b32.xlu0 %v1018, 96
        %v2712 = vpop.permute.xlu0 %2711
        %2713 = vrot.lane.b32.xlu0 %v1019, 96
        %v2714 = vpop.permute.xlu0 %2713
        %2715 = vrot.lane.b32.xlu0 %v1020, 96
        %v2716 = vpop.permute.xlu0 %2715
        %2717 = vrot.lane.b32.xlu0 %v1021, 96
        %v2718 = vpop.permute.xlu0 %2717
        %2719 = vrot.lane.b32.xlu0 0.0, 96
        %v2720 = vpop.permute.xlu0 %2719
        %v2752 = vsel %vm673, %v1752, %v2055
        %v2753 = vsel %vm673, %v1753, %v2055
        %v2754 = vsel %vm673, %v1754, %v2057
        %v2755 = vsel %vm673, %v1755, %v2059
        %v2756 = vsel %vm673, %v1756, %v2061
        %v2757 = vsel %vm673, %v1757, %v2063
        %v2758 = vsel %vm673, %v1758, %v2065
        %v2759 = vsel %vm673, %v1759, %v2067
        %v2760 = vsel %vm673, %v1760, %v2069
        %v2761 = vsel %vm673, %v1761, %v2071
        %v2762 = vsel %vm673, %v1762, %v2073
        %v2763 = vsel %vm673, %v1763, %v2075
        %v2764 = vsel %vm673, %v1764, %v2077
        %v2765 = vsel %vm673, %v1765, %v2079
        %v2766 = vsel %vm673, %v1766, %v2081
        %v2767 = vsel %vm673, %v1767, %v2083
        %v2768 = vsel %vm673, %v1768, %v2085
        %v2769 = vsel %vm673, %v1769, %v2087
        %v2770 = vsel %vm673, %v1770, %v2089
        %v2771 = vsel %vm673, %v1771, %v2091
        %v2772 = vsel %vm673, %v1772, %v2093
        %v2773 = vsel %vm673, %v1773, %v2095
        %v2774 = vsel %vm673, %v1774, %v2097
        %v2775 = vsel %vm673, %v1775, %v2099
        %v2776 = vsel %vm673, %v1776, %v2101
        %v2777 = vsel %vm673, %v1777, %v2103
        %v2778 = vsel %vm673, %v1778, %v2105
        %v2779 = vsel %vm673, %v1779, %v2107
        %v2780 = vsel %vm673, %v1780, %v2109
        %v2781 = vsel %vm673, %v1781, %v2111
        %v2782 = vsel %vm673, %v1782, %v2113
        %v2783 = vsel %vm673, %v1783, %v2115
        %vm2784 = vcmask 523264
        %v2785 = vsel %vm2784, %v2752, %v2180
        %v2786 = vsel %vm2784, %v2753, %v2182
        %v2787 = vsel %vm2784, %v2754, %v2184
        %v2788 = vsel %vm2784, %v2755, %v2186
        %v2789 = vsel %vm2784, %v2756, %v2188
        %v2790 = vsel %vm2784, %v2757, %v2190
        %v2791 = vsel %vm2784, %v2758, %v2192
        %v2792 = vsel %vm2784, %v2759, %v2194
        %v2793 = vsel %vm2784, %v2760, %v2196
        %v2794 = vsel %vm2784, %v2761, %v2198
        %v2795 = vsel %vm2784, %v2762, %v2200
        %v2796 = vsel %vm2784, %v2763, %v2202
        %v2797 = vsel %vm2784, %v2764, %v2204
        %v2798 = vsel %vm2784, %v2765, %v2206
        %v2799 = vsel %vm2784, %v2766, %v2208
        %v2800 = vsel %vm2784, %v2767, %v2210
        %v2801 = vsel %vm2784, %v2768, %v2212
        %v2802 = vsel %vm2784, %v2769, %v2214
        %v2803 = vsel %vm2784, %v2770, %v2216
        %v2804 = vsel %vm2784, %v2771, %v2218
        %v2805 = vsel %vm2784, %v2772, %v2220
        %v2806 = vsel %vm2784, %v2773, %v2222
        %v2807 = vsel %vm2784, %v2774, %v2224
        %v2808 = vsel %vm2784, %v2775, %v2226
        %v2809 = vsel %vm2784, %v2776, %v2228
        %v2810 = vsel %vm2784, %v2777, %v2230
        %v2811 = vsel %vm2784, %v2778, %v2232
        %v2812 = vsel %vm2784, %v2779, %v2234
        %v2813 = vsel %vm2784, %v2780, %v2236
        %v2814 = vsel %vm2784, %v2781, %v2238
        %v2815 = vsel %vm2784, %v2782, %v2240
        %v2816 = vsel %vm2784, %v2783, %v2242
        %vm2817 = vcmask 785408
        %v2818 = vsel %vm2817, %v2785, %v2308
        %v2819 = vsel %vm2817, %v2786, %v2310
        %v2820 = vsel %vm2817, %v2787, %v2312
        %v2821 = vsel %vm2817, %v2788, %v2314
        %v2822 = vsel %vm2817, %v2789, %v2316
        %v2823 = vsel %vm2817, %v2790, %v2318
        %v2824 = vsel %vm2817, %v2791, %v2320
        %v2825 = vsel %vm2817, %v2792, %v2322
        %v2826 = vsel %vm2817, %v2793, %v2324
        %v2827 = vsel %vm2817, %v2794, %v2326
        %v2828 = vsel %vm2817, %v2795, %v2328
        %v2829 = vsel %vm2817, %v2796, %v2330
        %v2830 = vsel %vm2817, %v2797, %v2332
        %v2831 = vsel %vm2817, %v2798, %v2334
        %v2832 = vsel %vm2817, %v2799, %v2336
        %v2833 = vsel %vm2817, %v2800, %v2338
        %v2834 = vsel %vm2817, %v2801, %v2340
        %v2835 = vsel %vm2817, %v2802, %v2342
        %v2836 = vsel %vm2817, %v2803, %v2344
        %v2837 = vsel %vm2817, %v2804, %v2346
        %v2838 = vsel %vm2817, %v2805, %v2348
        %v2839 = vsel %vm2817, %v2806, %v2350
        %v2840 = vsel %vm2817, %v2807, %v2352
        %v2841 = vsel %vm2817, %v2808, %v2354
        %v2842 = vsel %vm2817, %v2809, %v2356
        %v2843 = vsel %vm2817, %v2810, %v2358
        %v2844 = vsel %vm2817, %v2811, %v2360
        %v2845 = vsel %vm2817, %v2812, %v2362
        %v2846 = vsel %vm2817, %v2813, %v2364
        %v2847 = vsel %vm2817, %v2814, %v2366
        %v2848 = vsel %vm2817, %v2815, %v2368
        %v2849 = vsel %vm2817, %v2816, %v2370
        %v2850 = vsel %vm673, %v990, %v2436
        %v2851 = vsel %vm673, %v991, %v2438
        %v2852 = vsel %vm673, %v992, %v2440
        %v2853 = vsel %vm673, %v993, %v2442
        %v2854 = vsel %vm673, %v994, %v2444
        %v2855 = vsel %vm673, %v995, %v2446
        %v2856 = vsel %vm673, %v996, %v2448
        %v2857 = vsel %vm673, %v997, %v2450
        %v2858 = vsel %vm673, %v998, %v2452
        %v2859 = vsel %vm673, %v999, %v2454
        %v2860 = vsel %vm673, %v1000, %v2456
        %v2861 = vsel %vm673, %v1001, %v2458
        %v2862 = vsel %vm673, %v1002, %v2460
        %v2863 = vsel %vm673, %v1003, %v2462
        %v2864 = vsel %vm673, %v1004, %v2464
        %v2865 = vsel %vm673, %v1005, %v2466
        %v2866 = vsel %vm673, %v1006, %v2468
        %v2867 = vsel %vm673, %v1007, %v2470
        %v2868 = vsel %vm673, %v1008, %v2472
        %v2869 = vsel %vm673, %v1009, %v2474
        %v2870 = vsel %vm673, %v1010, %v2476
        %v2871 = vsel %vm673, %v1011, %v2478
        %v2872 = vsel %vm673, %v1012, %v2480
        %v2873 = vsel %vm673, %v1013, %v2482
        %v2874 = vsel %vm673, %v1014, %v2484
        %v2875 = vsel %vm673, %v1015, %v2486
        %v2876 = vsel %vm673, %v1016, %v2488
        %v2877 = vsel %vm673, %v1017, %v2490
        %v2878 = vsel %vm673, %v1018, %v2492
        %v2879 = vsel %vm673, %v1019, %v2494
        %v2880 = vsel %vm673, %v1020, %v2496
        %v2881 = vsel %vm673, %v1021, %v2498
        %v2882 = vsel %vm2784, %v2850, %v2564
        %v2883 = vsel %vm2784, %v2851, %v2566
        %v2884 = vsel %vm2784, %v2852, %v2568
        %v2885 = vsel %vm2784, %v2853, %v2570
        %v2886 = vsel %vm2784, %v2854, %v2572
        %v2887 = vsel %vm2784, %v2855, %v2574
        %v2888 = vsel %vm2784, %v2856, %v2576
        %v2889 = vsel %vm2784, %v2857, %v2578
        %v2890 = vsel %vm2784, %v2858, %v2580
        %v2891 = vsel %vm2784, %v2859, %v2582
        %v2892 = vsel %vm2784, %v2860, %v2584
        %v2893 = vsel %vm2784, %v2861, %v2586
        %v2894 = vsel %vm2784, %v2862, %v2588
        %v2895 = vsel %vm2784, %v2863, %v2590
        %v2896 = vsel %vm2784, %v2864, %v2592
        %v2897 = vsel %vm2784, %v2865, %v2594
        %v2898 = vsel %vm2784, %v2866, %v2596
        %v2899 = vsel %vm2784, %v2867, %v2598
        %v2900 = vsel %vm2784, %v2868, %v2600
        %v2901 = vsel %vm2784, %v2869, %v2602
        %v2902 = vsel %vm2784, %v2870, %v2604
        %v2903 = vsel %vm2784, %v2871, %v2606
        %v2904 = vsel %vm2784, %v2872, %v2608
        %v2905 = vsel %vm2784, %v2873, %v2610
        %v2906 = vsel %vm2784, %v2874, %v2612
        %v2907 = vsel %vm2784, %v2875, %v2614
        %v2908 = vsel %vm2784, %v2876, %v2616
        %v2909 = vsel %vm2784, %v2877, %v2618
        %v2910 = vsel %vm2784, %v2878, %v2620
        %v2911 = vsel %vm2784, %v2879, %v2622
        %v2912 = vsel %vm2784, %v2880, %v2624
        %v2913 = vsel %vm2784, %v2881, %v2626
        %v2914 = vsel %vm2817, %v2882, %v2660
        %v2915 = vsel %vm2817, %v2883, %v2662
        %v2916 = vsel %vm2817, %v2884, %v2664
        %v2917 = vsel %vm2817, %v2885, %v2666
        %v2918 = vsel %vm2817, %v2886, %v2668
        %v2919 = vsel %vm2817, %v2887, %v2670
        %v2920 = vsel %vm2817, %v2888, %v2672
        %v2921 = vsel %vm2817, %v2889, %v2674
        %v2922 = vsel %vm2817, %v2890, %v2676
        %v2923 = vsel %vm2817, %v2891, %v2678
        %v2924 = vsel %vm2817, %v2892, %v2680
        %v2925 = vsel %vm2817, %v2893, %v2682
        %v2926 = vsel %vm2817, %v2894, %v2684
        %v2927 = vsel %vm2817, %v2895, %v2686
        %v2928 = vsel %vm2817, %v2896, %v2688
        %v2929 = vsel %vm2817, %v2897, %v2690
        %v2930 = vsel %vm2817, %v2898, %v2692
        %v2931 = vsel %vm2817, %v2899, %v2694
        %v2932 = vsel %vm2817, %v2900, %v2696
        %v2933 = vsel %vm2817, %v2901, %v2698
        %v2934 = vsel %vm2817, %v2902, %v2700
        %v2935 = vsel %vm2817, %v2903, %v2702
        %v2936 = vsel %vm2817, %v2904, %v2704
        %v2937 = vsel %vm2817, %v2905, %v2706
        %v2938 = vsel %vm2817, %v2906, %v2708
        %v2939 = vsel %vm2817, %v2907, %v2710
        %v2940 = vsel %vm2817, %v2908, %v2712
        %v2941 = vsel %vm2817, %v2909, %v2714
        %v2942 = vsel %vm2817, %v2910, %v2716
        %v2943 = vsel %vm2817, %v2911, %v2718
        %v2944 = vsel %vm2817, %v2912, %v2720
        %v2945 = vsel %vm2817, %v2913, %v2720
        %v2946 = vld [vmem:[%s2] sm:$0xff]
        %v2947 = vld [vmem:[%s2 + $0x8] sm:$0xff]
        %v2948 = vld [vmem:[%s2 + $0x10] sm:$0xff]
        %v2949 = vld [vmem:[%s2 + $0x18] sm:$0xff]
        %v2950 = vld [vmem:[%s2 + $0x20] sm:$0xff]
        %v2951 = vld [vmem:[%s2 + $0x28] sm:$0xff]
        %v2952 = vld [vmem:[%s2 + $0x30] sm:$0xff]
        %v2953 = vld [vmem:[%s2 + $0x38] sm:$0xff]
        %v2954 = vld [vmem:[%s2 + $0x40] sm:$0xff]
        %v2955 = vld [vmem:[%s2 + $0x48] sm:$0xff]
        %v2956 = vld [vmem:[%s2 + $0x50] sm:$0xff]
        %v2957 = vld [vmem:[%s2 + $0x58] sm:$0xff]
        %v2958 = vld [vmem:[%s2 + $0x60] sm:$0xff]
        %v2959 = vld [vmem:[%s2 + $0x68] sm:$0xff]
        %v2960 = vld [vmem:[%s2 + $0x70] sm:$0xff]
        %v2961 = vld [vmem:[%s2 + $0x78] sm:$0xff]
        %v2962 = vld [vmem:[%s2 + $0x80] sm:$0xff]
        %v2963 = vld [vmem:[%s2 + $0x88] sm:$0xff]
        %v2964 = vld [vmem:[%s2 + $0x90] sm:$0xff]
        %v2965 = vld [vmem:[%s2 + $0x98] sm:$0xff]
        %v2966 = vld [vmem:[%s2 + $0xa0] sm:$0xff]
        %v2967 = vld [vmem:[%s2 + $0xa8] sm:$0xff]
        %v2968 = vld [vmem:[%s2 + $0xb0] sm:$0xff]
        %v2969 = vld [vmem:[%s2 + $0xb8] sm:$0xff]
        %v2970 = vld [vmem:[%s2 + $0xc0] sm:$0xff]
        %v2971 = vld [vmem:[%s2 + $0xc8] sm:$0xff]
        %v2972 = vld [vmem:[%s2 + $0xd0] sm:$0xff]
        %v2973 = vld [vmem:[%s2 + $0xd8] sm:$0xff]
        %v2974 = vld [vmem:[%s2 + $0xe0] sm:$0xff]
        %v2975 = vld [vmem:[%s2 + $0xe8] sm:$0xff]
        %v2976 = vld [vmem:[%s2 + $0xf0] sm:$0xff]
        %v2977 = vld [vmem:[%s2 + $0xf8] sm:$0xff]
        %v2978 = vld [vmem:[%s2 + $0x100] sm:$0xff]
        %v2979 = vld [vmem:[%s2 + $0x108] sm:$0xff]
        %v2980 = vld [vmem:[%s2 + $0x110] sm:$0xff]
        %v2981 = vld [vmem:[%s2 + $0x118] sm:$0xff]
        %v2983 = vsel %vm673, %v2021, 0
        %v2986 = vsel %vm673, %v2022, 0
        %v2989 = vsel %vm673, %v2023, 0
        %v2992 = vsel %vm673, %v2024, 0
        %v2995 = vsel %vm673, %v2025, 0
        %v2998 = vsel %vm673, %v2026, 0
        %v3001 = vsel %vm673, %v2027, 0
        %v3004 = vsel %vm673, %v2028, 0
        %v3007 = vsel %vm673, %v2029, 0
        %v3010 = vsel %vm673, %v2030, 0
        %v3013 = vsel %vm673, %v2031, 0
        %v3016 = vsel %vm673, %v2032, 0
        %v3019 = vsel %vm673, %v2033, 0
        %v3022 = vsel %vm673, %v2034, 0
        %v3025 = vsel %vm673, %v2035, 0
        %v3028 = vsel %vm673, %v2036, 0
        %v3031 = vsel %vm673, %v2037, 0
        %v3034 = vsel %vm673, %v2038, 0
        %v3037 = vsel %vm673, %v2039, 0
        %v3040 = vsel %vm673, %v2040, 0
        %v3043 = vsel %vm673, %v2041, 0
        %v3046 = vsel %vm673, %v2042, 0
        %v3049 = vsel %vm673, %v2043, 0
        %v3052 = vsel %vm673, %v2044, 0
        %v3055 = vsel %vm673, %v2045, 0
        %v3058 = vsel %vm673, %v2046, 0
        %v3061 = vsel %vm673, %v2047, 0
        %v3064 = vsel %vm673, %v2048, 0
        %v3067 = vsel %vm673, %v2049, 0
        %v3070 = vsel %vm673, %v2050, 0
        %v3073 = vsel %vm673, %v2051, 0
        %v3076 = vsel %vm673, %v2052, 0
        %3078 = vmatprep.subr.mxu0 0.0
        %3079 = vmatpush1.msra.mxu0 %v2961
        %3080 = vmatprep.subr.mxu0 0.0
        %3081 = vmatpush1.msra.mxu0 %v2960
        %3082 = vmatprep.subr.mxu0 0.0
        %3083 = vmatpush1.msra.mxu0 %v2959
        %3084 = vmatprep.subr.mxu0 0.0
        %3085 = vmatpush1.msra.mxu0 %v2958
        %3086 = vmatprep.subr.mxu0 0.0
        %3087 = vmatpush1.msra.mxu0 %v2957
        %3088 = vmatprep.subr.mxu0 0.0
        %3089 = vmatpush1.msra.mxu0 %v2956
        %3090 = vmatprep.subr.mxu0 0.0
        %3091 = vmatpush1.msra.mxu0 %v2955
        %3092 = vmatprep.subr.mxu0 0.0
        %3093 = vmatpush1.msra.mxu0 %v2954
        %3094 = vmatprep.subr.mxu0 0.0
        %3095 = vmatpush1.msra.mxu0 %v2953
        %3096 = vmatprep.subr.mxu0 0.0
        %3097 = vmatpush1.msra.mxu0 %v2952
        %3098 = vmatprep.subr.mxu0 0.0
        %3099 = vmatpush1.msra.mxu0 %v2951
        %3100 = vmatprep.subr.mxu0 0.0
        %3101 = vmatpush1.msra.mxu0 %v2950
        %3102 = vmatprep.subr.mxu0 0.0
        %3103 = vmatpush1.msra.mxu0 %v2949
        %3104 = vmatprep.subr.mxu0 0.0
        %3105 = vmatpush1.msra.mxu0 %v2948
        %3106 = vmatprep.subr.mxu0 0.0
        %3107 = vmatpush1.msra.mxu0 %v2947
        %3108 = vmatprep.subr.mxu0 0.0
        %3109 = vmatpush1.msra.mxu0 %v2946
        %3110 = vmatprep.subr.mxu0 0.0
        %3111 = vmatpush2.msra.mxu0 %v2977
        %3112 = vmatprep.subr.mxu0 0.0
        %3113 = vmatpush2.msra.mxu0 %v2976
        %3114 = vmatprep.subr.mxu0 0.0
        %3115 = vmatpush2.msra.mxu0 %v2975
        %3116 = vmatprep.subr.mxu0 0.0
        %3117 = vmatpush2.msra.mxu0 %v2974
        %3118 = vmatprep.subr.mxu0 0.0
        %3119 = vmatpush2.msra.mxu0 %v2973
        %3120 = vmatprep.subr.mxu0 0.0
        %3121 = vmatpush2.msra.mxu0 %v2972
        %3122 = vmatprep.subr.mxu0 0.0
        %3123 = vmatpush2.msra.mxu0 %v2971
        %3124 = vmatprep.subr.mxu0 0.0
        %3125 = vmatpush2.msra.mxu0 %v2970
        %3126 = vmatprep.subr.mxu0 0.0
        %3127 = vmatpush2.msra.mxu0 %v2969
        %3128 = vmatprep.subr.mxu0 0.0
        %3129 = vmatpush2.msra.mxu0 %v2968
        %3130 = vmatprep.subr.mxu0 0.0
        %3131 = vmatpush2.msra.mxu0 %v2967
        %3132 = vmatprep.subr.mxu0 0.0
        %3133 = vmatpush2.msra.mxu0 %v2966
        %3134 = vmatprep.subr.mxu0 0.0
        %3135 = vmatpush2.msra.mxu0 %v2965
        %3136 = vmatprep.subr.mxu0 0.0
        %3137 = vmatpush2.msra.mxu0 %v2964
        %3138 = vmatprep.subr.mxu0 0.0
        %3139 = vmatpush2.msra.mxu0 %v2963
        %3140 = vmatprep.subr.mxu0 0.0
        %3141 = vmatpush2.msra.mxu0 %v2962
        %3142 = vmatprep.mubr.f32.mxu0 %v2914
        %3143 = vmatmul.mubr.f32.gmra.mxu0 %v2818
        %v3144 = vpop.f32.mrf.mxu0
        %v3145 = vadd.f32 0.0, %v3144
        %v3146 = vpop.f32.mrf.mxu0
        %3147 = vmatprep.mubr.f32.mxu0 %v2915
        %3148 = vmatmul.mubr.f32.gmra.mxu0 %v2819
        %v3149 = vpop.f32.mrf.mxu0
        %v3150 = vadd.f32 0.0, %v3149
        %v3151 = vpop.f32.mrf.mxu0
        %3152 = vmatprep.mubr.f32.mxu0 %v2916
        %3153 = vmatmul.mubr.f32.gmra.mxu0 %v2820
        %v3154 = vpop.f32.mrf.mxu0
        %v3155 = vadd.f32 0.0, %v3154
        %v3156 = vpop.f32.mrf.mxu0
        %3157 = vmatprep.mubr.f32.mxu0 %v2917
        %3158 = vmatmul.mubr.f32.gmra.mxu0 %v2821
        %v3159 = vpop.f32.mrf.mxu0
        %v3160 = vadd.f32 0.0, %v3159
        %v3161 = vpop.f32.mrf.mxu0
        %3162 = vmatprep.mubr.f32.mxu0 %v2918
        %3163 = vmatmul.mubr.f32.gmra.mxu0 %v2822
        %v3164 = vpop.f32.mrf.mxu0
        %v3165 = vadd.f32 0.0, %v3164
        %v3166 = vpop.f32.mrf.mxu0
        %3167 = vmatprep.mubr.f32.mxu0 %v2919
        %3168 = vmatmul.mubr.f32.gmra.mxu0 %v2823
        %v3169 = vpop.f32.mrf.mxu0
        %v3170 = vadd.f32 0.0, %v3169
        %v3171 = vpop.f32.mrf.mxu0
        %3172 = vmatprep.mubr.f32.mxu0 %v2920
        %3173 = vmatmul.mubr.f32.gmra.mxu0 %v2824
        %v3174 = vpop.f32.mrf.mxu0
        %v3175 = vadd.f32 0.0, %v3174
        %v3176 = vpop.f32.mrf.mxu0
        %3177 = vmatprep.mubr.f32.mxu0 %v2921
        %3178 = vmatmul.mubr.f32.gmra.mxu0 %v2825
        %v3179 = vpop.f32.mrf.mxu0
        %v3180 = vadd.f32 0.0, %v3179
        %v3181 = vpop.f32.mrf.mxu0
        %3182 = vmatprep.mubr.f32.mxu0 %v2922
        %3183 = vmatmul.mubr.f32.gmra.mxu0 %v2826
        %v3184 = vpop.f32.mrf.mxu0
        %v3185 = vadd.f32 0.0, %v3184
        %v3186 = vpop.f32.mrf.mxu0
        %3187 = vmatprep.mubr.f32.mxu0 %v2923
        %3188 = vmatmul.mubr.f32.gmra.mxu0 %v2827
        %v3189 = vpop.f32.mrf.mxu0
        %v3190 = vadd.f32 0.0, %v3189
        %v3191 = vpop.f32.mrf.mxu0
        %3192 = vmatprep.mubr.f32.mxu0 %v2924
        %3193 = vmatmul.mubr.f32.gmra.mxu0 %v2828
        %v3194 = vpop.f32.mrf.mxu0
        %v3195 = vadd.f32 0.0, %v3194
        %v3196 = vpop.f32.mrf.mxu0
        %3197 = vmatprep.mubr.f32.mxu0 %v2925
        %3198 = vmatmul.mubr.f32.gmra.mxu0 %v2829
        %v3199 = vpop.f32.mrf.mxu0
        %v3200 = vadd.f32 0.0, %v3199
        %v3201 = vpop.f32.mrf.mxu0
        %3202 = vmatprep.mubr.f32.mxu0 %v2926
        %3203 = vmatmul.mubr.f32.gmra.mxu0 %v2830
        %v3204 = vpop.f32.mrf.mxu0
        %v3205 = vadd.f32 0.0, %v3204
        %v3206 = vpop.f32.mrf.mxu0
        %3207 = vmatprep.mubr.f32.mxu0 %v2927
        %3208 = vmatmul.mubr.f32.gmra.mxu0 %v2831
        %v3209 = vpop.f32.mrf.mxu0
        %v3210 = vadd.f32 0.0, %v3209
        %v3211 = vpop.f32.mrf.mxu0
        %3212 = vmatprep.mubr.f32.mxu0 %v2928
        %3213 = vmatmul.mubr.f32.gmra.mxu0 %v2832
        %v3214 = vpop.f32.mrf.mxu0
        %v3215 = vadd.f32 0.0, %v3214
        %v3216 = vpop.f32.mrf.mxu0
        %3217 = vmatprep.mubr.f32.mxu0 %v2929
        %3218 = vmatmul.mubr.f32.gmra.mxu0 %v2833
        %v3219 = vpop.f32.mrf.mxu0
        %v3220 = vadd.f32 0.0, %v3219
        %v3221 = vpop.f32.mrf.mxu0
        %3222 = vmatprep.mubr.f32.mxu0 %v2930
        %3223 = vmatmul.mubr.f32.gmra.mxu0 %v2834
        %v3224 = vpop.f32.mrf.mxu0
        %v3225 = vadd.f32 0.0, %v3224
        %v3226 = vpop.f32.mrf.mxu0
        %3227 = vmatprep.mubr.f32.mxu0 %v2931
        %3228 = vmatmul.mubr.f32.gmra.mxu0 %v2835
        %v3229 = vpop.f32.mrf.mxu0
        %v3230 = vadd.f32 0.0, %v3229
        %v3231 = vpop.f32.mrf.mxu0
        %3232 = vmatprep.mubr.f32.mxu0 %v2932
        %3233 = vmatmul.mubr.f32.gmra.mxu0 %v2836
        %v3234 = vpop.f32.mrf.mxu0
        %v3235 = vadd.f32 0.0, %v3234
        %v3236 = vpop.f32.mrf.mxu0
        %3237 = vmatprep.mubr.f32.mxu0 %v2933
        %3238 = vmatmul.mubr.f32.gmra.mxu0 %v2837
        %v3239 = vpop.f32.mrf.mxu0
        %v3240 = vadd.f32 0.0, %v3239
        %v3241 = vpop.f32.mrf.mxu0
        %3242 = vmatprep.mubr.f32.mxu0 %v2934
        %3243 = vmatmul.mubr.f32.gmra.mxu0 %v2838
        %v3244 = vpop.f32.mrf.mxu0
        %v3245 = vadd.f32 0.0, %v3244
        %v3246 = vpop.f32.mrf.mxu0
        %3247 = vmatprep.mubr.f32.mxu0 %v2935
        %3248 = vmatmul.mubr.f32.gmra.mxu0 %v2839
        %v3249 = vpop.f32.mrf.mxu0
        %v3250 = vadd.f32 0.0, %v3249
        %v3251 = vpop.f32.mrf.mxu0
        %3252 = vmatprep.mubr.f32.mxu0 %v2936
        %3253 = vmatmul.mubr.f32.gmra.mxu0 %v2840
        %v3254 = vpop.f32.mrf.mxu0
        %v3255 = vadd.f32 0.0, %v3254
        %v3256 = vpop.f32.mrf.mxu0
        %3257 = vmatprep.mubr.f32.mxu0 %v2937
        %3258 = vmatmul.mubr.f32.gmra.mxu0 %v2841
        %v3259 = vpop.f32.mrf.mxu0
        %v3260 = vadd.f32 0.0, %v3259
        %v3261 = vpop.f32.mrf.mxu0
        %3262 = vmatprep.mubr.f32.mxu0 %v2938
        %3263 = vmatmul.mubr.f32.gmra.mxu0 %v2842
        %v3264 = vpop.f32.mrf.mxu0
        %v3265 = vadd.f32 0.0, %v3264
        %v3266 = vpop.f32.mrf.mxu0
        %3267 = vmatprep.mubr.f32.mxu0 %v2939
        %3268 = vmatmul.mubr.f32.gmra.mxu0 %v2843
        %v3269 = vpop.f32.mrf.mxu0
        %v3270 = vadd.f32 0.0, %v3269
        %v3271 = vpop.f32.mrf.mxu0
        %3272 = vmatprep.mubr.f32.mxu0 %v2940
        %3273 = vmatmul.mubr.f32.gmra.mxu0 %v2844
        %v3274 = vpop.f32.mrf.mxu0
        %v3275 = vadd.f32 0.0, %v3274
        %v3276 = vpop.f32.mrf.mxu0
        %3277 = vmatprep.mubr.f32.mxu0 %v2941
        %3278 = vmatmul.mubr.f32.gmra.mxu0 %v2845
        %v3279 = vpop.f32.mrf.mxu0
        %v3280 = vadd.f32 0.0, %v3279
        %v3281 = vpop.f32.mrf.mxu0
        %3282 = vmatprep.mubr.f32.mxu0 %v2942
        %3283 = vmatmul.mubr.f32.gmra.mxu0 %v2846
        %v3284 = vpop.f32.mrf.mxu0
        %v3285 = vadd.f32 0.0, %v3284
        %v3286 = vpop.f32.mrf.mxu0
        %3287 = vmatprep.mubr.f32.mxu0 %v2943
        %3288 = vmatmul.mubr.f32.gmra.mxu0 %v2847
        %v3289 = vpop.f32.mrf.mxu0
        %v3290 = vadd.f32 0.0, %v3289
        %v3291 = vpop.f32.mrf.mxu0
        %3292 = vmatprep.mubr.f32.mxu0 %v2944
        %3293 = vmatmul.mubr.f32.gmra.mxu0 %v2848
        %v3294 = vpop.f32.mrf.mxu0
        %v3295 = vadd.f32 0.0, %v3294
        %v3296 = vpop.f32.mrf.mxu0
        %3297 = vmatprep.mubr.f32.mxu0 %v2945
        %3298 = vmatmul.mubr.f32.gmra.mxu0 %v2849
        %v3299 = vpop.f32.mrf.mxu0
        %v3300 = vadd.f32 0.0, %v3299
        %v3301 = vpop.f32.mrf.mxu0
        %3302 = vdwg.mxu0
        %3303 = vmatprep.subr.mxu0 0.0
        %3304 = vmatpush1.msra.mxu0 0.0
        %3305 = vmatprep.subr.mxu0 0.0
        %3306 = vmatpush1.msra.mxu0 0.0
        %3307 = vmatprep.subr.mxu0 0.0
        %3308 = vmatpush1.msra.mxu0 0.0
        %3309 = vmatprep.subr.mxu0 0.0
        %3310 = vmatpush1.msra.mxu0 0.0
        %3311 = vmatprep.subr.mxu0 0.0
        %3312 = vmatpush1.msra.mxu0 0.0
        %3313 = vmatprep.subr.mxu0 0.0
        %3314 = vmatpush1.msra.mxu0 0.0
        %3315 = vmatprep.subr.mxu0 0.0
        %3316 = vmatpush1.msra.mxu0 0.0
        %3317 = vmatprep.subr.mxu0 0.0
        %3318 = vmatpush1.msra.mxu0 0.0
        %3319 = vmatprep.subr.mxu0 0.0
        %3320 = vmatpush1.msra.mxu0 0.0
        %3321 = vmatprep.subr.mxu0 0.0
        %3322 = vmatpush1.msra.mxu0 0.0
        %3323 = vmatprep.subr.mxu0 0.0
        %3324 = vmatpush1.msra.mxu0 0.0
        %3325 = vmatprep.subr.mxu0 0.0
        %3326 = vmatpush1.msra.mxu0 0.0
        %3327 = vmatprep.subr.mxu0 0.0
        %3328 = vmatpush1.msra.mxu0 %v2981
        %3329 = vmatprep.subr.mxu0 0.0
        %3330 = vmatpush1.msra.mxu0 %v2980
        %3331 = vmatprep.subr.mxu0 0.0
        %3332 = vmatpush1.msra.mxu0 %v2979
        %3333 = vmatprep.subr.mxu0 0.0
        %3334 = vmatpush1.msra.mxu0 %v2978
        %3335 = vmatprep.subr.mxu0 0.0
        %3336 = vmatpush2.msra.mxu0 0.0
        %3337 = vmatprep.subr.mxu0 0.0
        %3338 = vmatpush2.msra.mxu0 0.0
        %3339 = vmatprep.subr.mxu0 0.0
        %3340 = vmatpush2.msra.mxu0 0.0
        %3341 = vmatprep.subr.mxu0 0.0
        %3342 = vmatpush2.msra.mxu0 0.0
        %3343 = vmatprep.subr.mxu0 0.0
        %3344 = vmatpush2.msra.mxu0 0.0
        %3345 = vmatprep.subr.mxu0 0.0
        %3346 = vmatpush2.msra.mxu0 0.0
        %3347 = vmatprep.subr.mxu0 0.0
        %3348 = vmatpush2.msra.mxu0 0.0
        %3349 = vmatprep.subr.mxu0 0.0
        %3350 = vmatpush2.msra.mxu0 0.0
        %3351 = vmatprep.subr.mxu0 0.0
        %3352 = vmatpush2.msra.mxu0 0.0
        %3353 = vmatprep.subr.mxu0 0.0
        %3354 = vmatpush2.msra.mxu0 0.0
        %3355 = vmatprep.subr.mxu0 0.0
        %3356 = vmatpush2.msra.mxu0 0.0
        %3357 = vmatprep.subr.mxu0 0.0
        %3358 = vmatpush2.msra.mxu0 0.0
        %3359 = vmatprep.subr.mxu0 0.0
        %3360 = vmatpush2.msra.mxu0 0.0
        %3361 = vmatprep.subr.mxu0 0.0
        %3362 = vmatpush2.msra.mxu0 0.0
        %3363 = vmatprep.subr.mxu0 0.0
        %3364 = vmatpush2.msra.mxu0 0.0
        %3365 = vmatprep.subr.mxu0 0.0
        %3366 = vmatpush2.msra.mxu0 0.0
        %3367 = vmatprep.mubr.f32.mxu0 0.0
        %3368 = vmatmul.mubr.f32.gmra.mxu0 %v2983
        %v3369 = vpop.f32.mrf.mxu0
        %v3370 = vadd.f32 %v3145, %v3369
        %v3371 = vpop.f32.mrf.mxu0
        %3372 = vmatprep.mubr.f32.mxu0 0.0
        %3373 = vmatmul.mubr.f32.gmra.mxu0 %v2986
        %v3374 = vpop.f32.mrf.mxu0
        %v3375 = vadd.f32 %v3150, %v3374
        %v3376 = vpop.f32.mrf.mxu0
        %3377 = vmatprep.mubr.f32.mxu0 0.0
        %3378 = vmatmul.mubr.f32.gmra.mxu0 %v2989
        %v3379 = vpop.f32.mrf.mxu0
        %v3380 = vadd.f32 %v3155, %v3379
        %v3381 = vpop.f32.mrf.mxu0
        %3382 = vmatprep.mubr.f32.mxu0 0.0
        %3383 = vmatmul.mubr.f32.gmra.mxu0 %v2992
        %v3384 = vpop.f32.mrf.mxu0
        %v3385 = vadd.f32 %v3160, %v3384
        %v3386 = vpop.f32.mrf.mxu0
        %3387 = vmatprep.mubr.f32.mxu0 0.0
        %3388 = vmatmul.mubr.f32.gmra.mxu0 %v2995
        %v3389 = vpop.f32.mrf.mxu0
        %v3390 = vadd.f32 %v3165, %v3389
        %v3391 = vpop.f32.mrf.mxu0
        %3392 = vmatprep.mubr.f32.mxu0 0.0
        %3393 = vmatmul.mubr.f32.gmra.mxu0 %v2998
        %v3394 = vpop.f32.mrf.mxu0
        %v3395 = vadd.f32 %v3170, %v3394
        %v3396 = vpop.f32.mrf.mxu0
        %3397 = vmatprep.mubr.f32.mxu0 0.0
        %3398 = vmatmul.mubr.f32.gmra.mxu0 %v3001
        %v3399 = vpop.f32.mrf.mxu0
        %v3400 = vadd.f32 %v3175, %v3399
        %v3401 = vpop.f32.mrf.mxu0
        %3402 = vmatprep.mubr.f32.mxu0 0.0
        %3403 = vmatmul.mubr.f32.gmra.mxu0 %v3004
        %v3404 = vpop.f32.mrf.mxu0
        %v3405 = vadd.f32 %v3180, %v3404
        %v3406 = vpop.f32.mrf.mxu0
        %3407 = vmatprep.mubr.f32.mxu0 0.0
        %3408 = vmatmul.mubr.f32.gmra.mxu0 %v3007
        %v3409 = vpop.f32.mrf.mxu0
        %v3410 = vadd.f32 %v3185, %v3409
        %v3411 = vpop.f32.mrf.mxu0
        %3412 = vmatprep.mubr.f32.mxu0 0.0
        %3413 = vmatmul.mubr.f32.gmra.mxu0 %v3010
        %v3414 = vpop.f32.mrf.mxu0
        %v3415 = vadd.f32 %v3190, %v3414
        %v3416 = vpop.f32.mrf.mxu0
        %3417 = vmatprep.mubr.f32.mxu0 0.0
        %3418 = vmatmul.mubr.f32.gmra.mxu0 %v3013
        %v3419 = vpop.f32.mrf.mxu0
        %v3420 = vadd.f32 %v3195, %v3419
        %v3421 = vpop.f32.mrf.mxu0
        %3422 = vmatprep.mubr.f32.mxu0 0.0
        %3423 = vmatmul.mubr.f32.gmra.mxu0 %v3016
        %v3424 = vpop.f32.mrf.mxu0
        %v3425 = vadd.f32 %v3200, %v3424
        %v3426 = vpop.f32.mrf.mxu0
        %3427 = vmatprep.mubr.f32.mxu0 0.0
        %3428 = vmatmul.mubr.f32.gmra.mxu0 %v3019
        %v3429 = vpop.f32.mrf.mxu0
        %v3430 = vadd.f32 %v3205, %v3429
        %v3431 = vpop.f32.mrf.mxu0
        %3432 = vmatprep.mubr.f32.mxu0 0.0
        %3433 = vmatmul.mubr.f32.gmra.mxu0 %v3022
        %v3434 = vpop.f32.mrf.mxu0
        %v3435 = vadd.f32 %v3210, %v3434
        %v3436 = vpop.f32.mrf.mxu0
        %3437 = vmatprep.mubr.f32.mxu0 0.0
        %3438 = vmatmul.mubr.f32.gmra.mxu0 %v3025
        %v3439 = vpop.f32.mrf.mxu0
        %v3440 = vadd.f32 %v3215, %v3439
        %v3441 = vpop.f32.mrf.mxu0
        %3442 = vmatprep.mubr.f32.mxu0 0.0
        %3443 = vmatmul.mubr.f32.gmra.mxu0 %v3028
        %v3444 = vpop.f32.mrf.mxu0
        %v3445 = vadd.f32 %v3220, %v3444
        %v3446 = vpop.f32.mrf.mxu0
        %3447 = vmatprep.mubr.f32.mxu0 0.0
        %3448 = vmatmul.mubr.f32.gmra.mxu0 %v3031
        %v3449 = vpop.f32.mrf.mxu0
        %v3450 = vadd.f32 %v3225, %v3449
        %v3451 = vpop.f32.mrf.mxu0
        %3452 = vmatprep.mubr.f32.mxu0 0.0
        %3453 = vmatmul.mubr.f32.gmra.mxu0 %v3034
        %v3454 = vpop.f32.mrf.mxu0
        %v3455 = vadd.f32 %v3230, %v3454
        %v3456 = vpop.f32.mrf.mxu0
        %3457 = vmatprep.mubr.f32.mxu0 0.0
        %3458 = vmatmul.mubr.f32.gmra.mxu0 %v3037
        %v3459 = vpop.f32.mrf.mxu0
        %v3460 = vadd.f32 %v3235, %v3459
        %v3461 = vpop.f32.mrf.mxu0
        %3462 = vmatprep.mubr.f32.mxu0 0.0
        %3463 = vmatmul.mubr.f32.gmra.mxu0 %v3040
        %v3464 = vpop.f32.mrf.mxu0
        %v3465 = vadd.f32 %v3240, %v3464
        %v3466 = vpop.f32.mrf.mxu0
        %3467 = vmatprep.mubr.f32.mxu0 0.0
        %3468 = vmatmul.mubr.f32.gmra.mxu0 %v3043
        %v3469 = vpop.f32.mrf.mxu0
        %v3470 = vadd.f32 %v3245, %v3469
        %v3471 = vpop.f32.mrf.mxu0
        %3472 = vmatprep.mubr.f32.mxu0 0.0
        %3473 = vmatmul.mubr.f32.gmra.mxu0 %v3046
        %v3474 = vpop.f32.mrf.mxu0
        %v3475 = vadd.f32 %v3250, %v3474
        %v3476 = vpop.f32.mrf.mxu0
        %3477 = vmatprep.mubr.f32.mxu0 0.0
        %3478 = vmatmul.mubr.f32.gmra.mxu0 %v3049
        %v3479 = vpop.f32.mrf.mxu0
        %v3480 = vadd.f32 %v3255, %v3479
        %v3481 = vpop.f32.mrf.mxu0
        %3482 = vmatprep.mubr.f32.mxu0 0.0
        %3483 = vmatmul.mubr.f32.gmra.mxu0 %v3052
        %v3484 = vpop.f32.mrf.mxu0
        %v3485 = vadd.f32 %v3260, %v3484
        %v3486 = vpop.f32.mrf.mxu0
        %3487 = vmatprep.mubr.f32.mxu0 0.0
        %3488 = vmatmul.mubr.f32.gmra.mxu0 %v3055
        %v3489 = vpop.f32.mrf.mxu0
        %v3490 = vadd.f32 %v3265, %v3489
        %v3491 = vpop.f32.mrf.mxu0
        %3492 = vmatprep.mubr.f32.mxu0 0.0
        %3493 = vmatmul.mubr.f32.gmra.mxu0 %v3058
        %v3494 = vpop.f32.mrf.mxu0
        %v3495 = vadd.f32 %v3270, %v3494
        %v3496 = vpop.f32.mrf.mxu0
        %3497 = vmatprep.mubr.f32.mxu0 0.0
        %3498 = vmatmul.mubr.f32.gmra.mxu0 %v3061
        %v3499 = vpop.f32.mrf.mxu0
        %v3500 = vadd.f32 %v3275, %v3499
        %v3501 = vpop.f32.mrf.mxu0
        %3502 = vmatprep.mubr.f32.mxu0 0.0
        %3503 = vmatmul.mubr.f32.gmra.mxu0 %v3064
        %v3504 = vpop.f32.mrf.mxu0
        %v3505 = vadd.f32 %v3280, %v3504
        %v3506 = vpop.f32.mrf.mxu0
        %3507 = vmatprep.mubr.f32.mxu0 0.0
        %3508 = vmatmul.mubr.f32.gmra.mxu0 %v3067
        %v3509 = vpop.f32.mrf.mxu0
        %v3510 = vadd.f32 %v3285, %v3509
        %v3511 = vpop.f32.mrf.mxu0
        %3512 = vmatprep.mubr.f32.mxu0 0.0
        %3513 = vmatmul.mubr.f32.gmra.mxu0 %v3070
        %v3514 = vpop.f32.mrf.mxu0
        %v3515 = vadd.f32 %v3290, %v3514
        %v3516 = vpop.f32.mrf.mxu0
        %3517 = vmatprep.mubr.f32.mxu0 0.0
        %3518 = vmatmul.mubr.f32.gmra.mxu0 %v3073
        %v3519 = vpop.f32.mrf.mxu0
        %v3520 = vadd.f32 %v3295, %v3519
        %v3521 = vpop.f32.mrf.mxu0
        %3522 = vmatprep.mubr.f32.mxu0 0.0
        %3523 = vmatmul.mubr.f32.gmra.mxu0 %v3076
        %v3524 = vpop.f32.mrf.mxu0
        %v3525 = vadd.f32 %v3300, %v3524
        %v3526 = vpop.f32.mrf.mxu0
        %3527 = vdwg.mxu0
        %v3528 = vsel %vm673, %v3370, 0.0
        %v3529 = vsel %vm673, %v3375, 0.0
        %v3530 = vadd.f32 %v3528, %v3529
        %v3531 = vsel %vm673, %v3380, 0.0
        %v3532 = vadd.f32 %v3530, %v3531
        %v3533 = vsel %vm673, %v3385, 0.0
        %v3534 = vadd.f32 %v3532, %v3533
        %v3535 = vsel %vm673, %v3390, 0.0
        %v3536 = vadd.f32 %v3534, %v3535
        %v3537 = vsel %vm673, %v3395, 0.0
        %v3538 = vadd.f32 %v3536, %v3537
        %v3539 = vsel %vm673, %v3400, 0.0
        %v3540 = vadd.f32 %v3538, %v3539
        %v3541 = vsel %vm673, %v3405, 0.0
        %v3542 = vadd.f32 %v3540, %v3541
        %v3543 = vsel %vm673, %v3410, 0.0
        %v3544 = vadd.f32 %v3542, %v3543
        %v3545 = vsel %vm673, %v3415, 0.0
        %v3546 = vadd.f32 %v3544, %v3545
        %v3547 = vsel %vm673, %v3420, 0.0
        %v3548 = vadd.f32 %v3546, %v3547
        %v3549 = vsel %vm673, %v3425, 0.0
        %v3550 = vadd.f32 %v3548, %v3549
        %v3551 = vsel %vm673, %v3430, 0.0
        %v3552 = vadd.f32 %v3550, %v3551
        %v3553 = vsel %vm673, %v3435, 0.0
        %v3554 = vadd.f32 %v3552, %v3553
        %v3555 = vsel %vm673, %v3440, 0.0
        %v3556 = vadd.f32 %v3554, %v3555
        %v3557 = vsel %vm673, %v3445, 0.0
        %v3558 = vadd.f32 %v3556, %v3557
        %v3559 = vsel %vm673, %v3450, 0.0
        %v3560 = vadd.f32 %v3558, %v3559
        %v3561 = vsel %vm673, %v3455, 0.0
        %v3562 = vadd.f32 %v3560, %v3561
        %v3563 = vsel %vm673, %v3460, 0.0
        %v3564 = vadd.f32 %v3562, %v3563
        %v3565 = vsel %vm673, %v3465, 0.0
        %v3566 = vadd.f32 %v3564, %v3565
        %v3567 = vsel %vm673, %v3470, 0.0
        %v3568 = vadd.f32 %v3566, %v3567
        %v3569 = vsel %vm673, %v3475, 0.0
        %v3570 = vadd.f32 %v3568, %v3569
        %v3571 = vsel %vm673, %v3480, 0.0
        %v3572 = vadd.f32 %v3570, %v3571
        %v3573 = vsel %vm673, %v3485, 0.0
        %v3574 = vadd.f32 %v3572, %v3573
        %v3575 = vsel %vm673, %v3490, 0.0
        %v3576 = vadd.f32 %v3574, %v3575
        %v3577 = vsel %vm673, %v3495, 0.0
        %v3578 = vadd.f32 %v3576, %v3577
        %v3579 = vsel %vm673, %v3500, 0.0
        %v3580 = vadd.f32 %v3578, %v3579
        %v3581 = vsel %vm673, %v3505, 0.0
        %v3582 = vadd.f32 %v3580, %v3581
        %v3583 = vsel %vm673, %v3510, 0.0
        %v3584 = vadd.f32 %v3582, %v3583
        %v3585 = vsel %vm673, %v3515, 0.0
        %v3586 = vadd.f32 %v3584, %v3585
        %v3587 = vsel %vm673, %v3520, 0.0
        %v3588 = vadd.f32 %v3586, %v3587
        %v3589 = vsel %vm673, %v3525, 0.0
        %v3590 = vadd.f32 %v3588, %v3589
        %v3591 = vrot.slane %v3590, 4
        %v3592 = vadd.f32 %v3590, %v3591
        %v3593 = vrot.slane %v3592, 2
        %v3594 = vadd.f32 %v3592, %v3593
        %v3595 = vrot.slane %v3594, 1
        %v3596 = vadd.f32 %v3594, %v3595
        %v3597 = vmul.f32 %v3596, 0.00390625
        %v3598 = vsub.f32 %v3370, %v3597
        %v3599 = vsub.f32 %v3375, %v3597
        %v3600 = vsub.f32 %v3380, %v3597
        %v3601 = vsub.f32 %v3385, %v3597
        %v3602 = vsub.f32 %v3390, %v3597
        %v3603 = vsub.f32 %v3395, %v3597
        %v3604 = vsub.f32 %v3400, %v3597
        %v3605 = vsub.f32 %v3405, %v3597
        %v3606 = vsub.f32 %v3410, %v3597
        %v3607 = vsub.f32 %v3415, %v3597
        %v3608 = vsub.f32 %v3420, %v3597
        %v3609 = vsub.f32 %v3425, %v3597
        %v3610 = vsub.f32 %v3430, %v3597
        %v3611 = vsub.f32 %v3435, %v3597
        %v3612 = vsub.f32 %v3440, %v3597
        %v3613 = vsub.f32 %v3445, %v3597
        %v3614 = vsub.f32 %v3450, %v3597
        %v3615 = vsub.f32 %v3455, %v3597
        %v3616 = vsub.f32 %v3460, %v3597
        %v3617 = vsub.f32 %v3465, %v3597
        %v3618 = vsub.f32 %v3470, %v3597
        %v3619 = vsub.f32 %v3475, %v3597
        %v3620 = vsub.f32 %v3480, %v3597
        %v3621 = vsub.f32 %v3485, %v3597
        %v3622 = vsub.f32 %v3490, %v3597
        %v3623 = vsub.f32 %v3495, %v3597
        %v3624 = vsub.f32 %v3500, %v3597
        %v3625 = vsub.f32 %v3505, %v3597
        %v3626 = vsub.f32 %v3510, %v3597
        %v3627 = vsub.f32 %v3515, %v3597
        %v3628 = vsub.f32 %v3520, %v3597
        %v3629 = vsub.f32 %v3525, %v3597
        %v3630 = vmul.f32 %v3598, %v3598
        %v3631 = vmul.f32 %v3599, %v3599
        %v3632 = vmul.f32 %v3600, %v3600
        %v3633 = vmul.f32 %v3601, %v3601
        %v3634 = vmul.f32 %v3602, %v3602
        %v3635 = vmul.f32 %v3603, %v3603
        %v3636 = vmul.f32 %v3604, %v3604
        %v3637 = vmul.f32 %v3605, %v3605
        %v3638 = vmul.f32 %v3606, %v3606
        %v3639 = vmul.f32 %v3607, %v3607
        %v3640 = vmul.f32 %v3608, %v3608
        %v3641 = vmul.f32 %v3609, %v3609
        %v3642 = vmul.f32 %v3610, %v3610
        %v3643 = vmul.f32 %v3611, %v3611
        %v3644 = vmul.f32 %v3612, %v3612
        %v3645 = vmul.f32 %v3613, %v3613
        %v3646 = vmul.f32 %v3614, %v3614
        %v3647 = vmul.f32 %v3615, %v3615
        %v3648 = vmul.f32 %v3616, %v3616
        %v3649 = vmul.f32 %v3617, %v3617
        %v3650 = vmul.f32 %v3618, %v3618
        %v3651 = vmul.f32 %v3619, %v3619
        %v3652 = vmul.f32 %v3620, %v3620
        %v3653 = vmul.f32 %v3621, %v3621
        %v3654 = vmul.f32 %v3622, %v3622
        %v3655 = vmul.f32 %v3623, %v3623
        %v3656 = vmul.f32 %v3624, %v3624
        %v3657 = vmul.f32 %v3625, %v3625
        %v3658 = vmul.f32 %v3626, %v3626
        %v3659 = vmul.f32 %v3627, %v3627
        %v3660 = vmul.f32 %v3628, %v3628
        %v3661 = vmul.f32 %v3629, %v3629
        %v3662 = vsel %vm673, %v3630, 0.0
        %v3663 = vsel %vm673, %v3631, 0.0
        %v3664 = vadd.f32 %v3662, %v3663
        %v3665 = vsel %vm673, %v3632, 0.0
        %v3666 = vadd.f32 %v3664, %v3665
        %v3667 = vsel %vm673, %v3633, 0.0
        %v3668 = vadd.f32 %v3666, %v3667
        %v3669 = vsel %vm673, %v3634, 0.0
        %v3670 = vadd.f32 %v3668, %v3669
        %v3671 = vsel %vm673, %v3635, 0.0
        %v3672 = vadd.f32 %v3670, %v3671
        %v3673 = vsel %vm673, %v3636, 0.0
        %v3674 = vadd.f32 %v3672, %v3673
        %v3675 = vsel %vm673, %v3637, 0.0
        %v3676 = vadd.f32 %v3674, %v3675
        %v3677 = vsel %vm673, %v3638, 0.0
        %v3678 = vadd.f32 %v3676, %v3677
        %v3679 = vsel %vm673, %v3639, 0.0
        %v3680 = vadd.f32 %v3678, %v3679
        %v3681 = vsel %vm673, %v3640, 0.0
        %v3682 = vadd.f32 %v3680, %v3681
        %v3683 = vsel %vm673, %v3641, 0.0
        %v3684 = vadd.f32 %v3682, %v3683
        %v3685 = vsel %vm673, %v3642, 0.0
        %v3686 = vadd.f32 %v3684, %v3685
        %v3687 = vsel %vm673, %v3643, 0.0
        %v3688 = vadd.f32 %v3686, %v3687
        %v3689 = vsel %vm673, %v3644, 0.0
        %v3690 = vadd.f32 %v3688, %v3689
        %v3691 = vsel %vm673, %v3645, 0.0
        %v3692 = vadd.f32 %v3690, %v3691
        %v3693 = vsel %vm673, %v3646, 0.0
        %v3694 = vadd.f32 %v3692, %v3693
        %v3695 = vsel %vm673, %v3647, 0.0
        %v3696 = vadd.f32 %v3694, %v3695
        %v3697 = vsel %vm673, %v3648, 0.0
        %v3698 = vadd.f32 %v3696, %v3697
        %v3699 = vsel %vm673, %v3649, 0.0
        %v3700 = vadd.f32 %v3698, %v3699
        %v3701 = vsel %vm673, %v3650, 0.0
        %v3702 = vadd.f32 %v3700, %v3701
        %v3703 = vsel %vm673, %v3651, 0.0
        %v3704 = vadd.f32 %v3702, %v3703
        %v3705 = vsel %vm673, %v3652, 0.0
        %v3706 = vadd.f32 %v3704, %v3705
        %v3707 = vsel %vm673, %v3653, 0.0
        %v3708 = vadd.f32 %v3706, %v3707
        %v3709 = vsel %vm673, %v3654, 0.0
        %v3710 = vadd.f32 %v3708, %v3709
        %v3711 = vsel %vm673, %v3655, 0.0
        %v3712 = vadd.f32 %v3710, %v3711
        %v3713 = vsel %vm673, %v3656, 0.0
        %v3714 = vadd.f32 %v3712, %v3713
        %v3715 = vsel %vm673, %v3657, 0.0
        %v3716 = vadd.f32 %v3714, %v3715
        %v3717 = vsel %vm673, %v3658, 0.0
        %v3718 = vadd.f32 %v3716, %v3717
        %v3719 = vsel %vm673, %v3659, 0.0
        %v3720 = vadd.f32 %v3718, %v3719
        %v3721 = vsel %vm673, %v3660, 0.0
        %v3722 = vadd.f32 %v3720, %v3721
        %v3723 = vsel %vm673, %v3661, 0.0
        %v3724 = vadd.f32 %v3722, %v3723
        %v3725 = vrot.slane %v3724, 4
        %v3726 = vadd.f32 %v3724, %v3725
        %v3727 = vrot.slane %v3726, 2
        %v3728 = vadd.f32 %v3726, %v3727
        %v3729 = vrot.slane %v3728, 1
        %v3730 = vadd.f32 %v3728, %v3729
        %v3731 = vmul.f32 %v3730, 0.00390625
        %v3732 = vadd.f32 %v3731, 1e-05
        %v3733 = vrsqrt.pop %v3732
        %v3734 = vmul.f32 %v3598, %v3733
        %v3735 = vmul.f32 %v3599, %v3733
        %v3736 = vmul.f32 %v3600, %v3733
        %v3737 = vmul.f32 %v3601, %v3733
        %v3738 = vmul.f32 %v3602, %v3733
        %v3739 = vmul.f32 %v3603, %v3733
        %v3740 = vmul.f32 %v3604, %v3733
        %v3741 = vmul.f32 %v3605, %v3733
        %v3742 = vmul.f32 %v3606, %v3733
        %v3743 = vmul.f32 %v3607, %v3733
        %v3744 = vmul.f32 %v3608, %v3733
        %v3745 = vmul.f32 %v3609, %v3733
        %v3746 = vmul.f32 %v3610, %v3733
        %v3747 = vmul.f32 %v3611, %v3733
        %v3748 = vmul.f32 %v3612, %v3733
        %v3749 = vmul.f32 %v3613, %v3733
        %v3750 = vmul.f32 %v3614, %v3733
        %v3751 = vmul.f32 %v3615, %v3733
        %v3752 = vmul.f32 %v3616, %v3733
        %v3753 = vmul.f32 %v3617, %v3733
        %v3754 = vmul.f32 %v3618, %v3733
        %v3755 = vmul.f32 %v3619, %v3733
        %v3756 = vmul.f32 %v3620, %v3733
        %v3757 = vmul.f32 %v3621, %v3733
        %v3758 = vmul.f32 %v3622, %v3733
        %v3759 = vmul.f32 %v3623, %v3733
        %v3760 = vmul.f32 %v3624, %v3733
        %v3761 = vmul.f32 %v3625, %v3733
        %v3762 = vmul.f32 %v3626, %v3733
        %v3763 = vmul.f32 %v3627, %v3733
        %v3764 = vmul.f32 %v3628, %v3733
        %v3765 = vmul.f32 %v3629, %v3733
        %v3766 = vld [vmem:[%s6] sm:$0x1]
        %v3768 = vlaneseq
        %v3769 = vshrl.u32 %v3768, 7
        %v3770 = vsub.s32 0, %v3769
        %v3771 = vrot.slane %v3766, %v3770
        %v3773 = vmul.f32 %v3734, %v3771
        %v3774 = vmul.f32 %v3735, %v3771
        %v3775 = vmul.f32 %v3736, %v3771
        %v3776 = vmul.f32 %v3737, %v3771
        %v3777 = vmul.f32 %v3738, %v3771
        %v3778 = vmul.f32 %v3739, %v3771
        %v3779 = vmul.f32 %v3740, %v3771
        %v3780 = vmul.f32 %v3741, %v3771
        %v3781 = vmul.f32 %v3742, %v3771
        %v3782 = vmul.f32 %v3743, %v3771
        %v3783 = vmul.f32 %v3744, %v3771
        %v3784 = vmul.f32 %v3745, %v3771
        %v3785 = vmul.f32 %v3746, %v3771
        %v3786 = vmul.f32 %v3747, %v3771
        %v3787 = vmul.f32 %v3748, %v3771
        %v3788 = vmul.f32 %v3749, %v3771
        %v3789 = vmul.f32 %v3750, %v3771
        %v3790 = vmul.f32 %v3751, %v3771
        %v3791 = vmul.f32 %v3752, %v3771
        %v3792 = vmul.f32 %v3753, %v3771
        %v3793 = vmul.f32 %v3754, %v3771
        %v3794 = vmul.f32 %v3755, %v3771
        %v3795 = vmul.f32 %v3756, %v3771
        %v3796 = vmul.f32 %v3757, %v3771
        %v3797 = vmul.f32 %v3758, %v3771
        %v3798 = vmul.f32 %v3759, %v3771
        %v3799 = vmul.f32 %v3760, %v3771
        %v3800 = vmul.f32 %v3761, %v3771
        %v3801 = vmul.f32 %v3762, %v3771
        %v3802 = vmul.f32 %v3763, %v3771
        %v3803 = vmul.f32 %v3764, %v3771
        %v3804 = vmul.f32 %v3765, %v3771
        %v3805 = vld [vmem:[%s7] sm:$0x1]
        %v3807 = vlaneseq
        %v3808 = vshrl.u32 %v3807, 7
        %v3809 = vsub.s32 0, %v3808
        %v3810 = vrot.slane %v3805, %v3809
        %v3812 = vadd.f32 %v3773, %v3810
        %v3813 = vadd.f32 %v3774, %v3810
        %v3814 = vadd.f32 %v3775, %v3810
        %v3815 = vadd.f32 %v3776, %v3810
        %v3816 = vadd.f32 %v3777, %v3810
        %v3817 = vadd.f32 %v3778, %v3810
        %v3818 = vadd.f32 %v3779, %v3810
        %v3819 = vadd.f32 %v3780, %v3810
        %v3820 = vadd.f32 %v3781, %v3810
        %v3821 = vadd.f32 %v3782, %v3810
        %v3822 = vadd.f32 %v3783, %v3810
        %v3823 = vadd.f32 %v3784, %v3810
        %v3824 = vadd.f32 %v3785, %v3810
        %v3825 = vadd.f32 %v3786, %v3810
        %v3826 = vadd.f32 %v3787, %v3810
        %v3827 = vadd.f32 %v3788, %v3810
        %v3828 = vadd.f32 %v3789, %v3810
        %v3829 = vadd.f32 %v3790, %v3810
        %v3830 = vadd.f32 %v3791, %v3810
        %v3831 = vadd.f32 %v3792, %v3810
        %v3832 = vadd.f32 %v3793, %v3810
        %v3833 = vadd.f32 %v3794, %v3810
        %v3834 = vadd.f32 %v3795, %v3810
        %v3835 = vadd.f32 %v3796, %v3810
        %v3836 = vadd.f32 %v3797, %v3810
        %v3837 = vadd.f32 %v3798, %v3810
        %v3838 = vadd.f32 %v3799, %v3810
        %v3839 = vadd.f32 %v3800, %v3810
        %v3840 = vadd.f32 %v3801, %v3810
        %v3841 = vadd.f32 %v3802, %v3810
        %v3842 = vadd.f32 %v3803, %v3810
        %v3843 = vadd.f32 %v3804, %v3810
        %v3844 = vmax.f32 %v3812, 0.0
        %v3845 = vmax.f32 %v3813, 0.0
        %v3846 = vmax.f32 %v3814, 0.0
        %v3847 = vmax.f32 %v3815, 0.0
        %v3848 = vmax.f32 %v3816, 0.0
        %v3849 = vmax.f32 %v3817, 0.0
        %v3850 = vmax.f32 %v3818, 0.0
        %v3851 = vmax.f32 %v3819, 0.0
        %v3852 = vmax.f32 %v3820, 0.0
        %v3853 = vmax.f32 %v3821, 0.0
        %v3854 = vmax.f32 %v3822, 0.0
        %v3855 = vmax.f32 %v3823, 0.0
        %v3856 = vmax.f32 %v3824, 0.0
        %v3857 = vmax.f32 %v3825, 0.0
        %v3858 = vmax.f32 %v3826, 0.0
        %v3859 = vmax.f32 %v3827, 0.0
        %v3860 = vmax.f32 %v3828, 0.0
        %v3861 = vmax.f32 %v3829, 0.0
        %v3862 = vmax.f32 %v3830, 0.0
        %v3863 = vmax.f32 %v3831, 0.0
        %v3864 = vmax.f32 %v3832, 0.0
        %v3865 = vmax.f32 %v3833, 0.0
        %v3866 = vmax.f32 %v3834, 0.0
        %v3867 = vmax.f32 %v3835, 0.0
        %v3868 = vmax.f32 %v3836, 0.0
        %v3869 = vmax.f32 %v3837, 0.0
        %v3870 = vmax.f32 %v3838, 0.0
        %v3871 = vmax.f32 %v3839, 0.0
        %v3872 = vmax.f32 %v3840, 0.0
        %v3873 = vmax.f32 %v3841, 0.0
        %v3874 = vmax.f32 %v3842, 0.0
        %v3875 = vmax.f32 %v3843, 0.0
        %v3876 = vld [vmem:[%s3] sm:$0xff]
        %v3877 = vld [vmem:[%s3 + $0x8] sm:$0xff]
        %v3878 = vld [vmem:[%s3 + $0x10] sm:$0xff]
        %v3879 = vld [vmem:[%s3 + $0x18] sm:$0xff]
        %v3881 = vsel %vm673, %v3844, 0
        %v3884 = vsel %vm673, %v3845, 0
        %v3887 = vsel %vm673, %v3846, 0
        %v3890 = vsel %vm673, %v3847, 0
        %v3893 = vsel %vm673, %v3848, 0
        %v3896 = vsel %vm673, %v3849, 0
        %v3899 = vsel %vm673, %v3850, 0
        %v3902 = vsel %vm673, %v3851, 0
        %v3905 = vsel %vm673, %v3852, 0
        %v3908 = vsel %vm673, %v3853, 0
        %v3911 = vsel %vm673, %v3854, 0
        %v3914 = vsel %vm673, %v3855, 0
        %v3917 = vsel %vm673, %v3856, 0
        %v3920 = vsel %vm673, %v3857, 0
        %v3923 = vsel %vm673, %v3858, 0
        %v3926 = vsel %vm673, %v3859, 0
        %v3929 = vsel %vm673, %v3860, 0
        %v3932 = vsel %vm673, %v3861, 0
        %v3935 = vsel %vm673, %v3862, 0
        %v3938 = vsel %vm673, %v3863, 0
        %v3941 = vsel %vm673, %v3864, 0
        %v3944 = vsel %vm673, %v3865, 0
        %v3947 = vsel %vm673, %v3866, 0
        %v3950 = vsel %vm673, %v3867, 0
        %v3953 = vsel %vm673, %v3868, 0
        %v3956 = vsel %vm673, %v3869, 0
        %v3959 = vsel %vm673, %v3870, 0
        %v3962 = vsel %vm673, %v3871, 0
        %v3965 = vsel %vm673, %v3872, 0
        %v3968 = vsel %vm673, %v3873, 0
        %v3971 = vsel %vm673, %v3874, 0
        %v3974 = vsel %vm673, %v3875, 0
        %3976 = vmatprep.subr.mxu0 0.0
        %3977 = vmatpush1.msra.mxu0 0.0
        %3978 = vmatprep.subr.mxu0 0.0
        %3979 = vmatpush1.msra.mxu0 0.0
        %3980 = vmatprep.subr.mxu0 0.0
        %3981 = vmatpush1.msra.mxu0 0.0
        %3982 = vmatprep.subr.mxu0 0.0
        %3983 = vmatpush1.msra.mxu0 0.0
        %3984 = vmatprep.subr.mxu0 0.0
        %3985 = vmatpush1.msra.mxu0 0.0
        %3986 = vmatprep.subr.mxu0 0.0
        %3987 = vmatpush1.msra.mxu0 0.0
        %3988 = vmatprep.subr.mxu0 0.0
        %3989 = vmatpush1.msra.mxu0 0.0
        %3990 = vmatprep.subr.mxu0 0.0
        %3991 = vmatpush1.msra.mxu0 0.0
        %3992 = vmatprep.subr.mxu0 0.0
        %3993 = vmatpush1.msra.mxu0 0.0
        %3994 = vmatprep.subr.mxu0 0.0
        %3995 = vmatpush1.msra.mxu0 0.0
        %3996 = vmatprep.subr.mxu0 0.0
        %3997 = vmatpush1.msra.mxu0 0.0
        %3998 = vmatprep.subr.mxu0 0.0
        %3999 = vmatpush1.msra.mxu0 0.0
        %4000 = vmatprep.subr.mxu0 0.0
        %4001 = vmatpush1.msra.mxu0 %v3879
        %4002 = vmatprep.subr.mxu0 0.0
        %4003 = vmatpush1.msra.mxu0 %v3878
        %4004 = vmatprep.subr.mxu0 0.0
        %4005 = vmatpush1.msra.mxu0 %v3877
        %4006 = vmatprep.subr.mxu0 0.0
        %4007 = vmatpush1.msra.mxu0 %v3876
        %4008 = vmatprep.subr.mxu0 0.0
        %4009 = vmatpush2.msra.mxu0 0.0
        %4010 = vmatprep.subr.mxu0 0.0
        %4011 = vmatpush2.msra.mxu0 0.0
        %4012 = vmatprep.subr.mxu0 0.0
        %4013 = vmatpush2.msra.mxu0 0.0
        %4014 = vmatprep.subr.mxu0 0.0
        %4015 = vmatpush2.msra.mxu0 0.0
        %4016 = vmatprep.subr.mxu0 0.0
        %4017 = vmatpush2.msra.mxu0 0.0
        %4018 = vmatprep.subr.mxu0 0.0
        %4019 = vmatpush2.msra.mxu0 0.0
        %4020 = vmatprep.subr.mxu0 0.0
        %4021 = vmatpush2.msra.mxu0 0.0
        %4022 = vmatprep.subr.mxu0 0.0
        %4023 = vmatpush2.msra.mxu0 0.0
        %4024 = vmatprep.subr.mxu0 0.0
        %4025 = vmatpush2.msra.mxu0 0.0
        %4026 = vmatprep.subr.mxu0 0.0
        %4027 = vmatpush2.msra.mxu0 0.0
        %4028 = vmatprep.subr.mxu0 0.0
        %4029 = vmatpush2.msra.mxu0 0.0
        %4030 = vmatprep.subr.mxu0 0.0
        %4031 = vmatpush2.msra.mxu0 0.0
        %4032 = vmatprep.subr.mxu0 0.0
        %4033 = vmatpush2.msra.mxu0 0.0
        %4034 = vmatprep.subr.mxu0 0.0
        %4035 = vmatpush2.msra.mxu0 0.0
        %4036 = vmatprep.subr.mxu0 0.0
        %4037 = vmatpush2.msra.mxu0 0.0
        %4038 = vmatprep.subr.mxu0 0.0
        %4039 = vmatpush2.msra.mxu0 0.0
        %4040 = vmatprep.mubr.f32.mxu0 0.0
        %4041 = vmatmul.mubr.f32.gmra.mxu0 %v3881
        %v4042 = vpop.f32.mrf.mxu0
        %v4043 = vadd.f32 0.0, %v4042
        %v4044 = vpop.f32.mrf.mxu0
        %4045 = vmatprep.mubr.f32.mxu0 0.0
        %4046 = vmatmul.mubr.f32.gmra.mxu0 %v3884
        %v4047 = vpop.f32.mrf.mxu0
        %v4048 = vadd.f32 0.0, %v4047
        %v4049 = vpop.f32.mrf.mxu0
        %4050 = vmatprep.mubr.f32.mxu0 0.0
        %4051 = vmatmul.mubr.f32.gmra.mxu0 %v3887
        %v4052 = vpop.f32.mrf.mxu0
        %v4053 = vadd.f32 0.0, %v4052
        %v4054 = vpop.f32.mrf.mxu0
        %4055 = vmatprep.mubr.f32.mxu0 0.0
        %4056 = vmatmul.mubr.f32.gmra.mxu0 %v3890
        %v4057 = vpop.f32.mrf.mxu0
        %v4058 = vadd.f32 0.0, %v4057
        %v4059 = vpop.f32.mrf.mxu0
        %4060 = vmatprep.mubr.f32.mxu0 0.0
        %4061 = vmatmul.mubr.f32.gmra.mxu0 %v3893
        %v4062 = vpop.f32.mrf.mxu0
        %v4063 = vadd.f32 0.0, %v4062
        %v4064 = vpop.f32.mrf.mxu0
        %4065 = vmatprep.mubr.f32.mxu0 0.0
        %4066 = vmatmul.mubr.f32.gmra.mxu0 %v3896
        %v4067 = vpop.f32.mrf.mxu0
        %v4068 = vadd.f32 0.0, %v4067
        %v4069 = vpop.f32.mrf.mxu0
        %4070 = vmatprep.mubr.f32.mxu0 0.0
        %4071 = vmatmul.mubr.f32.gmra.mxu0 %v3899
        %v4072 = vpop.f32.mrf.mxu0
        %v4073 = vadd.f32 0.0, %v4072
        %v4074 = vpop.f32.mrf.mxu0
        %4075 = vmatprep.mubr.f32.mxu0 0.0
        %4076 = vmatmul.mubr.f32.gmra.mxu0 %v3902
        %v4077 = vpop.f32.mrf.mxu0
        %v4078 = vadd.f32 0.0, %v4077
        %v4079 = vpop.f32.mrf.mxu0
        %4080 = vmatprep.mubr.f32.mxu0 0.0
        %4081 = vmatmul.mubr.f32.gmra.mxu0 %v3905
        %v4082 = vpop.f32.mrf.mxu0
        %v4083 = vadd.f32 0.0, %v4082
        %v4084 = vpop.f32.mrf.mxu0
        %4085 = vmatprep.mubr.f32.mxu0 0.0
        %4086 = vmatmul.mubr.f32.gmra.mxu0 %v3908
        %v4087 = vpop.f32.mrf.mxu0
        %v4088 = vadd.f32 0.0, %v4087
        %v4089 = vpop.f32.mrf.mxu0
        %4090 = vmatprep.mubr.f32.mxu0 0.0
        %4091 = vmatmul.mubr.f32.gmra.mxu0 %v3911
        %v4092 = vpop.f32.mrf.mxu0
        %v4093 = vadd.f32 0.0, %v4092
        %v4094 = vpop.f32.mrf.mxu0
        %4095 = vmatprep.mubr.f32.mxu0 0.0
        %4096 = vmatmul.mubr.f32.gmra.mxu0 %v3914
        %v4097 = vpop.f32.mrf.mxu0
        %v4098 = vadd.f32 0.0, %v4097
        %v4099 = vpop.f32.mrf.mxu0
        %4100 = vmatprep.mubr.f32.mxu0 0.0
        %4101 = vmatmul.mubr.f32.gmra.mxu0 %v3917
        %v4102 = vpop.f32.mrf.mxu0
        %v4103 = vadd.f32 0.0, %v4102
        %v4104 = vpop.f32.mrf.mxu0
        %4105 = vmatprep.mubr.f32.mxu0 0.0
        %4106 = vmatmul.mubr.f32.gmra.mxu0 %v3920
        %v4107 = vpop.f32.mrf.mxu0
        %v4108 = vadd.f32 0.0, %v4107
        %v4109 = vpop.f32.mrf.mxu0
        %4110 = vmatprep.mubr.f32.mxu0 0.0
        %4111 = vmatmul.mubr.f32.gmra.mxu0 %v3923
        %v4112 = vpop.f32.mrf.mxu0
        %v4113 = vadd.f32 0.0, %v4112
        %v4114 = vpop.f32.mrf.mxu0
        %4115 = vmatprep.mubr.f32.mxu0 0.0
        %4116 = vmatmul.mubr.f32.gmra.mxu0 %v3926
        %v4117 = vpop.f32.mrf.mxu0
        %v4118 = vadd.f32 0.0, %v4117
        %v4119 = vpop.f32.mrf.mxu0
        %4120 = vmatprep.mubr.f32.mxu0 0.0
        %4121 = vmatmul.mubr.f32.gmra.mxu0 %v3929
        %v4122 = vpop.f32.mrf.mxu0
        %v4123 = vadd.f32 0.0, %v4122
        %v4124 = vpop.f32.mrf.mxu0
        %4125 = vmatprep.mubr.f32.mxu0 0.0
        %4126 = vmatmul.mubr.f32.gmra.mxu0 %v3932
        %v4127 = vpop.f32.mrf.mxu0
        %v4128 = vadd.f32 0.0, %v4127
        %v4129 = vpop.f32.mrf.mxu0
        %4130 = vmatprep.mubr.f32.mxu0 0.0
        %4131 = vmatmul.mubr.f32.gmra.mxu0 %v3935
        %v4132 = vpop.f32.mrf.mxu0
        %v4133 = vadd.f32 0.0, %v4132
        %v4134 = vpop.f32.mrf.mxu0
        %4135 = vmatprep.mubr.f32.mxu0 0.0
        %4136 = vmatmul.mubr.f32.gmra.mxu0 %v3938
        %v4137 = vpop.f32.mrf.mxu0
        %v4138 = vadd.f32 0.0, %v4137
        %v4139 = vpop.f32.mrf.mxu0
        %4140 = vmatprep.mubr.f32.mxu0 0.0
        %4141 = vmatmul.mubr.f32.gmra.mxu0 %v3941
        %v4142 = vpop.f32.mrf.mxu0
        %v4143 = vadd.f32 0.0, %v4142
        %v4144 = vpop.f32.mrf.mxu0
        %4145 = vmatprep.mubr.f32.mxu0 0.0
        %4146 = vmatmul.mubr.f32.gmra.mxu0 %v3944
        %v4147 = vpop.f32.mrf.mxu0
        %v4148 = vadd.f32 0.0, %v4147
        %v4149 = vpop.f32.mrf.mxu0
        %4150 = vmatprep.mubr.f32.mxu0 0.0
        %4151 = vmatmul.mubr.f32.gmra.mxu0 %v3947
        %v4152 = vpop.f32.mrf.mxu0
        %v4153 = vadd.f32 0.0, %v4152
        %v4154 = vpop.f32.mrf.mxu0
        %4155 = vmatprep.mubr.f32.mxu0 0.0
        %4156 = vmatmul.mubr.f32.gmra.mxu0 %v3950
        %v4157 = vpop.f32.mrf.mxu0
        %v4158 = vadd.f32 0.0, %v4157
        %v4159 = vpop.f32.mrf.mxu0
        %4160 = vmatprep.mubr.f32.mxu0 0.0
        %4161 = vmatmul.mubr.f32.gmra.mxu0 %v3953
        %v4162 = vpop.f32.mrf.mxu0
        %v4163 = vadd.f32 0.0, %v4162
        %v4164 = vpop.f32.mrf.mxu0
        %4165 = vmatprep.mubr.f32.mxu0 0.0
        %4166 = vmatmul.mubr.f32.gmra.mxu0 %v3956
        %v4167 = vpop.f32.mrf.mxu0
        %v4168 = vadd.f32 0.0, %v4167
        %v4169 = vpop.f32.mrf.mxu0
        %4170 = vmatprep.mubr.f32.mxu0 0.0
        %4171 = vmatmul.mubr.f32.gmra.mxu0 %v3959
        %v4172 = vpop.f32.mrf.mxu0
        %v4173 = vadd.f32 0.0, %v4172
        %v4174 = vpop.f32.mrf.mxu0
        %4175 = vmatprep.mubr.f32.mxu0 0.0
        %4176 = vmatmul.mubr.f32.gmra.mxu0 %v3962
        %v4177 = vpop.f32.mrf.mxu0
        %v4178 = vadd.f32 0.0, %v4177
        %v4179 = vpop.f32.mrf.mxu0
        %4180 = vmatprep.mubr.f32.mxu0 0.0
        %4181 = vmatmul.mubr.f32.gmra.mxu0 %v3965
        %v4182 = vpop.f32.mrf.mxu0
        %v4183 = vadd.f32 0.0, %v4182
        %v4184 = vpop.f32.mrf.mxu0
        %4185 = vmatprep.mubr.f32.mxu0 0.0
        %4186 = vmatmul.mubr.f32.gmra.mxu0 %v3968
        %v4187 = vpop.f32.mrf.mxu0
        %v4188 = vadd.f32 0.0, %v4187
        %v4189 = vpop.f32.mrf.mxu0
        %4190 = vmatprep.mubr.f32.mxu0 0.0
        %4191 = vmatmul.mubr.f32.gmra.mxu0 %v3971
        %v4192 = vpop.f32.mrf.mxu0
        %v4193 = vadd.f32 0.0, %v4192
        %v4194 = vpop.f32.mrf.mxu0
        %4195 = vmatprep.mubr.f32.mxu0 0.0
        %4196 = vmatmul.mubr.f32.gmra.mxu0 %v3974
        %v4197 = vpop.f32.mrf.mxu0
        %v4198 = vadd.f32 0.0, %v4197
        %v4199 = vpop.f32.mrf.mxu0
        %4200 = vdwg.mxu0
        %v4201 = vadd.f32 %v4043, %v4048
        %v4202 = vadd.f32 %v4201, %v4053
        %v4203 = vadd.f32 %v4202, %v4058
        %v4204 = vadd.f32 %v4203, %v4063
        %v4205 = vadd.f32 %v4204, %v4068
        %v4206 = vadd.f32 %v4205, %v4073
        %v4207 = vadd.f32 %v4206, %v4078
        %v4208 = vadd.f32 %v4207, %v4083
        %v4209 = vadd.f32 %v4208, %v4088
        %v4210 = vadd.f32 %v4209, %v4093
        %v4211 = vadd.f32 %v4210, %v4098
        %v4212 = vadd.f32 %v4211, %v4103
        %v4213 = vadd.f32 %v4212, %v4108
        %v4214 = vadd.f32 %v4213, %v4113
        %v4215 = vadd.f32 %v4214, %v4118
        %v4216 = vadd.f32 %v4215, %v4123
        %v4217 = vadd.f32 %v4216, %v4128
        %v4218 = vadd.f32 %v4217, %v4133
        %v4219 = vadd.f32 %v4218, %v4138
        %v4220 = vadd.f32 %v4219, %v4143
        %v4221 = vadd.f32 %v4220, %v4148
        %v4222 = vadd.f32 %v4221, %v4153
        %v4223 = vadd.f32 %v4222, %v4158
        %v4224 = vadd.f32 %v4223, %v4163
        %v4225 = vadd.f32 %v4224, %v4168
        %v4226 = vadd.f32 %v4225, %v4173
        %v4227 = vadd.f32 %v4226, %v4178
        %v4228 = vadd.f32 %v4227, %v4183
        %v4229 = vadd.f32 %v4228, %v4188
        %v4230 = vadd.f32 %v4229, %v4193
        %v4231 = vadd.f32 %v4230, %v4198
        %v4232 = vrot.slane %v4231, 4
        %v4233 = vadd.f32 %v4231, %v4232
        %v4234 = vrot.slane %v4233, 2
        %v4235 = vadd.f32 %v4233, %v4234
        %v4236 = vrot.slane %v4235, 1
        %v4237 = vadd.f32 %v4235, %v4236
        %v4238 = vld [vmem:[#allocation2] sm:$0xff]
        %v4239 = vld [vmem:[#allocation2 + $0x8] sm:$0xff]
        %v4240 = vld [vmem:[#allocation2 + $0x10] sm:$0xff]
        %v4241 = vld [vmem:[#allocation2 + $0x18] sm:$0xff]
        %v4242 = vld [vmem:[#allocation2 + $0x20] sm:$0xff]
        %v4243 = vld [vmem:[#allocation2 + $0x28] sm:$0xff]
        %v4244 = vld [vmem:[#allocation2 + $0x30] sm:$0xff]
        %v4245 = vld [vmem:[#allocation2 + $0x38] sm:$0xff]
        %v4246 = vld [vmem:[#allocation2 + $0x40] sm:$0xff]
        %v4247 = vld [vmem:[#allocation2 + $0x48] sm:$0xff]
        %v4248 = vld [vmem:[#allocation2 + $0x50] sm:$0xff]
        %v4249 = vld [vmem:[#allocation2 + $0x58] sm:$0xff]
        %v4250 = vld [vmem:[#allocation2 + $0x60] sm:$0xff]
        %v4251 = vld [vmem:[#allocation2 + $0x68] sm:$0xff]
        %v4252 = vld [vmem:[#allocation2 + $0x70] sm:$0xff]
        %v4253 = vld [vmem:[#allocation2 + $0x78] sm:$0xff]
        %4254 = vmatprep.subr.mxu0 0.0
        %4255 = vmatpush1.msra.mxu0 %v4253
        %4256 = vmatprep.subr.mxu0 0.0
        %4257 = vmatpush1.msra.mxu0 %v4252
        %4258 = vmatprep.subr.mxu0 0.0
        %4259 = vmatpush1.msra.mxu0 %v4251
        %4260 = vmatprep.subr.mxu0 0.0
        %4261 = vmatpush1.msra.mxu0 %v4250
        %4262 = vmatprep.subr.mxu0 0.0
        %4263 = vmatpush1.msra.mxu0 %v4249
        %4264 = vmatprep.subr.mxu0 0.0
        %4265 = vmatpush1.msra.mxu0 %v4248
        %4266 = vmatprep.subr.mxu0 0.0
        %4267 = vmatpush1.msra.mxu0 %v4247
        %4268 = vmatprep.subr.mxu0 0.0
        %4269 = vmatpush1.msra.mxu0 %v4246
        %4270 = vmatprep.subr.mxu0 0.0
        %4271 = vmatpush1.msra.mxu0 %v4245
        %4272 = vmatprep.subr.mxu0 0.0
        %4273 = vmatpush1.msra.mxu0 %v4244
        %4274 = vmatprep.subr.mxu0 0.0
        %4275 = vmatpush1.msra.mxu0 %v4243
        %4276 = vmatprep.subr.mxu0 0.0
        %4277 = vmatpush1.msra.mxu0 %v4242
        %4278 = vmatprep.subr.mxu0 0.0
        %4279 = vmatpush1.msra.mxu0 %v4241
        %4280 = vmatprep.subr.mxu0 0.0
        %4281 = vmatpush1.msra.mxu0 %v4240
        %4282 = vmatprep.subr.mxu0 0.0
        %4283 = vmatpush1.msra.mxu0 %v4239
        %4284 = vmatprep.subr.mxu0 0.0
        %4285 = vmatpush1.msra.mxu0 %v4238
        %4286 = vmatprep.subr.mxu0 0.0
        %4287 = vmatpush2.msra.mxu0 0.0
        %4288 = vmatprep.subr.mxu0 0.0
        %4289 = vmatpush2.msra.mxu0 0.0
        %4290 = vmatprep.subr.mxu0 0.0
        %4291 = vmatpush2.msra.mxu0 0.0
        %4292 = vmatprep.subr.mxu0 0.0
        %4293 = vmatpush2.msra.mxu0 0.0
        %4294 = vmatprep.subr.mxu0 0.0
        %4295 = vmatpush2.msra.mxu0 0.0
        %4296 = vmatprep.subr.mxu0 0.0
        %4297 = vmatpush2.msra.mxu0 0.0
        %4298 = vmatprep.subr.mxu0 0.0
        %4299 = vmatpush2.msra.mxu0 0.0
        %4300 = vmatprep.subr.mxu0 0.0
        %4301 = vmatpush2.msra.mxu0 0.0
        %4302 = vmatprep.subr.mxu0 0.0
        %4303 = vmatpush2.msra.mxu0 0.0
        %4304 = vmatprep.subr.mxu0 0.0
        %4305 = vmatpush2.msra.mxu0 0.0
        %4306 = vmatprep.subr.mxu0 0.0
        %4307 = vmatpush2.msra.mxu0 0.0
        %4308 = vmatprep.subr.mxu0 0.0
        %4309 = vmatpush2.msra.mxu0 0.0
        %4310 = vmatprep.subr.mxu0 0.0
        %4311 = vmatpush2.msra.mxu0 0.0
        %4312 = vmatprep.subr.mxu0 0.0
        %4313 = vmatpush2.msra.mxu0 0.0
        %4314 = vmatprep.subr.mxu0 0.0
        %4315 = vmatpush2.msra.mxu0 0.0
        %4316 = vmatprep.subr.mxu0 0.0
        %4317 = vmatpush2.msra.mxu0 0.0
        %4318 = vmatprep.mubr.f32.mxu0 0.0
        %4319 = vmatmul.mubr.f32.gmra.mxu0 %v4237
        %v4320 = vpop.f32.mrf.mxu0
        %v4321 = vadd.f32 0.0, %v4320
        %v4322 = vpop.f32.mrf.mxu0
        %4323 = vdwg.mxu0
        %v4324 = vlaneseq
        %v4325 = vshrl.u32 %v4324, 7
        %v4326 = vsub.s32 0, %v4325
        %v4327 = vrot.slane %v4321, %v4326
        %v4328 = vsub.f32 %v4043, %v4327
        %v4329 = vsub.f32 %v4048, %v4327
        %v4330 = vsub.f32 %v4053, %v4327
        %v4331 = vsub.f32 %v4058, %v4327
        %v4332 = vsub.f32 %v4063, %v4327
        %v4333 = vsub.f32 %v4068, %v4327
        %v4334 = vsub.f32 %v4073, %v4327
        %v4335 = vsub.f32 %v4078, %v4327
        %v4336 = vsub.f32 %v4083, %v4327
        %v4337 = vsub.f32 %v4088, %v4327
        %v4338 = vsub.f32 %v4093, %v4327
        %v4339 = vsub.f32 %v4098, %v4327
        %v4340 = vsub.f32 %v4103, %v4327
        %v4341 = vsub.f32 %v4108, %v4327
        %v4342 = vsub.f32 %v4113, %v4327
        %v4343 = vsub.f32 %v4118, %v4327
        %v4344 = vsub.f32 %v4123, %v4327
        %v4345 = vsub.f32 %v4128, %v4327
        %v4346 = vsub.f32 %v4133, %v4327
        %v4347 = vsub.f32 %v4138, %v4327
        %v4348 = vsub.f32 %v4143, %v4327
        %v4349 = vsub.f32 %v4148, %v4327
        %v4350 = vsub.f32 %v4153, %v4327
        %v4351 = vsub.f32 %v4158, %v4327
        %v4352 = vsub.f32 %v4163, %v4327
        %v4353 = vsub.f32 %v4168, %v4327
        %v4354 = vsub.f32 %v4173, %v4327
        %v4355 = vsub.f32 %v4178, %v4327
        %v4356 = vsub.f32 %v4183, %v4327
        %v4357 = vsub.f32 %v4188, %v4327
        %v4358 = vsub.f32 %v4193, %v4327
        %v4359 = vsub.f32 %v4198, %v4327
        %v4360 = vmul.f32 %v4328, %v4328
        %v4361 = vmul.f32 %v4329, %v4329
        %v4362 = vmul.f32 %v4330, %v4330
        %v4363 = vmul.f32 %v4331, %v4331
        %v4364 = vmul.f32 %v4332, %v4332
        %v4365 = vmul.f32 %v4333, %v4333
        %v4366 = vmul.f32 %v4334, %v4334
        %v4367 = vmul.f32 %v4335, %v4335
        %v4368 = vmul.f32 %v4336, %v4336
        %v4369 = vmul.f32 %v4337, %v4337
        %v4370 = vmul.f32 %v4338, %v4338
        %v4371 = vmul.f32 %v4339, %v4339
        %v4372 = vmul.f32 %v4340, %v4340
        %v4373 = vmul.f32 %v4341, %v4341
        %v4374 = vmul.f32 %v4342, %v4342
        %v4375 = vmul.f32 %v4343, %v4343
        %v4376 = vmul.f32 %v4344, %v4344
        %v4377 = vmul.f32 %v4345, %v4345
        %v4378 = vmul.f32 %v4346, %v4346
        %v4379 = vmul.f32 %v4347, %v4347
        %v4380 = vmul.f32 %v4348, %v4348
        %v4381 = vmul.f32 %v4349, %v4349
        %v4382 = vmul.f32 %v4350, %v4350
        %v4383 = vmul.f32 %v4351, %v4351
        %v4384 = vmul.f32 %v4352, %v4352
        %v4385 = vmul.f32 %v4353, %v4353
        %v4386 = vmul.f32 %v4354, %v4354
        %v4387 = vmul.f32 %v4355, %v4355
        %v4388 = vmul.f32 %v4356, %v4356
        %v4389 = vmul.f32 %v4357, %v4357
        %v4390 = vmul.f32 %v4358, %v4358
        %v4391 = vmul.f32 %v4359, %v4359
        %v4392 = vadd.f32 %v4360, %v4361
        %v4393 = vadd.f32 %v4392, %v4362
        %v4394 = vadd.f32 %v4393, %v4363
        %v4395 = vadd.f32 %v4394, %v4364
        %v4396 = vadd.f32 %v4395, %v4365
        %v4397 = vadd.f32 %v4396, %v4366
        %v4398 = vadd.f32 %v4397, %v4367
        %v4399 = vadd.f32 %v4398, %v4368
        %v4400 = vadd.f32 %v4399, %v4369
        %v4401 = vadd.f32 %v4400, %v4370
        %v4402 = vadd.f32 %v4401, %v4371
        %v4403 = vadd.f32 %v4402, %v4372
        %v4404 = vadd.f32 %v4403, %v4373
        %v4405 = vadd.f32 %v4404, %v4374
        %v4406 = vadd.f32 %v4405, %v4375
        %v4407 = vadd.f32 %v4406, %v4376
        %v4408 = vadd.f32 %v4407, %v4377
        %v4409 = vadd.f32 %v4408, %v4378
        %v4410 = vadd.f32 %v4409, %v4379
        %v4411 = vadd.f32 %v4410, %v4380
        %v4412 = vadd.f32 %v4411, %v4381
        %v4413 = vadd.f32 %v4412, %v4382
        %v4414 = vadd.f32 %v4413, %v4383
        %v4415 = vadd.f32 %v4414, %v4384
        %v4416 = vadd.f32 %v4415, %v4385
        %v4417 = vadd.f32 %v4416, %v4386
        %v4418 = vadd.f32 %v4417, %v4387
        %v4419 = vadd.f32 %v4418, %v4388
        %v4420 = vadd.f32 %v4419, %v4389
        %v4421 = vadd.f32 %v4420, %v4390
        %v4422 = vadd.f32 %v4421, %v4391
        %v4423 = vrot.slane %v4422, 4
        %v4424 = vadd.f32 %v4422, %v4423
        %v4425 = vrot.slane %v4424, 2
        %v4426 = vadd.f32 %v4424, %v4425
        %v4427 = vrot.slane %v4426, 1
        %v4428 = vadd.f32 %v4426, %v4427
        %4429 = vmatprep.subr.mxu0 0.0
        %4430 = vmatpush1.msra.mxu0 %v4253
        %4431 = vmatprep.subr.mxu0 0.0
        %4432 = vmatpush1.msra.mxu0 %v4252
        %4433 = vmatprep.subr.mxu0 0.0
        %4434 = vmatpush1.msra.mxu0 %v4251
        %4435 = vmatprep.subr.mxu0 0.0
        %4436 = vmatpush1.msra.mxu0 %v4250
        %4437 = vmatprep.subr.mxu0 0.0
        %4438 = vmatpush1.msra.mxu0 %v4249
        %4439 = vmatprep.subr.mxu0 0.0
        %4440 = vmatpush1.msra.mxu0 %v4248
        %4441 = vmatprep.subr.mxu0 0.0
        %4442 = vmatpush1.msra.mxu0 %v4247
        %4443 = vmatprep.subr.mxu0 0.0
        %4444 = vmatpush1.msra.mxu0 %v4246
        %4445 = vmatprep.subr.mxu0 0.0
        %4446 = vmatpush1.msra.mxu0 %v4245
        %4447 = vmatprep.subr.mxu0 0.0
        %4448 = vmatpush1.msra.mxu0 %v4244
        %4449 = vmatprep.subr.mxu0 0.0
        %4450 = vmatpush1.msra.mxu0 %v4243
        %4451 = vmatprep.subr.mxu0 0.0
        %4452 = vmatpush1.msra.mxu0 %v4242
        %4453 = vmatprep.subr.mxu0 0.0
        %4454 = vmatpush1.msra.mxu0 %v4241
        %4455 = vmatprep.subr.mxu0 0.0
        %4456 = vmatpush1.msra.mxu0 %v4240
        %4457 = vmatprep.subr.mxu0 0.0
        %4458 = vmatpush1.msra.mxu0 %v4239
        %4459 = vmatprep.subr.mxu0 0.0
        %4460 = vmatpush1.msra.mxu0 %v4238
        %4461 = vmatprep.subr.mxu0 0.0
        %4462 = vmatpush2.msra.mxu0 0.0
        %4463 = vmatprep.subr.mxu0 0.0
        %4464 = vmatpush2.msra.mxu0 0.0
        %4465 = vmatprep.subr.mxu0 0.0
        %4466 = vmatpush2.msra.mxu0 0.0
        %4467 = vmatprep.subr.mxu0 0.0
        %4468 = vmatpush2.msra.mxu0 0.0
        %4469 = vmatprep.subr.mxu0 0.0
        %4470 = vmatpush2.msra.mxu0 0.0
        %4471 = vmatprep.subr.mxu0 0.0
        %4472 = vmatpush2.msra.mxu0 0.0
        %4473 = vmatprep.subr.mxu0 0.0
        %4474 = vmatpush2.msra.mxu0 0.0
        %4475 = vmatprep.subr.mxu0 0.0
        %4476 = vmatpush2.msra.mxu0 0.0
        %4477 = vmatprep.subr.mxu0 0.0
        %4478 = vmatpush2.msra.mxu0 0.0
        %4479 = vmatprep.subr.mxu0 0.0
        %4480 = vmatpush2.msra.mxu0 0.0
        %4481 = vmatprep.subr.mxu0 0.0
        %4482 = vmatpush2.msra.mxu0 0.0
        %4483 = vmatprep.subr.mxu0 0.0
        %4484 = vmatpush2.msra.mxu0 0.0
        %4485 = vmatprep.subr.mxu0 0.0
        %4486 = vmatpush2.msra.mxu0 0.0
        %4487 = vmatprep.subr.mxu0 0.0
        %4488 = vmatpush2.msra.mxu0 0.0
        %4489 = vmatprep.subr.mxu0 0.0
        %4490 = vmatpush2.msra.mxu0 0.0
        %4491 = vmatprep.subr.mxu0 0.0
        %4492 = vmatpush2.msra.mxu0 0.0
        %4493 = vmatprep.mubr.f32.mxu0 0.0
        %4494 = vmatmul.mubr.f32.gmra.mxu0 %v4428
        %v4495 = vpop.f32.mrf.mxu0
        %v4496 = vadd.f32 1e-05, %v4495
        %v4497 = vpop.f32.mrf.mxu0
        %4498 = vdwg.mxu0
        %v4499 = vrsqrt.pop %v4496
        %v4500 = vlaneseq
        %v4501 = vshrl.u32 %v4500, 7
        %v4502 = vsub.s32 0, %v4501
        %v4503 = vrot.slane %v4499, %v4502
        %v4504 = vmul.f32 %v4328, %v4503
        %v4505 = vmul.f32 %v4329, %v4503
        %v4506 = vmul.f32 %v4330, %v4503
        %v4507 = vmul.f32 %v4331, %v4503
        %v4508 = vmul.f32 %v4332, %v4503
        %v4509 = vmul.f32 %v4333, %v4503
        %v4510 = vmul.f32 %v4334, %v4503
        %v4511 = vmul.f32 %v4335, %v4503
        %v4512 = vmul.f32 %v4336, %v4503
        %v4513 = vmul.f32 %v4337, %v4503
        %v4514 = vmul.f32 %v4338, %v4503
        %v4515 = vmul.f32 %v4339, %v4503
        %v4516 = vmul.f32 %v4340, %v4503
        %v4517 = vmul.f32 %v4341, %v4503
        %v4518 = vmul.f32 %v4342, %v4503
        %v4519 = vmul.f32 %v4343, %v4503
        %v4520 = vmul.f32 %v4344, %v4503
        %v4521 = vmul.f32 %v4345, %v4503
        %v4522 = vmul.f32 %v4346, %v4503
        %v4523 = vmul.f32 %v4347, %v4503
        %v4524 = vmul.f32 %v4348, %v4503
        %v4525 = vmul.f32 %v4349, %v4503
        %v4526 = vmul.f32 %v4350, %v4503
        %v4527 = vmul.f32 %v4351, %v4503
        %v4528 = vmul.f32 %v4352, %v4503
        %v4529 = vmul.f32 %v4353, %v4503
        %v4530 = vmul.f32 %v4354, %v4503
        %v4531 = vmul.f32 %v4355, %v4503
        %v4532 = vmul.f32 %v4356, %v4503
        %v4533 = vmul.f32 %v4357, %v4503
        %v4534 = vmul.f32 %v4358, %v4503
        %v4535 = vmul.f32 %v4359, %v4503
        %v4536 = vld [vmem:[%s8] sm:$0x1]
        %v4538 = vlaneseq
        %v4539 = vshrl.u32 %v4538, 7
        %v4540 = vsub.s32 0, %v4539
        %v4541 = vrot.slane %v4536, %v4540
        %v4543 = vmul.f32 %v4504, %v4541
        %v4544 = vmul.f32 %v4505, %v4541
        %v4545 = vmul.f32 %v4506, %v4541
        %v4546 = vmul.f32 %v4507, %v4541
        %v4547 = vmul.f32 %v4508, %v4541
        %v4548 = vmul.f32 %v4509, %v4541
        %v4549 = vmul.f32 %v4510, %v4541
        %v4550 = vmul.f32 %v4511, %v4541
        %v4551 = vmul.f32 %v4512, %v4541
        %v4552 = vmul.f32 %v4513, %v4541
        %v4553 = vmul.f32 %v4514, %v4541
        %v4554 = vmul.f32 %v4515, %v4541
        %v4555 = vmul.f32 %v4516, %v4541
        %v4556 = vmul.f32 %v4517, %v4541
        %v4557 = vmul.f32 %v4518, %v4541
        %v4558 = vmul.f32 %v4519, %v4541
        %v4559 = vmul.f32 %v4520, %v4541
        %v4560 = vmul.f32 %v4521, %v4541
        %v4561 = vmul.f32 %v4522, %v4541
        %v4562 = vmul.f32 %v4523, %v4541
        %v4563 = vmul.f32 %v4524, %v4541
        %v4564 = vmul.f32 %v4525, %v4541
        %v4565 = vmul.f32 %v4526, %v4541
        %v4566 = vmul.f32 %v4527, %v4541
        %v4567 = vmul.f32 %v4528, %v4541
        %v4568 = vmul.f32 %v4529, %v4541
        %v4569 = vmul.f32 %v4530, %v4541
        %v4570 = vmul.f32 %v4531, %v4541
        %v4571 = vmul.f32 %v4532, %v4541
        %v4572 = vmul.f32 %v4533, %v4541
        %v4573 = vmul.f32 %v4534, %v4541
        %v4574 = vmul.f32 %v4535, %v4541
        %v4575 = vld [vmem:[%s9] sm:$0x1]
        %v4577 = vlaneseq
        %v4578 = vshrl.u32 %v4577, 7
        %v4579 = vsub.s32 0, %v4578
        %v4580 = vrot.slane %v4575, %v4579
        %v4582 = vadd.f32 %v4543, %v4580
        %v4583 = vadd.f32 %v4544, %v4580
        %v4584 = vadd.f32 %v4545, %v4580
        %v4585 = vadd.f32 %v4546, %v4580
        %v4586 = vadd.f32 %v4547, %v4580
        %v4587 = vadd.f32 %v4548, %v4580
        %v4588 = vadd.f32 %v4549, %v4580
        %v4589 = vadd.f32 %v4550, %v4580
        %v4590 = vadd.f32 %v4551, %v4580
        %v4591 = vadd.f32 %v4552, %v4580
        %v4592 = vadd.f32 %v4553, %v4580
        %v4593 = vadd.f32 %v4554, %v4580
        %v4594 = vadd.f32 %v4555, %v4580
        %v4595 = vadd.f32 %v4556, %v4580
        %v4596 = vadd.f32 %v4557, %v4580
        %v4597 = vadd.f32 %v4558, %v4580
        %v4598 = vadd.f32 %v4559, %v4580
        %v4599 = vadd.f32 %v4560, %v4580
        %v4600 = vadd.f32 %v4561, %v4580
        %v4601 = vadd.f32 %v4562, %v4580
        %v4602 = vadd.f32 %v4563, %v4580
        %v4603 = vadd.f32 %v4564, %v4580
        %v4604 = vadd.f32 %v4565, %v4580
        %v4605 = vadd.f32 %v4566, %v4580
        %v4606 = vadd.f32 %v4567, %v4580
        %v4607 = vadd.f32 %v4568, %v4580
        %v4608 = vadd.f32 %v4569, %v4580
        %v4609 = vadd.f32 %v4570, %v4580
        %v4610 = vadd.f32 %v4571, %v4580
        %v4611 = vadd.f32 %v4572, %v4580
        %v4612 = vadd.f32 %v4573, %v4580
        %v4613 = vadd.f32 %v4574, %v4580
        %v4614 = vadd.f32 %v4582, %v400
        %v4615 = vadd.f32 %v4583, %v401
        %v4616 = vadd.f32 %v4584, %v402
        %v4617 = vadd.f32 %v4585, %v403
        %v4618 = vadd.f32 %v4586, %v404
        %v4619 = vadd.f32 %v4587, %v405
        %v4620 = vadd.f32 %v4588, %v406
        %v4621 = vadd.f32 %v4589, %v407
        %v4622 = vadd.f32 %v4590, %v408
        %v4623 = vadd.f32 %v4591, %v409
        %v4624 = vadd.f32 %v4592, %v410
        %v4625 = vadd.f32 %v4593, %v411
        %v4626 = vadd.f32 %v4594, %v412
        %v4627 = vadd.f32 %v4595, %v413
        %v4628 = vadd.f32 %v4596, %v414
        %v4629 = vadd.f32 %v4597, %v415
        %v4630 = vadd.f32 %v4598, %v416
        %v4631 = vadd.f32 %v4599, %v417
        %v4632 = vadd.f32 %v4600, %v418
        %v4633 = vadd.f32 %v4601, %v419
        %v4634 = vadd.f32 %v4602, %v420
        %v4635 = vadd.f32 %v4603, %v421
        %v4636 = vadd.f32 %v4604, %v422
        %v4637 = vadd.f32 %v4605, %v423
        %v4638 = vadd.f32 %v4606, %v424
        %v4639 = vadd.f32 %v4607, %v425
        %v4640 = vadd.f32 %v4608, %v426
        %v4641 = vadd.f32 %v4609, %v427
        %v4642 = vadd.f32 %v4610, %v428
        %v4643 = vadd.f32 %v4611, %v429
        %v4644 = vadd.f32 %v4612, %v430
        %v4645 = vadd.f32 %v4613, %v431
        %v4646 = vmax.f32 %v4614, 0.0
        %v4647 = vmax.f32 %v4615, 0.0
        %v4648 = vmax.f32 %v4616, 0.0
        %v4649 = vmax.f32 %v4617, 0.0
        %v4650 = vmax.f32 %v4618, 0.0
        %v4651 = vmax.f32 %v4619, 0.0
        %v4652 = vmax.f32 %v4620, 0.0
        %v4653 = vmax.f32 %v4621, 0.0
        %v4654 = vmax.f32 %v4622, 0.0
        %v4655 = vmax.f32 %v4623, 0.0
        %v4656 = vmax.f32 %v4624, 0.0
        %v4657 = vmax.f32 %v4625, 0.0
        %v4658 = vmax.f32 %v4626, 0.0
        %v4659 = vmax.f32 %v4627, 0.0
        %v4660 = vmax.f32 %v4628, 0.0
        %v4661 = vmax.f32 %v4629, 0.0
        %v4662 = vmax.f32 %v4630, 0.0
        %v4663 = vmax.f32 %v4631, 0.0
        %v4664 = vmax.f32 %v4632, 0.0
        %v4665 = vmax.f32 %v4633, 0.0
        %v4666 = vmax.f32 %v4634, 0.0
        %v4667 = vmax.f32 %v4635, 0.0
        %v4668 = vmax.f32 %v4636, 0.0
        %v4669 = vmax.f32 %v4637, 0.0
        %v4670 = vmax.f32 %v4638, 0.0
        %v4671 = vmax.f32 %v4639, 0.0
        %v4672 = vmax.f32 %v4640, 0.0
        %v4673 = vmax.f32 %v4641, 0.0
        %v4674 = vmax.f32 %v4642, 0.0
        %v4675 = vmax.f32 %v4643, 0.0
        %v4676 = vmax.f32 %v4644, 0.0
        %v4677 = vmax.f32 %v4645, 0.0
        %4678 = vst [vmem:[%s394] sm:$0xff] %v4646
        %4679 = vst [vmem:[%s394 + $0x8] sm:$0xff] %v4647
        %4680 = vst [vmem:[%s394 + $0x10] sm:$0xff] %v4648
        %4681 = vst [vmem:[%s394 + $0x18] sm:$0xff] %v4649
        %4682 = vst [vmem:[%s394 + $0x20] sm:$0xff] %v4650
        %4683 = vst [vmem:[%s394 + $0x28] sm:$0xff] %v4651
        %4684 = vst [vmem:[%s394 + $0x30] sm:$0xff] %v4652
        %4685 = vst [vmem:[%s394 + $0x38] sm:$0xff] %v4653
        %4686 = vst [vmem:[%s394 + $0x40] sm:$0xff] %v4654
        %4687 = vst [vmem:[%s394 + $0x48] sm:$0xff] %v4655
        %4688 = vst [vmem:[%s394 + $0x50] sm:$0xff] %v4656
        %4689 = vst [vmem:[%s394 + $0x58] sm:$0xff] %v4657
        %4690 = vst [vmem:[%s394 + $0x60] sm:$0xff] %v4658
        %4691 = vst [vmem:[%s394 + $0x68] sm:$0xff] %v4659
        %4692 = vst [vmem:[%s394 + $0x70] sm:$0xff] %v4660
        %4693 = vst [vmem:[%s394 + $0x78] sm:$0xff] %v4661
        %4694 = vst [vmem:[%s394 + $0x80] sm:$0xff] %v4662
        %4695 = vst [vmem:[%s394 + $0x88] sm:$0xff] %v4663
        %4696 = vst [vmem:[%s394 + $0x90] sm:$0xff] %v4664
        %4697 = vst [vmem:[%s394 + $0x98] sm:$0xff] %v4665
        %4698 = vst [vmem:[%s394 + $0xa0] sm:$0xff] %v4666
        %4699 = vst [vmem:[%s394 + $0xa8] sm:$0xff] %v4667
        %4700 = vst [vmem:[%s394 + $0xb0] sm:$0xff] %v4668
        %4701 = vst [vmem:[%s394 + $0xb8] sm:$0xff] %v4669
        %4702 = vst [vmem:[%s394 + $0xc0] sm:$0xff] %v4670
        %4703 = vst [vmem:[%s394 + $0xc8] sm:$0xff] %v4671
        %4704 = vst [vmem:[%s394 + $0xd0] sm:$0xff] %v4672
        %4705 = vst [vmem:[%s394 + $0xd8] sm:$0xff] %v4673
        %4706 = vst [vmem:[%s394 + $0xe0] sm:$0xff] %v4674
        %4707 = vst [vmem:[%s394 + $0xe8] sm:$0xff] %v4675
        %4708 = vst [vmem:[%s394 + $0xf0] sm:$0xff] %v4676
        %4709 = vst [vmem:[%s394 + $0xf8] sm:$0xff] %v4677
        %s4710 = sand.u32 %s270, 1
        %s4711 = scalar_lea.sflag [#allocation4], %s4710
        %s4712 = sand.u32 %s270, 1
        %s4713 = smul.addr %s4712, 256
        %s4714 = scalar_lea.vmem [#allocation5], %s4713
        // Predicated region
        $region69: #{tpu_custom_call.1} parent=63 // pred_check
          %p4715 = pneg %p280
        $region70: #{tpu_custom_call.1} parent=63 // pred_check_branch
          %4717 = sbr.rel (%p4715) target = $region72
        $region71: #{tpu_custom_call.1} parent=63 // pred_region
          %s4719 = ssub.s32 4096, 4096
          %4720 = vsyncadd %s4711, %s4719
          %s4721 = smul.addr %s26, 32
          %s4722 = smul.addr %s4721, 128
          %s4723 = scalar_lea.hbm %s11, %s4722
          %s4724 = sshll.u32 %s4714, 4
          %s4725 = int_to_ptr.vmem [resolvable:$true] %s4724
          %4730 = dma.vmem_to_hbm [thread:$0]  %s4725, 4096, %s4723, %s4711, 128, 128, 8
        $region72: #{tpu_custom_call.1} parent=63 // pred_fallthru
          _
      $region64: #{tpu_custom_call.1} parent=5 // pred_fallthru
        _
      %p4731 = scmp.le.s32.totalorder 2, %s21
      // Predicated region
      $region73: #{tpu_custom_call.1} parent=5 // pred_check
        %p4732 = pneg %p4731
      $region74: #{tpu_custom_call.1} parent=5 // pred_check_branch
        %4734 = sbr.rel (%p4732) target = $region76
      $region75: #{tpu_custom_call.1} parent=5 // pred_region
        %s4735 = ssub.s32 %s21, 2
        // Predicated region
        $region77: #{tpu_custom_call.1} parent=75 // pred_check
          %p4736 = pneg %p286
        $region78: #{tpu_custom_call.1} parent=75 // pred_check_branch
          %4738 = sbr.rel (%p4736) target = $region80
        $region79: #{tpu_custom_call.1} parent=75 // pred_region
          %s4739 = sand.u32 %s271, 1
          %s4740 = scalar_lea.sflag [#allocation4], %s4739
          %s4741 = sand.u32 %s271, 1
          %s4742 = smul.addr %s4741, 256
          %s4743 = scalar_lea.vmem [#allocation5], %s4742
          %4744 = dma.done %s4740, 4096
        $region80: #{tpu_custom_call.1} parent=75 // pred_fallthru
          _
      $region76: #{tpu_custom_call.1} parent=5 // pred_fallthru
        _
    $region6: #{tpu_custom_call.1} parent=1 // loop_footer
      %s25 = sadd.s32 1, %s21
    $region7: #{tpu_custom_call.1} parent=1 // loop_footer_branch
      %20 = sbr.rel target = $region3
    $region8: #{tpu_custom_call.1} parent=1 // loop_exit
      _
    %4745 = vsyncpa [#allocation3], 1
    %s4746 = scalar_lea.sflag [#allocation3], 1
    %4747 = vsyncpa %s4746, 1
    %4748 = vsyncpa [#allocation4], 1
    %s4749 = scalar_lea.sflag [#allocation4], 1
    %4750 = vsyncpa %s4749, 1

</llo_original>
